<compile_context>
chip_gen: v7x
topology: tpu7x:2x2x1
jax: 0.10.0
libtpu: 0.0.40
codegen_flags: <defaults>
</compile_context>

<pallas_src>
import functools

import jax
import jax.numpy as jnp
from jax.experimental import pallas as pl
from jax.experimental.pallas import tpu as pltpu


def _round_up(v, m):
    return ((v + m - 1) // m) * m


def _batch_tile(np_batch):
    """Samples per grid step: a multiple of 8 dividing the padded batch.
    Single step for tiny batches; >= 2 parallel steps once the batch is big
    enough (v7x megacore)."""
    if np_batch <= 8:
        return np_batch
    tb = min(64, max(8, ((np_batch // 2) // 8) * 8))
    while np_batch % tb:
        tb -= 8
    return tb


# ------------------------------ fused kernel ---------------------------------

def _fused_cnn_kernel(p1_ref, w1_ref, b1_ref, w2_ref, b2_ref, w3_ref, b3_ref,
                      w4_ref, b4_ref, w5_ref, b5_ref, w6_ref, b6_ref,
                      w7_ref, b7_ref, o_ref, *, tb, c1p):
    f32, bf16 = jnp.float32, jnp.bfloat16

    # conv1 + ReLU over the 16 live spatial positions of every sample in the
    # tile.  Rows of p1 are ordered [r=(kh,kw), q=(oy2,ox2), sample].
    y1 = jnp.dot(p1_ref[...], w1_ref[...], preferred_element_type=f32)
    y1 = jnp.maximum(y1 + b1_ref[...], 0.0)                 # (16*tb, c1p)

    # conv2 + ReLU at the 4 live taps, accumulated over the 4 kernel offsets r.
    c2 = w2_ref.shape[1]                                     # 128
    acc2 = jnp.zeros((4 * tb, c2), f32)
    for r in range(4):                                       # static unroll
        yr = y1[r * 4 * tb:(r + 1) * 4 * tb, :].astype(bf16)
        acc2 = acc2 + jnp.dot(yr, w2_ref[r * c1p:(r + 1) * c1p, :],
                              preferred_element_type=f32)
    y2 = jnp.maximum(acc2 + b2_ref[...], 0.0)                # (4*tb, c2), rows [q, s]

    # conv3 (1x1 output) + ReLU, accumulated over the 4 conv2 taps q.
    c3 = w3_ref.shape[1]                                     # 64
    acc3 = jnp.zeros((tb, c3), f32)
    for q in range(4):
        zq = y2[q * tb:(q + 1) * tb, :].astype(bf16)
        acc3 = acc3 + jnp.dot(zq, w3_ref[q * c2:(q + 1) * c2, :],
                              preferred_element_type=f32)
    h = jnp.maximum(acc3 + b3_ref[...], 0.0)                 # (tb, 64)

    # linear1 (+ReLU), linear2..linear4 (no activation, per forward()).
    h = jnp.maximum(jnp.dot(h.astype(bf16), w4_ref[...],
                            preferred_element_type=f32) + b4_ref[...], 0.0)
    h = jnp.dot(h.astype(bf16), w5_ref[...], preferred_element_type=f32) + b5_ref[...]
    h = jnp.dot(h.astype(bf16), w6_ref[...], preferred_element_type=f32) + b6_ref[...]
    h = jnp.dot(h.astype(bf16), w7_ref[...], preferred_element_type=f32) + b7_ref[...]
    o_ref[...] = h.astype(o_ref.dtype)


def _rep_spec(shape):
    """Full-array block, resident across all grid steps (constant index map)."""
    nd = len(shape)
    return pl.BlockSpec(tuple(shape), lambda i: (0,) * nd)


def _fused_call(p1, mats, tb, c1p, aout_p):
    n_rows, k1p = p1.shape
    grid = n_rows // (16 * tb)
    np_batch = grid * tb
    in_specs = [pl.BlockSpec((16 * tb, k1p), lambda i: (i, 0))]
    in_specs += [_rep_spec(m.shape) for m in mats]
    return pl.pallas_call(
        functools.partial(_fused_cnn_kernel, tb=tb, c1p=c1p),
        grid=(grid,),
        in_specs=in_specs,
        out_specs=pl.BlockSpec((tb, aout_p), lambda i: (i, 0)),
        out_shape=jax.ShapeDtypeStruct((np_batch, aout_p), jnp.float32),
        compiler_params=pltpu.CompilerParams(
            dimension_semantics=("parallel",)),
    )(p1, *mats)


# --------------------------------- parameters --------------------------------

def init_params(key, observation_space, action_space):
    def conv_init(k, cout, cin, ksz):
        fan_in = cin * ksz * ksz
        bound = 1.0 / (fan_in ** 0.5)
        kw_, kb_ = jax.random.split(k)
        wgt = jax.random.uniform(kw_, (cout, cin, ksz, ksz), jnp.float32, -bound, bound)
        bia = jax.random.uniform(kb_, (cout,), jnp.float32, -bound, bound)
        return wgt, bia

    def lin_init(k, cin, cout):
        bound = 1.0 / (cin ** 0.5)
        kw_, kb_ = jax.random.split(k)
        wgt = jax.random.uniform(kw_, (cin, cout), jnp.float32, -bound, bound)
        bia = jax.random.uniform(kb_, (cout,), jnp.float32, -bound, bound)
        return wgt, bia

    keys = jax.random.split(key, 7)
    return {
        "conv1": conv_init(keys[0], 210, observation_space, 8),   # k=8, s=8
        "conv2": conv_init(keys[1], 128, 210, 2),                 # k=2, s=8
        "conv3": conv_init(keys[2], 64, 128, 2),                  # k=2, s=4
        # conv4 / conv5 exist in the PyTorch module but are unused in forward().
        "linear1": lin_init(keys[3], 64, 1024),                   # 64*a*b, a=b=1
        "linear2": lin_init(keys[4], 1024, 512),
        "linear3": lin_init(keys[5], 512, 64),
        "linear4": lin_init(keys[6], 64, action_space),
    }


# ---------------------------------- forward ----------------------------------

def cnn_forward(params, x):
    # x: (N, C, 210, 160) NCHW, the spatial size hard-wired into the module.
    n, c, h, w = x.shape
    assert (h, w) == (210, 160), "module geometry is hard-wired to 210x160"

    bf16 = jnp.bfloat16
    w1, b1 = params["conv1"]
    cout1 = w1.shape[0]                         # 210
    k1 = c * 64                                 # 8x8 kernel
    k1p = _round_up(k1, 128)                    # 256 for C=4
    c1p = _round_up(cout1, 128)                 # 256: lane-padded conv1 channels

    # -- Dead-code elimination through conv1/conv2: conv3's output is 1x1, so
    #    the only live conv2 taps are (0,0),(0,1),(1,0),(1,1); they read conv1
    #    positions rows/cols {0,1,8,9}, which read input pixel strips
    #    rows/cols [0:16) U [64:80).  Static slices, no gather.
    xr = jnp.concatenate([x[:, :, 0:16, :], x[:, :, 64:80, :]], axis=2)
    xl = jnp.concatenate([xr[:, :, :, 0:16], xr[:, :, :, 64:80]], axis=3)  # (n,c,32,32)

    # conv1 im2col (stride == kernel == 8 -> pure reshape/transpose).
    pat = xl.reshape(n, c, 4, 8, 4, 8).transpose(0, 2, 4, 1, 3, 5)
    pat = pat.reshape(n, 4, 4, k1)              # (n, ry, rx, ci*kh*kw)

    # Batch padding / tiling.
    npad = _round_up(n, 8)
    tb = _batch_tile(npad)
    if npad != n:
        pat = jnp.pad(pat, ((0, npad - n), (0, 0), (0, 0), (0, 0)))
    nchunks = npad // tb

    # Re-order rows to [chunk][r=(kh,kw)][q=(oy2,ox2)][sample] so every slab
    # the kernel needs is a contiguous, sublane-aligned static row slice.
    # Reduced conv1 index ry = 2*oy2 + kh, rx = 2*ox2 + kw.
    pat = pat.reshape(nchunks, tb, 2, 2, 2, 2, k1)   # (chunk,s,oy2,kh,ox2,kw,k1)
    pat = pat.transpose(0, 3, 5, 2, 4, 1, 6)         # (chunk,kh,kw,oy2,ox2,s,k1)
    pat = pat.reshape(nchunks * 16 * tb, k1)
    if k1p != k1:
        pat = jnp.pad(pat, ((0, 0), (0, k1p - k1)))
    p1 = pat.astype(bf16)

    # -- Weight packing: bf16 GEMM operands, f32 biases.  Zero rows/cols for
    #    padded channels so ReLU(0)=0 carries through exactly.
    w1m = jnp.zeros((k1p, c1p), jnp.float32).at[:k1, :cout1].set(
        w1.reshape(cout1, k1).T).astype(bf16)
    b1m = jnp.zeros((1, c1p), jnp.float32).at[0, :cout1].set(b1)

    w2, b2 = params["conv2"]                    # (128, 210, 2, 2)
    c2 = w2.shape[0]
    w2m = jnp.zeros((2, 2, c1p, c2), jnp.float32).at[:, :, :cout1, :].set(
        w2.transpose(2, 3, 1, 0)).reshape(4 * c1p, c2).astype(bf16)
    b2m = b2.reshape(1, c2)

    w3, b3 = params["conv3"]                    # (64, 128, 2, 2)
    c3 = w3.shape[0]
    w3m = w3.transpose(2, 3, 1, 0).reshape(4 * c2, c3).astype(bf16)
    b3m = b3.reshape(1, c3)

    w4, b4 = params["linear1"]
    w5, b5 = params["linear2"]
    w6, b6 = params["linear3"]
    w7, b7 = params["linear4"]
    aout = w7.shape[1]
    aout_p = _round_up(aout, 128)               # lane-dense final store
    w7m = jnp.zeros((w7.shape[0], aout_p), jnp.float32).at[:, :aout].set(w7).astype(bf16)
    b7m = jnp.zeros((1, aout_p), jnp.float32).at[0, :aout].set(b7)

    mats = [w1m, b1m, w2m, b2m, w3m, b3m,
            w4.astype(bf16), b4.reshape(1, -1),
            w5.astype(bf16), b5.reshape(1, -1),
            w6.astype(bf16), b6.reshape(1, -1),
            w7m, b7m]

    out = _fused_call(p1, mats, tb, c1p, aout_p)
    return out[:n, :aout]


def cnn_forward_ref(params, x):
    """Pure-JAX reference (f32, full convs) for correctness checking."""
    hp = jax.lax.Precision.HIGHEST

    def conv(x, w, b, s):
        y = jax.lax.conv_general_dilated(
            x, w, window_strides=(s, s), padding="VALID",
            dimension_numbers=("NCHW", "OIHW", "NCHW"), precision=hp)
        return y + b[None, :, None, None]

    x = jax.nn.relu(conv(x, *params["conv1"], 8))
    x = jax.nn.relu(conv(x, *params["conv2"], 8))
    x = jax.nn.relu(conv(x, *params["conv3"], 4))
    x = x.reshape(-1, 64)
    w, b = params["linear1"]; x = jax.nn.relu(jnp.dot(x, w, precision=hp) + b)
    w, b = params["linear2"]; x = jnp.dot(x, w, precision=hp) + b
    w, b = params["linear3"]; x = jnp.dot(x, w, precision=hp) + b
    w, b = params["linear4"]; x = jnp.dot(x, w, precision=hp) + b
    return x


if __name__ == "__main__":
    key = jax.random.PRNGKey(0)
    pkey, xkey = jax.random.split(key)

    observation_space, action_space = 4, 10   # e.g. 4 stacked frames, 10 actions
    batch = 2
    params = init_params(pkey, observation_space, action_space)
    x = jax.random.uniform(
        xkey, (batch, observation_space, 210, 160), jnp.float32, -1.0, 1.0)

    fwd = jax.jit(cnn_forward)
    out = jax.block_until_ready(fwd(params, x))
    assert out.shape == (batch, action_space), out.shape

    ref = cnn_forward_ref(params, x)
    max_err = float(jnp.max(jnp.abs(out - ref)))
    # bf16 MXU operands (f32 accumulation) -> slightly looser tolerance than f32.
    assert jnp.allclose(out, ref, rtol=3e-2, atol=3e-2), max_err

    print("KERNEL_OK")
</pallas_src>

<mosaic_0001>
module attributes {stable_mosaic.version = 11 : i64} {
  func.func @_fused_cnn_kernel(%arg0: i32, %arg1: memref<128x256xbf16, #tpu.memory_space<vmem>>, %arg2: memref<256x256xbf16, #tpu.memory_space<vmem>>, %arg3: memref<1x256xf32, #tpu.memory_space<vmem>>, %arg4: memref<1024x128xbf16, #tpu.memory_space<vmem>>, %arg5: memref<1x128xf32, #tpu.memory_space<vmem>>, %arg6: memref<512x64xbf16, #tpu.memory_space<vmem>>, %arg7: memref<1x64xf32, #tpu.memory_space<vmem>>, %arg8: memref<64x1024xbf16, #tpu.memory_space<vmem>>, %arg9: memref<1x1024xf32, #tpu.memory_space<vmem>>, %arg10: memref<1024x512xbf16, #tpu.memory_space<vmem>>, %arg11: memref<1x512xf32, #tpu.memory_space<vmem>>, %arg12: memref<512x64xbf16, #tpu.memory_space<vmem>>, %arg13: memref<1x64xf32, #tpu.memory_space<vmem>>, %arg14: memref<64x128xbf16, #tpu.memory_space<vmem>>, %arg15: memref<1x128xf32, #tpu.memory_space<vmem>>, %arg16: memref<8x128xf32, #tpu.memory_space<vmem>>) attributes {dimension_semantics = [#tpu.dimension_semantics<parallel>], iteration_bounds = array<i64: 1>, scalar_prefetch = 0 : i64, scratch_operands = 0 : i64, tpu.core_type = #tpu.core_type<tc>, window_params = [{transform_indices = @transform_0, window_bounds = array<i64: 128, 256>}, {pipeline_mode = #tpu.pipeline_mode<synchronous>, transform_indices = @transform_1, window_bounds = array<i64: 256, 256>}, {pipeline_mode = #tpu.pipeline_mode<synchronous>, transform_indices = @transform_2, window_bounds = array<i64: 1, 256>}, {pipeline_mode = #tpu.pipeline_mode<synchronous>, transform_indices = @transform_3, window_bounds = array<i64: 1024, 128>}, {pipeline_mode = #tpu.pipeline_mode<synchronous>, transform_indices = @transform_4, window_bounds = array<i64: 1, 128>}, {pipeline_mode = #tpu.pipeline_mode<synchronous>, transform_indices = @transform_5, window_bounds = array<i64: 512, 64>}, {pipeline_mode = #tpu.pipeline_mode<synchronous>, transform_indices = @transform_6, window_bounds = array<i64: 1, 64>}, {pipeline_mode = #tpu.pipeline_mode<synchronous>, transform_indices = @transform_7, window_bounds = array<i64: 64, 1024>}, {pipeline_mode = #tpu.pipeline_mode<synchronous>, transform_indices = @transform_8, window_bounds = array<i64: 1, 1024>}, {pipeline_mode = #tpu.pipeline_mode<synchronous>, transform_indices = @transform_9, window_bounds = array<i64: 1024, 512>}, {pipeline_mode = #tpu.pipeline_mode<synchronous>, transform_indices = @transform_10, window_bounds = array<i64: 1, 512>}, {pipeline_mode = #tpu.pipeline_mode<synchronous>, transform_indices = @transform_11, window_bounds = array<i64: 512, 64>}, {pipeline_mode = #tpu.pipeline_mode<synchronous>, transform_indices = @transform_12, window_bounds = array<i64: 1, 64>}, {pipeline_mode = #tpu.pipeline_mode<synchronous>, transform_indices = @transform_13, window_bounds = array<i64: 64, 128>}, {pipeline_mode = #tpu.pipeline_mode<synchronous>, transform_indices = @transform_14, window_bounds = array<i64: 1, 128>}, {transform_indices = @transform_15, window_bounds = array<i64: 8, 128>}]} {
    %c0 = arith.constant 0 : index
    %c0_0 = arith.constant 0 : index
    %0 = vector.load %arg1[%c0, %c0_0] : memref<128x256xbf16, #tpu.memory_space<vmem>>, vector<128x256xbf16>
    %c0_1 = arith.constant 0 : index
    %c0_2 = arith.constant 0 : index
    %1 = vector.load %arg2[%c0_1, %c0_2] : memref<256x256xbf16, #tpu.memory_space<vmem>>, vector<256x256xbf16>
    %cst = arith.constant dense<0.000000e+00> : vector<128x256xf32>
    %2 = tpu.matmul %0, %1, %cst {dimension_numbers = #tpu.dot_dimension_numbers<[1], [0], [0], [1], [0, 0, 1, 1], [], []>} : vector<128x256xbf16>, vector<256x256xbf16>, vector<128x256xf32> -> vector<128x256xf32>
    %c0_3 = arith.constant 0 : index
    %c0_4 = arith.constant 0 : index
    %3 = vector.load %arg3[%c0_3, %c0_4] : memref<1x256xf32, #tpu.memory_space<vmem>>, vector<1x256xf32>
    %4 = vector.broadcast %3 : vector<1x256xf32> to vector<128x256xf32>
    %5 = arith.addf %2, %4 : vector<128x256xf32>
    %cst_5 = arith.constant 0.000000e+00 : f32
    %6 = vector.broadcast %cst_5 : f32 to vector<128x256xf32>
    %7 = arith.maximumf %5, %6 : vector<128x256xf32>
    %cst_6 = arith.constant 0.000000e+00 : f32
    %8 = vector.broadcast %cst_6 : f32 to vector<32x128xf32>
    %9 = vector.extract_strided_slice %7 {offsets = [0, 0], sizes = [32, 256], strides = [1, 1]} : vector<128x256xf32> to vector<32x256xf32>
    %10 = arith.truncf %9 : vector<32x256xf32> to vector<32x256xbf16>
    %c0_7 = arith.constant 0 : index
    %c0_8 = arith.constant 0 : index
    %11 = vector.load %arg4[%c0_7, %c0_8] : memref<1024x128xbf16, #tpu.memory_space<vmem>>, vector<256x128xbf16>
    %cst_9 = arith.constant dense<0.000000e+00> : vector<32x128xf32>
    %12 = tpu.matmul %10, %11, %cst_9 {dimension_numbers = #tpu.dot_dimension_numbers<[1], [0], [0], [1], [0, 0, 1, 1], [], []>} : vector<32x256xbf16>, vector<256x128xbf16>, vector<32x128xf32> -> vector<32x128xf32>
    %13 = arith.addf %8, %12 : vector<32x128xf32>
    %14 = vector.extract_strided_slice %7 {offsets = [32, 0], sizes = [32, 256], strides = [1, 1]} : vector<128x256xf32> to vector<32x256xf32>
    %15 = arith.truncf %14 : vector<32x256xf32> to vector<32x256xbf16>
    %c256 = arith.constant 256 : index
    %c0_10 = arith.constant 0 : index
    %16 = vector.load %arg4[%c256, %c0_10] : memref<1024x128xbf16, #tpu.memory_space<vmem>>, vector<256x128xbf16>
    %cst_11 = arith.constant dense<0.000000e+00> : vector<32x128xf32>
    %17 = tpu.matmul %15, %16, %cst_11 {dimension_numbers = #tpu.dot_dimension_numbers<[1], [0], [0], [1], [0, 0, 1, 1], [], []>} : vector<32x256xbf16>, vector<256x128xbf16>, vector<32x128xf32> -> vector<32x128xf32>
    %18 = arith.addf %13, %17 : vector<32x128xf32>
    %19 = vector.extract_strided_slice %7 {offsets = [64, 0], sizes = [32, 256], strides = [1, 1]} : vector<128x256xf32> to vector<32x256xf32>
    %20 = arith.truncf %19 : vector<32x256xf32> to vector<32x256xbf16>
    %c512 = arith.constant 512 : index
    %c0_12 = arith.constant 0 : index
    %21 = vector.load %arg4[%c512, %c0_12] : memref<1024x128xbf16, #tpu.memory_space<vmem>>, vector<256x128xbf16>
    %cst_13 = arith.constant dense<0.000000e+00> : vector<32x128xf32>
    %22 = tpu.matmul %20, %21, %cst_13 {dimension_numbers = #tpu.dot_dimension_numbers<[1], [0], [0], [1], [0, 0, 1, 1], [], []>} : vector<32x256xbf16>, vector<256x128xbf16>, vector<32x128xf32> -> vector<32x128xf32>
    %23 = arith.addf %18, %22 : vector<32x128xf32>
    %24 = vector.extract_strided_slice %7 {offsets = [96, 0], sizes = [32, 256], strides = [1, 1]} : vector<128x256xf32> to vector<32x256xf32>
    %25 = arith.truncf %24 : vector<32x256xf32> to vector<32x256xbf16>
    %c768 = arith.constant 768 : index
    %c0_14 = arith.constant 0 : index
    %26 = vector.load %arg4[%c768, %c0_14] : memref<1024x128xbf16, #tpu.memory_space<vmem>>, vector<256x128xbf16>
    %cst_15 = arith.constant dense<0.000000e+00> : vector<32x128xf32>
    %27 = tpu.matmul %25, %26, %cst_15 {dimension_numbers = #tpu.dot_dimension_numbers<[1], [0], [0], [1], [0, 0, 1, 1], [], []>} : vector<32x256xbf16>, vector<256x128xbf16>, vector<32x128xf32> -> vector<32x128xf32>
    %28 = arith.addf %23, %27 : vector<32x128xf32>
    %c0_16 = arith.constant 0 : index
    %c0_17 = arith.constant 0 : index
    %29 = vector.load %arg5[%c0_16, %c0_17] : memref<1x128xf32, #tpu.memory_space<vmem>>, vector<1x128xf32>
    %30 = vector.broadcast %29 : vector<1x128xf32> to vector<32x128xf32>
    %31 = arith.addf %28, %30 : vector<32x128xf32>
    %cst_18 = arith.constant 0.000000e+00 : f32
    %32 = vector.broadcast %cst_18 : f32 to vector<32x128xf32>
    %33 = arith.maximumf %31, %32 : vector<32x128xf32>
    %cst_19 = arith.constant 0.000000e+00 : f32
    %34 = vector.broadcast %cst_19 : f32 to vector<8x64xf32>
    %35 = vector.extract_strided_slice %33 {offsets = [0, 0], sizes = [8, 128], strides = [1, 1]} : vector<32x128xf32> to vector<8x128xf32>
    %36 = arith.truncf %35 : vector<8x128xf32> to vector<8x128xbf16>
    %c0_20 = arith.constant 0 : index
    %c0_21 = arith.constant 0 : index
    %37 = vector.load %arg6[%c0_20, %c0_21] : memref<512x64xbf16, #tpu.memory_space<vmem>>, vector<128x64xbf16>
    %cst_22 = arith.constant dense<0.000000e+00> : vector<8x64xf32>
    %38 = tpu.matmul %36, %37, %cst_22 {dimension_numbers = #tpu.dot_dimension_numbers<[1], [0], [0], [1], [0, 0, 1, 1], [], []>} : vector<8x128xbf16>, vector<128x64xbf16>, vector<8x64xf32> -> vector<8x64xf32>
    %39 = arith.addf %34, %38 : vector<8x64xf32>
    %40 = vector.extract_strided_slice %33 {offsets = [8, 0], sizes = [8, 128], strides = [1, 1]} : vector<32x128xf32> to vector<8x128xf32>
    %41 = arith.truncf %40 : vector<8x128xf32> to vector<8x128xbf16>
    %c128 = arith.constant 128 : index
    %c0_23 = arith.constant 0 : index
    %42 = vector.load %arg6[%c128, %c0_23] : memref<512x64xbf16, #tpu.memory_space<vmem>>, vector<128x64xbf16>
    %cst_24 = arith.constant dense<0.000000e+00> : vector<8x64xf32>
    %43 = tpu.matmul %41, %42, %cst_24 {dimension_numbers = #tpu.dot_dimension_numbers<[1], [0], [0], [1], [0, 0, 1, 1], [], []>} : vector<8x128xbf16>, vector<128x64xbf16>, vector<8x64xf32> -> vector<8x64xf32>
    %44 = arith.addf %39, %43 : vector<8x64xf32>
    %45 = vector.extract_strided_slice %33 {offsets = [16, 0], sizes = [8, 128], strides = [1, 1]} : vector<32x128xf32> to vector<8x128xf32>
    %46 = arith.truncf %45 : vector<8x128xf32> to vector<8x128xbf16>
    %c256_25 = arith.constant 256 : index
    %c0_26 = arith.constant 0 : index
    %47 = vector.load %arg6[%c256_25, %c0_26] : memref<512x64xbf16, #tpu.memory_space<vmem>>, vector<128x64xbf16>
    %cst_27 = arith.constant dense<0.000000e+00> : vector<8x64xf32>
    %48 = tpu.matmul %46, %47, %cst_27 {dimension_numbers = #tpu.dot_dimension_numbers<[1], [0], [0], [1], [0, 0, 1, 1], [], []>} : vector<8x128xbf16>, vector<128x64xbf16>, vector<8x64xf32> -> vector<8x64xf32>
    %49 = arith.addf %44, %48 : vector<8x64xf32>
    %50 = vector.extract_strided_slice %33 {offsets = [24, 0], sizes = [8, 128], strides = [1, 1]} : vector<32x128xf32> to vector<8x128xf32>
    %51 = arith.truncf %50 : vector<8x128xf32> to vector<8x128xbf16>
    %c384 = arith.constant 384 : index
    %c0_28 = arith.constant 0 : index
    %52 = vector.load %arg6[%c384, %c0_28] : memref<512x64xbf16, #tpu.memory_space<vmem>>, vector<128x64xbf16>
    %cst_29 = arith.constant dense<0.000000e+00> : vector<8x64xf32>
    %53 = tpu.matmul %51, %52, %cst_29 {dimension_numbers = #tpu.dot_dimension_numbers<[1], [0], [0], [1], [0, 0, 1, 1], [], []>} : vector<8x128xbf16>, vector<128x64xbf16>, vector<8x64xf32> -> vector<8x64xf32>
    %54 = arith.addf %49, %53 : vector<8x64xf32>
    %c0_30 = arith.constant 0 : index
    %c0_31 = arith.constant 0 : index
    %55 = vector.load %arg7[%c0_30, %c0_31] : memref<1x64xf32, #tpu.memory_space<vmem>>, vector<1x64xf32>
    %56 = vector.broadcast %55 : vector<1x64xf32> to vector<8x64xf32>
    %57 = arith.addf %54, %56 : vector<8x64xf32>
    %cst_32 = arith.constant 0.000000e+00 : f32
    %58 = vector.broadcast %cst_32 : f32 to vector<8x64xf32>
    %59 = arith.maximumf %57, %58 : vector<8x64xf32>
    %60 = arith.truncf %59 : vector<8x64xf32> to vector<8x64xbf16>
    %c0_33 = arith.constant 0 : index
    %c0_34 = arith.constant 0 : index
    %61 = vector.load %arg8[%c0_33, %c0_34] : memref<64x1024xbf16, #tpu.memory_space<vmem>>, vector<64x1024xbf16>
    %cst_35 = arith.constant dense<0.000000e+00> : vector<8x1024xf32>
    %62 = tpu.matmul %60, %61, %cst_35 {dimension_numbers = #tpu.dot_dimension_numbers<[1], [0], [0], [1], [0, 0, 1, 1], [], []>} : vector<8x64xbf16>, vector<64x1024xbf16>, vector<8x1024xf32> -> vector<8x1024xf32>
    %c0_36 = arith.constant 0 : index
    %c0_37 = arith.constant 0 : index
    %63 = vector.load %arg9[%c0_36, %c0_37] : memref<1x1024xf32, #tpu.memory_space<vmem>>, vector<1x1024xf32>
    %64 = vector.broadcast %63 : vector<1x1024xf32> to vector<8x1024xf32>
    %65 = arith.addf %62, %64 : vector<8x1024xf32>
    %cst_38 = arith.constant 0.000000e+00 : f32
    %66 = vector.broadcast %cst_38 : f32 to vector<8x1024xf32>
    %67 = arith.maximumf %65, %66 : vector<8x1024xf32>
    %68 = arith.truncf %67 : vector<8x1024xf32> to vector<8x1024xbf16>
    %c0_39 = arith.constant 0 : index
    %c0_40 = arith.constant 0 : index
    %69 = vector.load %arg10[%c0_39, %c0_40] : memref<1024x512xbf16, #tpu.memory_space<vmem>>, vector<1024x512xbf16>
    %cst_41 = arith.constant dense<0.000000e+00> : vector<8x512xf32>
    %70 = tpu.matmul %68, %69, %cst_41 {dimension_numbers = #tpu.dot_dimension_numbers<[1], [0], [0], [1], [0, 0, 1, 1], [], []>} : vector<8x1024xbf16>, vector<1024x512xbf16>, vector<8x512xf32> -> vector<8x512xf32>
    %c0_42 = arith.constant 0 : index
    %c0_43 = arith.constant 0 : index
    %71 = vector.load %arg11[%c0_42, %c0_43] : memref<1x512xf32, #tpu.memory_space<vmem>>, vector<1x512xf32>
    %72 = vector.broadcast %71 : vector<1x512xf32> to vector<8x512xf32>
    %73 = arith.addf %70, %72 : vector<8x512xf32>
    %74 = arith.truncf %73 : vector<8x512xf32> to vector<8x512xbf16>
    %c0_44 = arith.constant 0 : index
    %c0_45 = arith.constant 0 : index
    %75 = vector.load %arg12[%c0_44, %c0_45] : memref<512x64xbf16, #tpu.memory_space<vmem>>, vector<512x64xbf16>
    %cst_46 = arith.constant dense<0.000000e+00> : vector<8x64xf32>
    %76 = tpu.matmul %74, %75, %cst_46 {dimension_numbers = #tpu.dot_dimension_numbers<[1], [0], [0], [1], [0, 0, 1, 1], [], []>} : vector<8x512xbf16>, vector<512x64xbf16>, vector<8x64xf32> -> vector<8x64xf32>
    %c0_47 = arith.constant 0 : index
    %c0_48 = arith.constant 0 : index
    %77 = vector.load %arg13[%c0_47, %c0_48] : memref<1x64xf32, #tpu.memory_space<vmem>>, vector<1x64xf32>
    %78 = vector.broadcast %77 : vector<1x64xf32> to vector<8x64xf32>
    %79 = arith.addf %76, %78 : vector<8x64xf32>
    %80 = arith.truncf %79 : vector<8x64xf32> to vector<8x64xbf16>
    %c0_49 = arith.constant 0 : index
    %c0_50 = arith.constant 0 : index
    %81 = vector.load %arg14[%c0_49, %c0_50] : memref<64x128xbf16, #tpu.memory_space<vmem>>, vector<64x128xbf16>
    %cst_51 = arith.constant dense<0.000000e+00> : vector<8x128xf32>
    %82 = tpu.matmul %80, %81, %cst_51 {dimension_numbers = #tpu.dot_dimension_numbers<[1], [0], [0], [1], [0, 0, 1, 1], [], []>} : vector<8x64xbf16>, vector<64x128xbf16>, vector<8x128xf32> -> vector<8x128xf32>
    %c0_52 = arith.constant 0 : index
    %c0_53 = arith.constant 0 : index
    %83 = vector.load %arg15[%c0_52, %c0_53] : memref<1x128xf32, #tpu.memory_space<vmem>>, vector<1x128xf32>
    %84 = vector.broadcast %83 : vector<1x128xf32> to vector<8x128xf32>
    %85 = arith.addf %82, %84 : vector<8x128xf32>
    %c0_54 = arith.constant 0 : index
    %c0_55 = arith.constant 0 : index
    %86 = vector.load %arg16[%c0_54, %c0_55] : memref<8x128xf32, #tpu.memory_space<vmem>>, vector<8x128xf32>
    tpu.vector_store %arg16[%c0_54, %c0_55], %85 {strides = array<i32>} : memref<8x128xf32, #tpu.memory_space<vmem>>, vector<8x128xf32>,
    return
  }
  func.func @transform_0(%arg0: i32) -> (i32, i32) {
    %c0_i32 = arith.constant 0 : i32
    %c0_i32_0 = arith.constant 0 : i32
    return %arg0, %c0_i32 : i32, i32
  }
  func.func @transform_1(%arg0: i32) -> (i32, i32) {
    %c0_i32 = arith.constant 0 : i32
    %c0_i32_0 = arith.constant 0 : i32
    %c0_i32_1 = arith.constant 0 : i32
    return %c0_i32, %c0_i32_0 : i32, i32
  }
  func.func @transform_2(%arg0: i32) -> (i32, i32) {
    %c0_i32 = arith.constant 0 : i32
    %c0_i32_0 = arith.constant 0 : i32
    %c0_i32_1 = arith.constant 0 : i32
    return %c0_i32, %c0_i32_0 : i32, i32
  }
  func.func @transform_3(%arg0: i32) -> (i32, i32) {
    %c0_i32 = arith.constant 0 : i32
    %c0_i32_0 = arith.constant 0 : i32
    %c0_i32_1 = arith.constant 0 : i32
    return %c0_i32, %c0_i32_0 : i32, i32
  }
  func.func @transform_4(%arg0: i32) -> (i32, i32) {
    %c0_i32 = arith.constant 0 : i32
    %c0_i32_0 = arith.constant 0 : i32
    %c0_i32_1 = arith.constant 0 : i32
    return %c0_i32, %c0_i32_0 : i32, i32
  }
  func.func @transform_5(%arg0: i32) -> (i32, i32) {
    %c0_i32 = arith.constant 0 : i32
    %c0_i32_0 = arith.constant 0 : i32
    %c0_i32_1 = arith.constant 0 : i32
    return %c0_i32, %c0_i32_0 : i32, i32
  }
  func.func @transform_6(%arg0: i32) -> (i32, i32) {
    %c0_i32 = arith.constant 0 : i32
    %c0_i32_0 = arith.constant 0 : i32
    %c0_i32_1 = arith.constant 0 : i32
    return %c0_i32, %c0_i32_0 : i32, i32
  }
  func.func @transform_7(%arg0: i32) -> (i32, i32) {
    %c0_i32 = arith.constant 0 : i32
    %c0_i32_0 = arith.constant 0 : i32
    %c0_i32_1 = arith.constant 0 : i32
    return %c0_i32, %c0_i32_0 : i32, i32
  }
  func.func @transform_8(%arg0: i32) -> (i32, i32) {
    %c0_i32 = arith.constant 0 : i32
    %c0_i32_0 = arith.constant 0 : i32
    %c0_i32_1 = arith.constant 0 : i32
    return %c0_i32, %c0_i32_0 : i32, i32
  }
  func.func @transform_9(%arg0: i32) -> (i32, i32) {
    %c0_i32 = arith.constant 0 : i32
    %c0_i32_0 = arith.constant 0 : i32
    %c0_i32_1 = arith.constant 0 : i32
    return %c0_i32, %c0_i32_0 : i32, i32
  }
  func.func @transform_10(%arg0: i32) -> (i32, i32) {
    %c0_i32 = arith.constant 0 : i32
    %c0_i32_0 = arith.constant 0 : i32
    %c0_i32_1 = arith.constant 0 : i32
    return %c0_i32, %c0_i32_0 : i32, i32
  }
  func.func @transform_11(%arg0: i32) -> (i32, i32) {
    %c0_i32 = arith.constant 0 : i32
    %c0_i32_0 = arith.constant 0 : i32
    %c0_i32_1 = arith.constant 0 : i32
    return %c0_i32, %c0_i32_0 : i32, i32
  }
  func.func @transform_12(%arg0: i32) -> (i32, i32) {
    %c0_i32 = arith.constant 0 : i32
    %c0_i32_0 = arith.constant 0 : i32
    %c0_i32_1 = arith.constant 0 : i32
    return %c0_i32, %c0_i32_0 : i32, i32
  }
  func.func @transform_13(%arg0: i32) -> (i32, i32) {
    %c0_i32 = arith.constant 0 : i32
    %c0_i32_0 = arith.constant 0 : i32
    %c0_i32_1 = arith.constant 0 : i32
    return %c0_i32, %c0_i32_0 : i32, i32
  }
  func.func @transform_14(%arg0: i32) -> (i32, i32) {
    %c0_i32 = arith.constant 0 : i32
    %c0_i32_0 = arith.constant 0 : i32
    %c0_i32_1 = arith.constant 0 : i32
    return %c0_i32, %c0_i32_0 : i32, i32
  }
  func.func @transform_15(%arg0: i32) -> (i32, i32) {
    %c0_i32 = arith.constant 0 : i32
    %c0_i32_0 = arith.constant 0 : i32
    return %arg0, %c0_i32 : i32, i32
  }
}

</mosaic_0001>

<llo_original>
// kernel: cnn_forward.1
$region0: #{cnn_forward.1}
  #allocation0 [shape = 'u32[]', space=smem, size = 0x4, offset = 0x4, fixed_abs, tag = 'smem constant byte address 0x4 - core index']
  #allocation1 [shape = 'u32[144,128]{1,0:T(1,128)}', space=vmem, size = 0x12000, scoped, tag = 'internal scratch']
  %s0 = inlined_call_operand.vmem [shape: bf16[128,256], index: 0, kind: input, shape index: {}]
  %s1 = inlined_call_operand.vmem [shape: bf16[256,256], index: 1, kind: input, shape index: {}]
  %s2 = inlined_call_operand.vmem [shape: f32[1,256], index: 2, kind: input, shape index: {}]
  %s3 = inlined_call_operand.vmem [shape: bf16[1024,128], index: 3, kind: input, shape index: {}]
  %s4 = inlined_call_operand.vmem [shape: f32[1,128], index: 4, kind: input, shape index: {}]
  %s5 = inlined_call_operand.vmem [shape: bf16[512,64], index: 5, kind: input, shape index: {}]
  %s6 = inlined_call_operand.vmem [shape: f32[1,64], index: 6, kind: input, shape index: {}]
  %s7 = inlined_call_operand.vmem [shape: bf16[64,1024], index: 7, kind: input, shape index: {}]
  %s8 = inlined_call_operand.vmem [shape: f32[1,1024], index: 8, kind: input, shape index: {}]
  %s9 = inlined_call_operand.vmem [shape: bf16[1024,512], index: 9, kind: input, shape index: {}]
  %s10 = inlined_call_operand.vmem [shape: f32[1,512], index: 10, kind: input, shape index: {}]
  %s11 = inlined_call_operand.vmem [shape: bf16[512,64], index: 11, kind: input, shape index: {}]
  %s12 = inlined_call_operand.vmem [shape: f32[1,64], index: 12, kind: input, shape index: {}]
  %s13 = inlined_call_operand.vmem [shape: bf16[64,128], index: 13, kind: input, shape index: {}]
  %s14 = inlined_call_operand.vmem [shape: f32[1,128], index: 14, kind: input, shape index: {}]
  %s15 = inlined_call_operand.vmem [shape: f32[8,128], index: 15, kind: output, shape index: {}]
  %s16 = sld [smem:[#allocation0]]
  $region70: #{cnn_forward.1} parent=0
    _
  %s18 = ssub.s32 1, %s16
  %s19 = scalar_select 0, %s18, %s16
  // Predicated region
  $region2: #{cnn_forward.1} parent=0 // pred_check
    _
  $region3: #{cnn_forward.1} parent=0 // pred_check_branch
    %21 = sbr.rel (0) target = $region5
  $region4: #{cnn_forward.1} parent=0 // pred_region
    _
  $region5: #{cnn_forward.1} parent=0 // pred_fallthru
    _
  // Predicated region
  $region6: #{cnn_forward.1} parent=0 // pred_check
    _
  $region7: #{cnn_forward.1} parent=0 // pred_check_branch
    %23 = sbr.rel (0) target = $region9
  $region8: #{cnn_forward.1} parent=0 // pred_region
    _
  $region9: #{cnn_forward.1} parent=0 // pred_fallthru
    _
  // Predicated region
  $region10: #{cnn_forward.1} parent=0 // pred_check
    _
  $region11: #{cnn_forward.1} parent=0 // pred_check_branch
    %25 = sbr.rel (0) target = $region13
  $region12: #{cnn_forward.1} parent=0 // pred_region
    _
  $region13: #{cnn_forward.1} parent=0 // pred_fallthru
    _
  // Predicated region
  $region14: #{cnn_forward.1} parent=0 // pred_check
    _
  $region15: #{cnn_forward.1} parent=0 // pred_check_branch
    %27 = sbr.rel (0) target = $region17
  $region16: #{cnn_forward.1} parent=0 // pred_region
    _
  $region17: #{cnn_forward.1} parent=0 // pred_fallthru
    _
  // Predicated region
  $region18: #{cnn_forward.1} parent=0 // pred_check
    _
  $region19: #{cnn_forward.1} parent=0 // pred_check_branch
    %29 = sbr.rel (0) target = $region21
  $region20: #{cnn_forward.1} parent=0 // pred_region
    _
  $region21: #{cnn_forward.1} parent=0 // pred_fallthru
    _
  // Predicated region
  $region22: #{cnn_forward.1} parent=0 // pred_check
    _
  $region23: #{cnn_forward.1} parent=0 // pred_check_branch
    %31 = sbr.rel (0) target = $region25
  $region24: #{cnn_forward.1} parent=0 // pred_region
    _
  $region25: #{cnn_forward.1} parent=0 // pred_fallthru
    _
  // Predicated region
  $region26: #{cnn_forward.1} parent=0 // pred_check
    _
  $region27: #{cnn_forward.1} parent=0 // pred_check_branch
    %33 = sbr.rel (0) target = $region29
  $region28: #{cnn_forward.1} parent=0 // pred_region
    _
  $region29: #{cnn_forward.1} parent=0 // pred_fallthru
    _
  // Predicated region
  $region30: #{cnn_forward.1} parent=0 // pred_check
    _
  $region31: #{cnn_forward.1} parent=0 // pred_check_branch
    %35 = sbr.rel (0) target = $region33
  $region32: #{cnn_forward.1} parent=0 // pred_region
    _
  $region33: #{cnn_forward.1} parent=0 // pred_fallthru
    _
  // Predicated region
  $region34: #{cnn_forward.1} parent=0 // pred_check
    _
  $region35: #{cnn_forward.1} parent=0 // pred_check_branch
    %37 = sbr.rel (0) target = $region37
  $region36: #{cnn_forward.1} parent=0 // pred_region
    _
  $region37: #{cnn_forward.1} parent=0 // pred_fallthru
    _
  // Predicated region
  $region38: #{cnn_forward.1} parent=0 // pred_check
    _
  $region39: #{cnn_forward.1} parent=0 // pred_check_branch
    %39 = sbr.rel (0) target = $region41
  $region40: #{cnn_forward.1} parent=0 // pred_region
    _
  $region41: #{cnn_forward.1} parent=0 // pred_fallthru
    _
  // Predicated region
  $region42: #{cnn_forward.1} parent=0 // pred_check
    _
  $region43: #{cnn_forward.1} parent=0 // pred_check_branch
    %41 = sbr.rel (0) target = $region45
  $region44: #{cnn_forward.1} parent=0 // pred_region
    _
  $region45: #{cnn_forward.1} parent=0 // pred_fallthru
    _
  // Predicated region
  $region46: #{cnn_forward.1} parent=0 // pred_check
    _
  $region47: #{cnn_forward.1} parent=0 // pred_check_branch
    %43 = sbr.rel (0) target = $region49
  $region48: #{cnn_forward.1} parent=0 // pred_region
    _
  $region49: #{cnn_forward.1} parent=0 // pred_fallthru
    _
  // Predicated region
  $region50: #{cnn_forward.1} parent=0 // pred_check
    _
  $region51: #{cnn_forward.1} parent=0 // pred_check_branch
    %45 = sbr.rel (0) target = $region53
  $region52: #{cnn_forward.1} parent=0 // pred_region
    _
  $region53: #{cnn_forward.1} parent=0 // pred_fallthru
    _
  // Predicated region
  $region54: #{cnn_forward.1} parent=0 // pred_check
    _
  $region55: #{cnn_forward.1} parent=0 // pred_check_branch
    %47 = sbr.rel (0) target = $region57
  $region56: #{cnn_forward.1} parent=0 // pred_region
    _
  $region57: #{cnn_forward.1} parent=0 // pred_fallthru
    _
  // Predicated region
  $region58: #{cnn_forward.1} parent=0 // pred_check
    _
  $region59: #{cnn_forward.1} parent=0 // pred_check_branch
    %49 = sbr.rel (0) target = $region61
  $region60: #{cnn_forward.1} parent=0 // pred_region
    _
  $region61: #{cnn_forward.1} parent=0 // pred_fallthru
    _
  %v51 = vld [vmem:[%s0] sm:$0xff]
  %v52 = vld [vmem:[%s0 + $0x8] sm:$0xff]
  %v53 = vld [vmem:[%s0 + $0x10] sm:$0xff]
  %v54 = vld [vmem:[%s0 + $0x18] sm:$0xff]
  %v55 = vld [vmem:[%s0 + $0x20] sm:$0xff]
  %v56 = vld [vmem:[%s0 + $0x28] sm:$0xff]
  %v57 = vld [vmem:[%s0 + $0x30] sm:$0xff]
  %v58 = vld [vmem:[%s0 + $0x38] sm:$0xff]
  %v59 = vld [vmem:[%s0 + $0x40] sm:$0xff]
  %v60 = vld [vmem:[%s0 + $0x48] sm:$0xff]
  %v61 = vld [vmem:[%s0 + $0x50] sm:$0xff]
  %v62 = vld [vmem:[%s0 + $0x58] sm:$0xff]
  %v63 = vld [vmem:[%s0 + $0x60] sm:$0xff]
  %v64 = vld [vmem:[%s0 + $0x68] sm:$0xff]
  %v65 = vld [vmem:[%s0 + $0x70] sm:$0xff]
  %v66 = vld [vmem:[%s0 + $0x78] sm:$0xff]
  %v67 = vld [vmem:[%s1] sm:$0xff]
  %v68 = vld [vmem:[%s1 + $0x8] sm:$0xff]
  %v69 = vld [vmem:[%s1 + $0x10] sm:$0xff]
  %v70 = vld [vmem:[%s1 + $0x18] sm:$0xff]
  %v71 = vld [vmem:[%s1 + $0x20] sm:$0xff]
  %v72 = vld [vmem:[%s1 + $0x28] sm:$0xff]
  %v73 = vld [vmem:[%s1 + $0x30] sm:$0xff]
  %v74 = vld [vmem:[%s1 + $0x38] sm:$0xff]
  %v75 = vld [vmem:[%s1 + $0x40] sm:$0xff]
  %v76 = vld [vmem:[%s1 + $0x48] sm:$0xff]
  %v77 = vld [vmem:[%s1 + $0x50] sm:$0xff]
  %v78 = vld [vmem:[%s1 + $0x58] sm:$0xff]
  %v79 = vld [vmem:[%s1 + $0x60] sm:$0xff]
  %v80 = vld [vmem:[%s1 + $0x68] sm:$0xff]
  %v81 = vld [vmem:[%s1 + $0x70] sm:$0xff]
  %v82 = vld [vmem:[%s1 + $0x78] sm:$0xff]
  %v83 = vld [vmem:[%s1 + $0x80] sm:$0xff]
  %v84 = vld [vmem:[%s1 + $0x88] sm:$0xff]
  %v85 = vld [vmem:[%s1 + $0x90] sm:$0xff]
  %v86 = vld [vmem:[%s1 + $0x98] sm:$0xff]
  %v87 = vld [vmem:[%s1 + $0xa0] sm:$0xff]
  %v88 = vld [vmem:[%s1 + $0xa8] sm:$0xff]
  %v89 = vld [vmem:[%s1 + $0xb0] sm:$0xff]
  %v90 = vld [vmem:[%s1 + $0xb8] sm:$0xff]
  %v91 = vld [vmem:[%s1 + $0xc0] sm:$0xff]
  %v92 = vld [vmem:[%s1 + $0xc8] sm:$0xff]
  %v93 = vld [vmem:[%s1 + $0xd0] sm:$0xff]
  %v94 = vld [vmem:[%s1 + $0xd8] sm:$0xff]
  %v95 = vld [vmem:[%s1 + $0xe0] sm:$0xff]
  %v96 = vld [vmem:[%s1 + $0xe8] sm:$0xff]
  %v97 = vld [vmem:[%s1 + $0xf0] sm:$0xff]
  %v98 = vld [vmem:[%s1 + $0xf8] sm:$0xff]
  %v99 = vld [vmem:[%s2] sm:$0x3]
  %v101 = vlaneseq
  %v102 = vshrl.u32 %v101, 7
  %v103 = vsub.s32 0, %v102
  %v104 = vrot.slane %v99, %v103
  %v105 = vlaneseq
  %v106 = vshrl.u32 %v105, 7
  %v107 = vsub.s32 1, %v106
  %v108 = vrot.slane %v99, %v107
  %v127 = vunpack.c.l.b16 %v51
  %v128 = vunpack.c.h.b16 %v51
  %v129 = vunpack.c.l.b16 %v52
  %v130 = vunpack.c.h.b16 %v52
  %v131 = vunpack.c.l.b16 %v53
  %v132 = vunpack.c.h.b16 %v53
  %v133 = vunpack.c.l.b16 %v54
  %v134 = vunpack.c.h.b16 %v54
  %v135 = vunpack.c.l.b16 %v55
  %v136 = vunpack.c.h.b16 %v55
  %v137 = vunpack.c.l.b16 %v56
  %v138 = vunpack.c.h.b16 %v56
  %v139 = vunpack.c.l.b16 %v57
  %v140 = vunpack.c.h.b16 %v57
  %v141 = vunpack.c.l.b16 %v58
  %v142 = vunpack.c.h.b16 %v58
  %v143 = vunpack.c.l.b16 %v59
  %v144 = vunpack.c.h.b16 %v59
  %v145 = vunpack.c.l.b16 %v60
  %v146 = vunpack.c.h.b16 %v60
  %v147 = vunpack.c.l.b16 %v61
  %v148 = vunpack.c.h.b16 %v61
  %v149 = vunpack.c.l.b16 %v62
  %v150 = vunpack.c.h.b16 %v62
  %v151 = vunpack.c.l.b16 %v63
  %v152 = vunpack.c.h.b16 %v63
  %v153 = vunpack.c.l.b16 %v64
  %v154 = vunpack.c.h.b16 %v64
  %v155 = vunpack.c.l.b16 %v65
  %v156 = vunpack.c.h.b16 %v65
  %v157 = vunpack.c.l.b16 %v66
  %v158 = vunpack.c.h.b16 %v66
  %v159 = vpack.c.b16 %v129, %v127
  %v160 = vpack.c.b16 %v130, %v128
  %v161 = vpack.c.b16 %v133, %v131
  %v162 = vpack.c.b16 %v134, %v132
  %v163 = vpack.c.b16 %v137, %v135
  %v164 = vpack.c.b16 %v138, %v136
  %v165 = vpack.c.b16 %v141, %v139
  %v166 = vpack.c.b16 %v142, %v140
  %v167 = vpack.c.b16 %v145, %v143
  %v168 = vpack.c.b16 %v146, %v144
  %v169 = vpack.c.b16 %v149, %v147
  %v170 = vpack.c.b16 %v150, %v148
  %v171 = vpack.c.b16 %v153, %v151
  %v172 = vpack.c.b16 %v154, %v152
  %v173 = vpack.c.b16 %v157, %v155
  %v174 = vpack.c.b16 %v158, %v156
  %v223 = vunpack.c.l.b16 %v67
  %v224 = vunpack.c.h.b16 %v67
  %v225 = vunpack.c.l.b16 %v68
  %v226 = vunpack.c.h.b16 %v68
  %v227 = vunpack.c.l.b16 %v69
  %v228 = vunpack.c.h.b16 %v69
  %v229 = vunpack.c.l.b16 %v70
  %v230 = vunpack.c.h.b16 %v70
  %v231 = vunpack.c.l.b16 %v71
  %v232 = vunpack.c.h.b16 %v71
  %v233 = vunpack.c.l.b16 %v72
  %v234 = vunpack.c.h.b16 %v72
  %v235 = vunpack.c.l.b16 %v73
  %v236 = vunpack.c.h.b16 %v73
  %v237 = vunpack.c.l.b16 %v74
  %v238 = vunpack.c.h.b16 %v74
  %v239 = vunpack.c.l.b16 %v75
  %v240 = vunpack.c.h.b16 %v75
  %v241 = vunpack.c.l.b16 %v76
  %v242 = vunpack.c.h.b16 %v76
  %v243 = vunpack.c.l.b16 %v77
  %v244 = vunpack.c.h.b16 %v77
  %v245 = vunpack.c.l.b16 %v78
  %v246 = vunpack.c.h.b16 %v78
  %v247 = vunpack.c.l.b16 %v79
  %v248 = vunpack.c.h.b16 %v79
  %v249 = vunpack.c.l.b16 %v80
  %v250 = vunpack.c.h.b16 %v80
  %v251 = vunpack.c.l.b16 %v81
  %v252 = vunpack.c.h.b16 %v81
  %v253 = vunpack.c.l.b16 %v82
  %v254 = vunpack.c.h.b16 %v82
  %v255 = vunpack.c.l.b16 %v83
  %v256 = vunpack.c.h.b16 %v83
  %v257 = vunpack.c.l.b16 %v84
  %v258 = vunpack.c.h.b16 %v84
  %v259 = vunpack.c.l.b16 %v85
  %v260 = vunpack.c.h.b16 %v85
  %v261 = vunpack.c.l.b16 %v86
  %v262 = vunpack.c.h.b16 %v86
  %v263 = vunpack.c.l.b16 %v87
  %v264 = vunpack.c.h.b16 %v87
  %v265 = vunpack.c.l.b16 %v88
  %v266 = vunpack.c.h.b16 %v88
  %v267 = vunpack.c.l.b16 %v89
  %v268 = vunpack.c.h.b16 %v89
  %v269 = vunpack.c.l.b16 %v90
  %v270 = vunpack.c.h.b16 %v90
  %v271 = vunpack.c.l.b16 %v91
  %v272 = vunpack.c.h.b16 %v91
  %v273 = vunpack.c.l.b16 %v92
  %v274 = vunpack.c.h.b16 %v92
  %v275 = vunpack.c.l.b16 %v93
  %v276 = vunpack.c.h.b16 %v93
  %v277 = vunpack.c.l.b16 %v94
  %v278 = vunpack.c.h.b16 %v94
  %v279 = vunpack.c.l.b16 %v95
  %v280 = vunpack.c.h.b16 %v95
  %v281 = vunpack.c.l.b16 %v96
  %v282 = vunpack.c.h.b16 %v96
  %v283 = vunpack.c.l.b16 %v97
  %v284 = vunpack.c.h.b16 %v97
  %v285 = vunpack.c.l.b16 %v98
  %v286 = vunpack.c.h.b16 %v98
  %v287 = vpack.c.b16 %v225, %v223
  %v288 = vpack.c.b16 %v226, %v224
  %v289 = vpack.c.b16 %v229, %v227
  %v290 = vpack.c.b16 %v230, %v228
  %v291 = vpack.c.b16 %v233, %v231
  %v292 = vpack.c.b16 %v234, %v232
  %v293 = vpack.c.b16 %v237, %v235
  %v294 = vpack.c.b16 %v238, %v236
  %v295 = vpack.c.b16 %v241, %v239
  %v296 = vpack.c.b16 %v242, %v240
  %v297 = vpack.c.b16 %v245, %v243
  %v298 = vpack.c.b16 %v246, %v244
  %v299 = vpack.c.b16 %v249, %v247
  %v300 = vpack.c.b16 %v250, %v248
  %v301 = vpack.c.b16 %v253, %v251
  %v302 = vpack.c.b16 %v254, %v252
  %v303 = vpack.c.b16 %v257, %v255
  %v304 = vpack.c.b16 %v258, %v256
  %v305 = vpack.c.b16 %v261, %v259
  %v306 = vpack.c.b16 %v262, %v260
  %v307 = vpack.c.b16 %v265, %v263
  %v308 = vpack.c.b16 %v266, %v264
  %v309 = vpack.c.b16 %v269, %v267
  %v310 = vpack.c.b16 %v270, %v268
  %v311 = vpack.c.b16 %v273, %v271
  %v312 = vpack.c.b16 %v274, %v272
  %v313 = vpack.c.b16 %v277, %v275
  %v314 = vpack.c.b16 %v278, %v276
  %v315 = vpack.c.b16 %v281, %v279
  %v316 = vpack.c.b16 %v282, %v280
  %v317 = vpack.c.b16 %v285, %v283
  %v318 = vpack.c.b16 %v286, %v284
  %351 = vmatprep.subr.bf16.mxu0 %v288
  %352 = vmatpush1.bf16.msra.mxu0 %v287
  %353 = vmatprep.subr.bf16.mxu0 %v290
  %354 = vmatpush1.bf16.msra.mxu0 %v289
  %355 = vmatprep.subr.bf16.mxu0 %v292
  %356 = vmatpush1.bf16.msra.mxu0 %v291
  %357 = vmatprep.subr.bf16.mxu0 %v294
  %358 = vmatpush1.bf16.msra.mxu0 %v293
  %359 = vmatprep.subr.bf16.mxu0 %v296
  %360 = vmatpush1.bf16.msra.mxu0 %v295
  %361 = vmatprep.subr.bf16.mxu0 %v298
  %362 = vmatpush1.bf16.msra.mxu0 %v297
  %363 = vmatprep.subr.bf16.mxu0 %v300
  %364 = vmatpush1.bf16.msra.mxu0 %v299
  %365 = vmatprep.subr.bf16.mxu0 %v302
  %366 = vmatpush1.bf16.msra.mxu0 %v301
  %367 = vmatprep.subr.bf16.mxu0 %v304
  %368 = vmatpush1.bf16.msra.mxu0 %v303
  %369 = vmatprep.subr.bf16.mxu0 %v306
  %370 = vmatpush1.bf16.msra.mxu0 %v305
  %371 = vmatprep.subr.bf16.mxu0 %v308
  %372 = vmatpush1.bf16.msra.mxu0 %v307
  %373 = vmatprep.subr.bf16.mxu0 %v310
  %374 = vmatpush1.bf16.msra.mxu0 %v309
  %375 = vmatprep.subr.bf16.mxu0 %v312
  %376 = vmatpush1.bf16.msra.mxu0 %v311
  %377 = vmatprep.subr.bf16.mxu0 %v314
  %378 = vmatpush1.bf16.msra.mxu0 %v313
  %379 = vmatprep.subr.bf16.mxu0 %v316
  %380 = vmatpush1.bf16.msra.mxu0 %v315
  %381 = vmatprep.subr.bf16.mxu0 %v318
  %382 = vmatpush1.bf16.msra.mxu0 %v317
  %383 = vmatprep.mubr.bf16.mxu0 %v160
  %384 = vmatmul.mubr.bf16.gmra.mrb[0].mxu0 %v159
  %v385 = vpop.f32.mrb[0].mxu0
  %v386 = vadd.f32 %v104, %v385
  %v387 = vpop.f32.mrb[0].mxu0
  %v388 = vadd.f32 %v108, %v387
  %v389 = vpop.f32.mrb[0].mxu0
  %v390 = vadd.f32 %v104, %v389
  %v391 = vpop.f32.mrb[0].mxu0
  %v392 = vadd.f32 %v108, %v391
  %393 = vmatprep.mubr.bf16.mxu0 %v162
  %394 = vmatmul.mubr.bf16.gmra.mrb[0].mxu0 %v161
  %v395 = vpop.f32.mrb[0].mxu0
  %v396 = vadd.f32 %v104, %v395
  %v397 = vpop.f32.mrb[0].mxu0
  %v398 = vadd.f32 %v108, %v397
  %v399 = vpop.f32.mrb[0].mxu0
  %v400 = vadd.f32 %v104, %v399
  %v401 = vpop.f32.mrb[0].mxu0
  %v402 = vadd.f32 %v108, %v401
  %403 = vmatprep.mubr.bf16.mxu0 %v164
  %404 = vmatmul.mubr.bf16.gmra.mrb[0].mxu0 %v163
  %v405 = vpop.f32.mrb[0].mxu0
  %v406 = vadd.f32 %v104, %v405
  %v407 = vpop.f32.mrb[0].mxu0
  %v408 = vadd.f32 %v108, %v407
  %v409 = vpop.f32.mrb[0].mxu0
  %v410 = vadd.f32 %v104, %v409
  %v411 = vpop.f32.mrb[0].mxu0
  %v412 = vadd.f32 %v108, %v411
  %413 = vmatprep.mubr.bf16.mxu0 %v166
  %414 = vmatmul.mubr.bf16.gmra.mrb[0].mxu0 %v165
  %v415 = vpop.f32.mrb[0].mxu0
  %v416 = vadd.f32 %v104, %v415
  %v417 = vpop.f32.mrb[0].mxu0
  %v418 = vadd.f32 %v108, %v417
  %v419 = vpop.f32.mrb[0].mxu0
  %v420 = vadd.f32 %v104, %v419
  %v421 = vpop.f32.mrb[0].mxu0
  %v422 = vadd.f32 %v108, %v421
  %423 = vmatprep.mubr.bf16.mxu0 %v168
  %424 = vmatmul.mubr.bf16.gmra.mrb[0].mxu0 %v167
  %v425 = vpop.f32.mrb[0].mxu0
  %v426 = vadd.f32 %v104, %v425
  %v427 = vpop.f32.mrb[0].mxu0
  %v428 = vadd.f32 %v108, %v427
  %v429 = vpop.f32.mrb[0].mxu0
  %v430 = vadd.f32 %v104, %v429
  %v431 = vpop.f32.mrb[0].mxu0
  %v432 = vadd.f32 %v108, %v431
  %433 = vmatprep.mubr.bf16.mxu0 %v170
  %434 = vmatmul.mubr.bf16.gmra.mrb[0].mxu0 %v169
  %v435 = vpop.f32.mrb[0].mxu0
  %v436 = vadd.f32 %v104, %v435
  %v437 = vpop.f32.mrb[0].mxu0
  %v438 = vadd.f32 %v108, %v437
  %v439 = vpop.f32.mrb[0].mxu0
  %v440 = vadd.f32 %v104, %v439
  %v441 = vpop.f32.mrb[0].mxu0
  %v442 = vadd.f32 %v108, %v441
  %443 = vmatprep.mubr.bf16.mxu0 %v172
  %444 = vmatmul.mubr.bf16.gmra.mrb[0].mxu0 %v171
  %v445 = vpop.f32.mrb[0].mxu0
  %v446 = vadd.f32 %v104, %v445
  %v447 = vpop.f32.mrb[0].mxu0
  %v448 = vadd.f32 %v108, %v447
  %v449 = vpop.f32.mrb[0].mxu0
  %v450 = vadd.f32 %v104, %v449
  %v451 = vpop.f32.mrb[0].mxu0
  %v452 = vadd.f32 %v108, %v451
  %453 = vmatprep.mubr.bf16.mxu0 %v174
  %454 = vmatmul.mubr.bf16.gmra.mrb[0].mxu0 %v173
  %v455 = vpop.f32.mrb[0].mxu0
  %v456 = vadd.f32 %v104, %v455
  %v457 = vpop.f32.mrb[0].mxu0
  %v458 = vadd.f32 %v108, %v457
  %v459 = vpop.f32.mrb[0].mxu0
  %v460 = vadd.f32 %v104, %v459
  %v461 = vpop.f32.mrb[0].mxu0
  %v462 = vadd.f32 %v108, %v461
  %463 = vdwg.mxu0
  %v464 = vmax.f32 %v386, 0.0
  %v465 = vmax.f32 %v388, 0.0
  %v466 = vmax.f32 %v390, 0.0
  %v467 = vmax.f32 %v392, 0.0
  %v468 = vmax.f32 %v396, 0.0
  %v469 = vmax.f32 %v398, 0.0
  %v470 = vmax.f32 %v400, 0.0
  %v471 = vmax.f32 %v402, 0.0
  %v472 = vmax.f32 %v406, 0.0
  %v473 = vmax.f32 %v408, 0.0
  %v474 = vmax.f32 %v410, 0.0
  %v475 = vmax.f32 %v412, 0.0
  %v476 = vmax.f32 %v416, 0.0
  %v477 = vmax.f32 %v418, 0.0
  %v478 = vmax.f32 %v420, 0.0
  %v479 = vmax.f32 %v422, 0.0
  %v480 = vmax.f32 %v426, 0.0
  %v481 = vmax.f32 %v428, 0.0
  %v482 = vmax.f32 %v430, 0.0
  %v483 = vmax.f32 %v432, 0.0
  %v484 = vmax.f32 %v436, 0.0
  %v485 = vmax.f32 %v438, 0.0
  %v486 = vmax.f32 %v440, 0.0
  %v487 = vmax.f32 %v442, 0.0
  %v488 = vmax.f32 %v446, 0.0
  %v489 = vmax.f32 %v448, 0.0
  %v490 = vmax.f32 %v450, 0.0
  %v491 = vmax.f32 %v452, 0.0
  %v492 = vmax.f32 %v456, 0.0
  %v493 = vmax.f32 %v458, 0.0
  %v494 = vmax.f32 %v460, 0.0
  %v495 = vmax.f32 %v462, 0.0
  %v496 = vpack.c.bf16 %v466, %v464
  %v497 = vpack.c.bf16 %v467, %v465
  %v498 = vpack.c.bf16 %v470, %v468
  %v499 = vpack.c.bf16 %v471, %v469
  %v500 = vld [vmem:[%s3] sm:$0xf]
  %v501 = vld [vmem:[%s3 + $0x4] sm:$0xf]
  %v502 = vld [vmem:[%s3 + $0x8] sm:$0xf]
  %v503 = vld [vmem:[%s3 + $0xc] sm:$0xf]
  %v504 = vld [vmem:[%s3 + $0x10] sm:$0xf]
  %v505 = vld [vmem:[%s3 + $0x14] sm:$0xf]
  %v506 = vld [vmem:[%s3 + $0x18] sm:$0xf]
  %v507 = vld [vmem:[%s3 + $0x1c] sm:$0xf]
  %v508 = vld [vmem:[%s3 + $0x20] sm:$0xf]
  %v509 = vld [vmem:[%s3 + $0x24] sm:$0xf]
  %v510 = vld [vmem:[%s3 + $0x28] sm:$0xf]
  %v511 = vld [vmem:[%s3 + $0x2c] sm:$0xf]
  %v512 = vld [vmem:[%s3 + $0x30] sm:$0xf]
  %v513 = vld [vmem:[%s3 + $0x34] sm:$0xf]
  %v514 = vld [vmem:[%s3 + $0x38] sm:$0xf]
  %v515 = vld [vmem:[%s3 + $0x3c] sm:$0xf]
  %v516 = vld [vmem:[%s3 + $0x40] sm:$0xf]
  %v517 = vld [vmem:[%s3 + $0x44] sm:$0xf]
  %v518 = vld [vmem:[%s3 + $0x48] sm:$0xf]
  %v519 = vld [vmem:[%s3 + $0x4c] sm:$0xf]
  %v520 = vld [vmem:[%s3 + $0x50] sm:$0xf]
  %v521 = vld [vmem:[%s3 + $0x54] sm:$0xf]
  %v522 = vld [vmem:[%s3 + $0x58] sm:$0xf]
  %v523 = vld [vmem:[%s3 + $0x5c] sm:$0xf]
  %v524 = vld [vmem:[%s3 + $0x60] sm:$0xf]
  %v525 = vld [vmem:[%s3 + $0x64] sm:$0xf]
  %v526 = vld [vmem:[%s3 + $0x68] sm:$0xf]
  %v527 = vld [vmem:[%s3 + $0x6c] sm:$0xf]
  %v528 = vld [vmem:[%s3 + $0x70] sm:$0xf]
  %v529 = vld [vmem:[%s3 + $0x74] sm:$0xf]
  %v530 = vld [vmem:[%s3 + $0x78] sm:$0xf]
  %v531 = vld [vmem:[%s3 + $0x7c] sm:$0xf]
  %v532 = vpack.c.bf16 %v474, %v472
  %v533 = vpack.c.bf16 %v475, %v473
  %v534 = vpack.c.bf16 %v478, %v476
  %v535 = vpack.c.bf16 %v479, %v477
  %v536 = vld [vmem:[%s3 + $0x80] sm:$0xf]
  %v537 = vld [vmem:[%s3 + $0x84] sm:$0xf]
  %v538 = vld [vmem:[%s3 + $0x88] sm:$0xf]
  %v539 = vld [vmem:[%s3 + $0x8c] sm:$0xf]
  %v540 = vld [vmem:[%s3 + $0x90] sm:$0xf]
  %v541 = vld [vmem:[%s3 + $0x94] sm:$0xf]
  %v542 = vld [vmem:[%s3 + $0x98] sm:$0xf]
  %v543 = vld [vmem:[%s3 + $0x9c] sm:$0xf]
  %v544 = vld [vmem:[%s3 + $0xa0] sm:$0xf]
  %v545 = vld [vmem:[%s3 + $0xa4] sm:$0xf]
  %v546 = vld [vmem:[%s3 + $0xa8] sm:$0xf]
  %v547 = vld [vmem:[%s3 + $0xac] sm:$0xf]
  %v548 = vld [vmem:[%s3 + $0xb0] sm:$0xf]
  %v549 = vld [vmem:[%s3 + $0xb4] sm:$0xf]
  %v550 = vld [vmem:[%s3 + $0xb8] sm:$0xf]
  %v551 = vld [vmem:[%s3 + $0xbc] sm:$0xf]
  %v552 = vld [vmem:[%s3 + $0xc0] sm:$0xf]
  %v553 = vld [vmem:[%s3 + $0xc4] sm:$0xf]
  %v554 = vld [vmem:[%s3 + $0xc8] sm:$0xf]
  %v555 = vld [vmem:[%s3 + $0xcc] sm:$0xf]
  %v556 = vld [vmem:[%s3 + $0xd0] sm:$0xf]
  %v557 = vld [vmem:[%s3 + $0xd4] sm:$0xf]
  %v558 = vld [vmem:[%s3 + $0xd8] sm:$0xf]
  %v559 = vld [vmem:[%s3 + $0xdc] sm:$0xf]
  %v560 = vld [vmem:[%s3 + $0xe0] sm:$0xf]
  %v561 = vld [vmem:[%s3 + $0xe4] sm:$0xf]
  %v562 = vld [vmem:[%s3 + $0xe8] sm:$0xf]
  %v563 = vld [vmem:[%s3 + $0xec] sm:$0xf]
  %v564 = vld [vmem:[%s3 + $0xf0] sm:$0xf]
  %v565 = vld [vmem:[%s3 + $0xf4] sm:$0xf]
  %v566 = vld [vmem:[%s3 + $0xf8] sm:$0xf]
  %v567 = vld [vmem:[%s3 + $0xfc] sm:$0xf]
  %v600 = vunpack.c.l.b16 %v536
  %v601 = vunpack.c.l.b16 %v537
  %v602 = vunpack.c.l.b16 %v538
  %v603 = vunpack.c.l.b16 %v539
  %v604 = vunpack.c.l.b16 %v540
  %v605 = vunpack.c.l.b16 %v541
  %v606 = vunpack.c.l.b16 %v542
  %v607 = vunpack.c.l.b16 %v543
  %v608 = vunpack.c.l.b16 %v544
  %v609 = vunpack.c.l.b16 %v545
  %v610 = vunpack.c.l.b16 %v546
  %v611 = vunpack.c.l.b16 %v547
  %v612 = vunpack.c.l.b16 %v548
  %v613 = vunpack.c.l.b16 %v549
  %v614 = vunpack.c.l.b16 %v550
  %v615 = vunpack.c.l.b16 %v551
  %v616 = vunpack.c.l.b16 %v552
  %v617 = vunpack.c.l.b16 %v553
  %v618 = vunpack.c.l.b16 %v554
  %v619 = vunpack.c.l.b16 %v555
  %v620 = vunpack.c.l.b16 %v556
  %v621 = vunpack.c.l.b16 %v557
  %v622 = vunpack.c.l.b16 %v558
  %v623 = vunpack.c.l.b16 %v559
  %v624 = vunpack.c.l.b16 %v560
  %v625 = vunpack.c.l.b16 %v561
  %v626 = vunpack.c.l.b16 %v562
  %v627 = vunpack.c.l.b16 %v563
  %v628 = vunpack.c.l.b16 %v564
  %v629 = vunpack.c.l.b16 %v565
  %v630 = vunpack.c.l.b16 %v566
  %v631 = vunpack.c.l.b16 %v567
  %v632 = vpack.c.b16 %v601, %v600
  %v633 = vpack.c.b16 %v603, %v602
  %v634 = vpack.c.b16 %v605, %v604
  %v635 = vpack.c.b16 %v607, %v606
  %v636 = vpack.c.b16 %v609, %v608
  %v637 = vpack.c.b16 %v611, %v610
  %v638 = vpack.c.b16 %v613, %v612
  %v639 = vpack.c.b16 %v615, %v614
  %v640 = vpack.c.b16 %v617, %v616
  %v641 = vpack.c.b16 %v619, %v618
  %v642 = vpack.c.b16 %v621, %v620
  %v643 = vpack.c.b16 %v623, %v622
  %v644 = vpack.c.b16 %v625, %v624
  %v645 = vpack.c.b16 %v627, %v626
  %v646 = vpack.c.b16 %v629, %v628
  %v647 = vpack.c.b16 %v631, %v630
  %664 = vmatprep.subr.bf16.mxu0 0
  %665 = vmatpush1.bf16.msra.mxu0 %v632
  %666 = vmatprep.subr.bf16.mxu0 0
  %667 = vmatpush1.bf16.msra.mxu0 %v633
  %668 = vmatprep.subr.bf16.mxu0 0
  %669 = vmatpush1.bf16.msra.mxu0 %v634
  %670 = vmatprep.subr.bf16.mxu0 0
  %671 = vmatpush1.bf16.msra.mxu0 %v635
  %672 = vmatprep.subr.bf16.mxu0 0
  %673 = vmatpush1.bf16.msra.mxu0 %v636
  %674 = vmatprep.subr.bf16.mxu0 0
  %675 = vmatpush1.bf16.msra.mxu0 %v637
  %676 = vmatprep.subr.bf16.mxu0 0
  %677 = vmatpush1.bf16.msra.mxu0 %v638
  %678 = vmatprep.subr.bf16.mxu0 0
  %679 = vmatpush1.bf16.msra.mxu0 %v639
  %680 = vmatprep.subr.bf16.mxu0 0
  %681 = vmatpush1.bf16.msra.mxu0 %v640
  %682 = vmatprep.subr.bf16.mxu0 0
  %683 = vmatpush1.bf16.msra.mxu0 %v641
  %684 = vmatprep.subr.bf16.mxu0 0
  %685 = vmatpush1.bf16.msra.mxu0 %v642
  %686 = vmatprep.subr.bf16.mxu0 0
  %687 = vmatpush1.bf16.msra.mxu0 %v643
  %688 = vmatprep.subr.bf16.mxu0 0
  %689 = vmatpush1.bf16.msra.mxu0 %v644
  %690 = vmatprep.subr.bf16.mxu0 0
  %691 = vmatpush1.bf16.msra.mxu0 %v645
  %692 = vmatprep.subr.bf16.mxu0 0
  %693 = vmatpush1.bf16.msra.mxu0 %v646
  %694 = vmatprep.subr.bf16.mxu0 0
  %695 = vmatpush1.bf16.msra.mxu0 %v647
  %696 = vmatprep.mubr.bf16.mxu0 %v533
  %697 = vmatmul.mubr.bf16.gmra.mrb[0].mxu0 %v532
  %v698 = vpop.f32.mrb[0].mxu0
  %v699 = vadd.f32 0.0, %v698
  %v700 = vpop.f32.mrb[0].mxu0
  %v701 = vpop.f32.mrb[0].mxu0
  %v702 = vadd.f32 0.0, %v701
  %v703 = vpop.f32.mrb[0].mxu0
  %704 = vmatprep.mubr.bf16.mxu0 %v535
  %705 = vmatmul.mubr.bf16.gmra.mrb[0].mxu0 %v534
  %v706 = vpop.f32.mrb[0].mxu0
  %v707 = vadd.f32 0.0, %v706
  %v708 = vpop.f32.mrb[0].mxu0
  %v709 = vpop.f32.mrb[0].mxu0
  %v710 = vadd.f32 0.0, %v709
  %v711 = vpop.f32.mrb[0].mxu0
  %712 = vdwg.mxu0
  %v745 = vunpack.c.l.b16 %v500
  %v746 = vunpack.c.l.b16 %v501
  %v747 = vunpack.c.l.b16 %v502
  %v748 = vunpack.c.l.b16 %v503
  %v749 = vunpack.c.l.b16 %v504
  %v750 = vunpack.c.l.b16 %v505
  %v751 = vunpack.c.l.b16 %v506
  %v752 = vunpack.c.l.b16 %v507
  %v753 = vunpack.c.l.b16 %v508
  %v754 = vunpack.c.l.b16 %v509
  %v755 = vunpack.c.l.b16 %v510
  %v756 = vunpack.c.l.b16 %v511
  %v757 = vunpack.c.l.b16 %v512
  %v758 = vunpack.c.l.b16 %v513
  %v759 = vunpack.c.l.b16 %v514
  %v760 = vunpack.c.l.b16 %v515
  %v761 = vunpack.c.l.b16 %v516
  %v762 = vunpack.c.l.b16 %v517
  %v763 = vunpack.c.l.b16 %v518
  %v764 = vunpack.c.l.b16 %v519
  %v765 = vunpack.c.l.b16 %v520
  %v766 = vunpack.c.l.b16 %v521
  %v767 = vunpack.c.l.b16 %v522
  %v768 = vunpack.c.l.b16 %v523
  %v769 = vunpack.c.l.b16 %v524
  %v770 = vunpack.c.l.b16 %v525
  %v771 = vunpack.c.l.b16 %v526
  %v772 = vunpack.c.l.b16 %v527
  %v773 = vunpack.c.l.b16 %v528
  %v774 = vunpack.c.l.b16 %v529
  %v775 = vunpack.c.l.b16 %v530
  %v776 = vunpack.c.l.b16 %v531
  %v777 = vpack.c.b16 %v746, %v745
  %v778 = vpack.c.b16 %v748, %v747
  %v779 = vpack.c.b16 %v750, %v749
  %v780 = vpack.c.b16 %v752, %v751
  %v781 = vpack.c.b16 %v754, %v753
  %v782 = vpack.c.b16 %v756, %v755
  %v783 = vpack.c.b16 %v758, %v757
  %v784 = vpack.c.b16 %v760, %v759
  %v785 = vpack.c.b16 %v762, %v761
  %v786 = vpack.c.b16 %v764, %v763
  %v787 = vpack.c.b16 %v766, %v765
  %v788 = vpack.c.b16 %v768, %v767
  %v789 = vpack.c.b16 %v770, %v769
  %v790 = vpack.c.b16 %v772, %v771
  %v791 = vpack.c.b16 %v774, %v773
  %v792 = vpack.c.b16 %v776, %v775
  %809 = vmatprep.subr.bf16.mxu0 0
  %810 = vmatpush1.bf16.msra.mxu0 %v777
  %811 = vmatprep.subr.bf16.mxu0 0
  %812 = vmatpush1.bf16.msra.mxu0 %v778
  %813 = vmatprep.subr.bf16.mxu0 0
  %814 = vmatpush1.bf16.msra.mxu0 %v779
  %815 = vmatprep.subr.bf16.mxu0 0
  %816 = vmatpush1.bf16.msra.mxu0 %v780
  %817 = vmatprep.subr.bf16.mxu0 0
  %818 = vmatpush1.bf16.msra.mxu0 %v781
  %819 = vmatprep.subr.bf16.mxu0 0
  %820 = vmatpush1.bf16.msra.mxu0 %v782
  %821 = vmatprep.subr.bf16.mxu0 0
  %822 = vmatpush1.bf16.msra.mxu0 %v783
  %823 = vmatprep.subr.bf16.mxu0 0
  %824 = vmatpush1.bf16.msra.mxu0 %v784
  %825 = vmatprep.subr.bf16.mxu0 0
  %826 = vmatpush1.bf16.msra.mxu0 %v785
  %827 = vmatprep.subr.bf16.mxu0 0
  %828 = vmatpush1.bf16.msra.mxu0 %v786
  %829 = vmatprep.subr.bf16.mxu0 0
  %830 = vmatpush1.bf16.msra.mxu0 %v787
  %831 = vmatprep.subr.bf16.mxu0 0
  %832 = vmatpush1.bf16.msra.mxu0 %v788
  %833 = vmatprep.subr.bf16.mxu0 0
  %834 = vmatpush1.bf16.msra.mxu0 %v789
  %835 = vmatprep.subr.bf16.mxu0 0
  %836 = vmatpush1.bf16.msra.mxu0 %v790
  %837 = vmatprep.subr.bf16.mxu0 0
  %838 = vmatpush1.bf16.msra.mxu0 %v791
  %839 = vmatprep.subr.bf16.mxu0 0
  %840 = vmatpush1.bf16.msra.mxu0 %v792
  %841 = vmatprep.mubr.bf16.mxu0 %v497
  %842 = vmatmul.mubr.bf16.gmra.mrb[0].mxu0 %v496
  %v843 = vpop.f32.mrb[0].mxu0
  %v844 = vadd.f32 %v699, %v843
  %v845 = vpop.f32.mrb[0].mxu0
  %v846 = vpop.f32.mrb[0].mxu0
  %v847 = vadd.f32 %v702, %v846
  %v848 = vpop.f32.mrb[0].mxu0
  %849 = vmatprep.mubr.bf16.mxu0 %v499
  %850 = vmatmul.mubr.bf16.gmra.mrb[0].mxu0 %v498
  %v851 = vpop.f32.mrb[0].mxu0
  %v852 = vadd.f32 %v707, %v851
  %v853 = vpop.f32.mrb[0].mxu0
  %v854 = vpop.f32.mrb[0].mxu0
  %v855 = vadd.f32 %v710, %v854
  %v856 = vpop.f32.mrb[0].mxu0
  %857 = vdwg.mxu0
  %v858 = vpack.c.bf16 %v482, %v480
  %v859 = vpack.c.bf16 %v483, %v481
  %v860 = vpack.c.bf16 %v486, %v484
  %v861 = vpack.c.bf16 %v487, %v485
  %v862 = vld [vmem:[%s3 + $0x100] sm:$0xf]
  %v863 = vld [vmem:[%s3 + $0x104] sm:$0xf]
  %v864 = vld [vmem:[%s3 + $0x108] sm:$0xf]
  %v865 = vld [vmem:[%s3 + $0x10c] sm:$0xf]
  %v866 = vld [vmem:[%s3 + $0x110] sm:$0xf]
  %v867 = vld [vmem:[%s3 + $0x114] sm:$0xf]
  %v868 = vld [vmem:[%s3 + $0x118] sm:$0xf]
  %v869 = vld [vmem:[%s3 + $0x11c] sm:$0xf]
  %v870 = vld [vmem:[%s3 + $0x120] sm:$0xf]
  %v871 = vld [vmem:[%s3 + $0x124] sm:$0xf]
  %v872 = vld [vmem:[%s3 + $0x128] sm:$0xf]
  %v873 = vld [vmem:[%s3 + $0x12c] sm:$0xf]
  %v874 = vld [vmem:[%s3 + $0x130] sm:$0xf]
  %v875 = vld [vmem:[%s3 + $0x134] sm:$0xf]
  %v876 = vld [vmem:[%s3 + $0x138] sm:$0xf]
  %v877 = vld [vmem:[%s3 + $0x13c] sm:$0xf]
  %v878 = vld [vmem:[%s3 + $0x140] sm:$0xf]
  %v879 = vld [vmem:[%s3 + $0x144] sm:$0xf]
  %v880 = vld [vmem:[%s3 + $0x148] sm:$0xf]
  %v881 = vld [vmem:[%s3 + $0x14c] sm:$0xf]
  %v882 = vld [vmem:[%s3 + $0x150] sm:$0xf]
  %v883 = vld [vmem:[%s3 + $0x154] sm:$0xf]
  %v884 = vld [vmem:[%s3 + $0x158] sm:$0xf]
  %v885 = vld [vmem:[%s3 + $0x15c] sm:$0xf]
  %v886 = vld [vmem:[%s3 + $0x160] sm:$0xf]
  %v887 = vld [vmem:[%s3 + $0x164] sm:$0xf]
  %v888 = vld [vmem:[%s3 + $0x168] sm:$0xf]
  %v889 = vld [vmem:[%s3 + $0x16c] sm:$0xf]
  %v890 = vld [vmem:[%s3 + $0x170] sm:$0xf]
  %v891 = vld [vmem:[%s3 + $0x174] sm:$0xf]
  %v892 = vld [vmem:[%s3 + $0x178] sm:$0xf]
  %v893 = vld [vmem:[%s3 + $0x17c] sm:$0xf]
  %v926 = vunpack.c.l.b16 %v862
  %v927 = vunpack.c.l.b16 %v863
  %v928 = vunpack.c.l.b16 %v864
  %v929 = vunpack.c.l.b16 %v865
  %v930 = vunpack.c.l.b16 %v866
  %v931 = vunpack.c.l.b16 %v867
  %v932 = vunpack.c.l.b16 %v868
  %v933 = vunpack.c.l.b16 %v869
  %v934 = vunpack.c.l.b16 %v870
  %v935 = vunpack.c.l.b16 %v871
  %v936 = vunpack.c.l.b16 %v872
  %v937 = vunpack.c.l.b16 %v873
  %v938 = vunpack.c.l.b16 %v874
  %v939 = vunpack.c.l.b16 %v875
  %v940 = vunpack.c.l.b16 %v876
  %v941 = vunpack.c.l.b16 %v877
  %v942 = vunpack.c.l.b16 %v878
  %v943 = vunpack.c.l.b16 %v879
  %v944 = vunpack.c.l.b16 %v880
  %v945 = vunpack.c.l.b16 %v881
  %v946 = vunpack.c.l.b16 %v882
  %v947 = vunpack.c.l.b16 %v883
  %v948 = vunpack.c.l.b16 %v884
  %v949 = vunpack.c.l.b16 %v885
  %v950 = vunpack.c.l.b16 %v886
  %v951 = vunpack.c.l.b16 %v887
  %v952 = vunpack.c.l.b16 %v888
  %v953 = vunpack.c.l.b16 %v889
  %v954 = vunpack.c.l.b16 %v890
  %v955 = vunpack.c.l.b16 %v891
  %v956 = vunpack.c.l.b16 %v892
  %v957 = vunpack.c.l.b16 %v893
  %v958 = vpack.c.b16 %v927, %v926
  %v959 = vpack.c.b16 %v929, %v928
  %v960 = vpack.c.b16 %v931, %v930
  %v961 = vpack.c.b16 %v933, %v932
  %v962 = vpack.c.b16 %v935, %v934
  %v963 = vpack.c.b16 %v937, %v936
  %v964 = vpack.c.b16 %v939, %v938
  %v965 = vpack.c.b16 %v941, %v940
  %v966 = vpack.c.b16 %v943, %v942
  %v967 = vpack.c.b16 %v945, %v944
  %v968 = vpack.c.b16 %v947, %v946
  %v969 = vpack.c.b16 %v949, %v948
  %v970 = vpack.c.b16 %v951, %v950
  %v971 = vpack.c.b16 %v953, %v952
  %v972 = vpack.c.b16 %v955, %v954
  %v973 = vpack.c.b16 %v957, %v956
  %990 = vmatprep.subr.bf16.mxu0 0
  %991 = vmatpush1.bf16.msra.mxu0 %v958
  %992 = vmatprep.subr.bf16.mxu0 0
  %993 = vmatpush1.bf16.msra.mxu0 %v959
  %994 = vmatprep.subr.bf16.mxu0 0
  %995 = vmatpush1.bf16.msra.mxu0 %v960
  %996 = vmatprep.subr.bf16.mxu0 0
  %997 = vmatpush1.bf16.msra.mxu0 %v961
  %998 = vmatprep.subr.bf16.mxu0 0
  %999 = vmatpush1.bf16.msra.mxu0 %v962
  %1000 = vmatprep.subr.bf16.mxu0 0
  %1001 = vmatpush1.bf16.msra.mxu0 %v963
  %1002 = vmatprep.subr.bf16.mxu0 0
  %1003 = vmatpush1.bf16.msra.mxu0 %v964
  %1004 = vmatprep.subr.bf16.mxu0 0
  %1005 = vmatpush1.bf16.msra.mxu0 %v965
  %1006 = vmatprep.subr.bf16.mxu0 0
  %1007 = vmatpush1.bf16.msra.mxu0 %v966
  %1008 = vmatprep.subr.bf16.mxu0 0
  %1009 = vmatpush1.bf16.msra.mxu0 %v967
  %1010 = vmatprep.subr.bf16.mxu0 0
  %1011 = vmatpush1.bf16.msra.mxu0 %v968
  %1012 = vmatprep.subr.bf16.mxu0 0
  %1013 = vmatpush1.bf16.msra.mxu0 %v969
  %1014 = vmatprep.subr.bf16.mxu0 0
  %1015 = vmatpush1.bf16.msra.mxu0 %v970
  %1016 = vmatprep.subr.bf16.mxu0 0
  %1017 = vmatpush1.bf16.msra.mxu0 %v971
  %1018 = vmatprep.subr.bf16.mxu0 0
  %1019 = vmatpush1.bf16.msra.mxu0 %v972
  %1020 = vmatprep.subr.bf16.mxu0 0
  %1021 = vmatpush1.bf16.msra.mxu0 %v973
  %1022 = vmatprep.mubr.bf16.mxu0 %v859
  %1023 = vmatmul.mubr.bf16.gmra.mrb[0].mxu0 %v858
  %v1024 = vpop.f32.mrb[0].mxu0
  %v1025 = vadd.f32 0.0, %v1024
  %v1026 = vpop.f32.mrb[0].mxu0
  %v1027 = vpop.f32.mrb[0].mxu0
  %v1028 = vadd.f32 0.0, %v1027
  %v1029 = vpop.f32.mrb[0].mxu0
  %1030 = vmatprep.mubr.bf16.mxu0 %v861
  %1031 = vmatmul.mubr.bf16.gmra.mrb[0].mxu0 %v860
  %v1032 = vpop.f32.mrb[0].mxu0
  %v1033 = vadd.f32 0.0, %v1032
  %v1034 = vpop.f32.mrb[0].mxu0
  %v1035 = vpop.f32.mrb[0].mxu0
  %v1036 = vadd.f32 0.0, %v1035
  %v1037 = vpop.f32.mrb[0].mxu0
  %1038 = vdwg.mxu0
  %v1039 = vadd.f32 %v844, %v1025
  %v1040 = vadd.f32 %v847, %v1028
  %v1041 = vadd.f32 %v852, %v1033
  %v1042 = vadd.f32 %v855, %v1036
  %v1043 = vpack.c.bf16 %v490, %v488
  %v1044 = vpack.c.bf16 %v491, %v489
  %v1045 = vpack.c.bf16 %v494, %v492
  %v1046 = vpack.c.bf16 %v495, %v493
  %v1047 = vld [vmem:[%s3 + $0x180] sm:$0xf]
  %v1048 = vld [vmem:[%s3 + $0x184] sm:$0xf]
  %v1049 = vld [vmem:[%s3 + $0x188] sm:$0xf]
  %v1050 = vld [vmem:[%s3 + $0x18c] sm:$0xf]
  %v1051 = vld [vmem:[%s3 + $0x190] sm:$0xf]
  %v1052 = vld [vmem:[%s3 + $0x194] sm:$0xf]
  %v1053 = vld [vmem:[%s3 + $0x198] sm:$0xf]
  %v1054 = vld [vmem:[%s3 + $0x19c] sm:$0xf]
  %v1055 = vld [vmem:[%s3 + $0x1a0] sm:$0xf]
  %v1056 = vld [vmem:[%s3 + $0x1a4] sm:$0xf]
  %v1057 = vld [vmem:[%s3 + $0x1a8] sm:$0xf]
  %v1058 = vld [vmem:[%s3 + $0x1ac] sm:$0xf]
  %v1059 = vld [vmem:[%s3 + $0x1b0] sm:$0xf]
  %v1060 = vld [vmem:[%s3 + $0x1b4] sm:$0xf]
  %v1061 = vld [vmem:[%s3 + $0x1b8] sm:$0xf]
  %v1062 = vld [vmem:[%s3 + $0x1bc] sm:$0xf]
  %v1063 = vld [vmem:[%s3 + $0x1c0] sm:$0xf]
  %v1064 = vld [vmem:[%s3 + $0x1c4] sm:$0xf]
  %v1065 = vld [vmem:[%s3 + $0x1c8] sm:$0xf]
  %v1066 = vld [vmem:[%s3 + $0x1cc] sm:$0xf]
  %v1067 = vld [vmem:[%s3 + $0x1d0] sm:$0xf]
  %v1068 = vld [vmem:[%s3 + $0x1d4] sm:$0xf]
  %v1069 = vld [vmem:[%s3 + $0x1d8] sm:$0xf]
  %v1070 = vld [vmem:[%s3 + $0x1dc] sm:$0xf]
  %v1071 = vld [vmem:[%s3 + $0x1e0] sm:$0xf]
  %v1072 = vld [vmem:[%s3 + $0x1e4] sm:$0xf]
  %v1073 = vld [vmem:[%s3 + $0x1e8] sm:$0xf]
  %v1074 = vld [vmem:[%s3 + $0x1ec] sm:$0xf]
  %v1075 = vld [vmem:[%s3 + $0x1f0] sm:$0xf]
  %v1076 = vld [vmem:[%s3 + $0x1f4] sm:$0xf]
  %v1077 = vld [vmem:[%s3 + $0x1f8] sm:$0xf]
  %v1078 = vld [vmem:[%s3 + $0x1fc] sm:$0xf]
  %v1111 = vunpack.c.l.b16 %v1047
  %v1112 = vunpack.c.l.b16 %v1048
  %v1113 = vunpack.c.l.b16 %v1049
  %v1114 = vunpack.c.l.b16 %v1050
  %v1115 = vunpack.c.l.b16 %v1051
  %v1116 = vunpack.c.l.b16 %v1052
  %v1117 = vunpack.c.l.b16 %v1053
  %v1118 = vunpack.c.l.b16 %v1054
  %v1119 = vunpack.c.l.b16 %v1055
  %v1120 = vunpack.c.l.b16 %v1056
  %v1121 = vunpack.c.l.b16 %v1057
  %v1122 = vunpack.c.l.b16 %v1058
  %v1123 = vunpack.c.l.b16 %v1059
  %v1124 = vunpack.c.l.b16 %v1060
  %v1125 = vunpack.c.l.b16 %v1061
  %v1126 = vunpack.c.l.b16 %v1062
  %v1127 = vunpack.c.l.b16 %v1063
  %v1128 = vunpack.c.l.b16 %v1064
  %v1129 = vunpack.c.l.b16 %v1065
  %v1130 = vunpack.c.l.b16 %v1066
  %v1131 = vunpack.c.l.b16 %v1067
  %v1132 = vunpack.c.l.b16 %v1068
  %v1133 = vunpack.c.l.b16 %v1069
  %v1134 = vunpack.c.l.b16 %v1070
  %v1135 = vunpack.c.l.b16 %v1071
  %v1136 = vunpack.c.l.b16 %v1072
  %v1137 = vunpack.c.l.b16 %v1073
  %v1138 = vunpack.c.l.b16 %v1074
  %v1139 = vunpack.c.l.b16 %v1075
  %v1140 = vunpack.c.l.b16 %v1076
  %v1141 = vunpack.c.l.b16 %v1077
  %v1142 = vunpack.c.l.b16 %v1078
  %v1143 = vpack.c.b16 %v1112, %v1111
  %v1144 = vpack.c.b16 %v1114, %v1113
  %v1145 = vpack.c.b16 %v1116, %v1115
  %v1146 = vpack.c.b16 %v1118, %v1117
  %v1147 = vpack.c.b16 %v1120, %v1119
  %v1148 = vpack.c.b16 %v1122, %v1121
  %v1149 = vpack.c.b16 %v1124, %v1123
  %v1150 = vpack.c.b16 %v1126, %v1125
  %v1151 = vpack.c.b16 %v1128, %v1127
  %v1152 = vpack.c.b16 %v1130, %v1129
  %v1153 = vpack.c.b16 %v1132, %v1131
  %v1154 = vpack.c.b16 %v1134, %v1133
  %v1155 = vpack.c.b16 %v1136, %v1135
  %v1156 = vpack.c.b16 %v1138, %v1137
  %v1157 = vpack.c.b16 %v1140, %v1139
  %v1158 = vpack.c.b16 %v1142, %v1141
  %1175 = vmatprep.subr.bf16.mxu0 0
  %1176 = vmatpush1.bf16.msra.mxu0 %v1143
  %1177 = vmatprep.subr.bf16.mxu0 0
  %1178 = vmatpush1.bf16.msra.mxu0 %v1144
  %1179 = vmatprep.subr.bf16.mxu0 0
  %1180 = vmatpush1.bf16.msra.mxu0 %v1145
  %1181 = vmatprep.subr.bf16.mxu0 0
  %1182 = vmatpush1.bf16.msra.mxu0 %v1146
  %1183 = vmatprep.subr.bf16.mxu0 0
  %1184 = vmatpush1.bf16.msra.mxu0 %v1147
  %1185 = vmatprep.subr.bf16.mxu0 0
  %1186 = vmatpush1.bf16.msra.mxu0 %v1148
  %1187 = vmatprep.subr.bf16.mxu0 0
  %1188 = vmatpush1.bf16.msra.mxu0 %v1149
  %1189 = vmatprep.subr.bf16.mxu0 0
  %1190 = vmatpush1.bf16.msra.mxu0 %v1150
  %1191 = vmatprep.subr.bf16.mxu0 0
  %1192 = vmatpush1.bf16.msra.mxu0 %v1151
  %1193 = vmatprep.subr.bf16.mxu0 0
  %1194 = vmatpush1.bf16.msra.mxu0 %v1152
  %1195 = vmatprep.subr.bf16.mxu0 0
  %1196 = vmatpush1.bf16.msra.mxu0 %v1153
  %1197 = vmatprep.subr.bf16.mxu0 0
  %1198 = vmatpush1.bf16.msra.mxu0 %v1154
  %1199 = vmatprep.subr.bf16.mxu0 0
  %1200 = vmatpush1.bf16.msra.mxu0 %v1155
  %1201 = vmatprep.subr.bf16.mxu0 0
  %1202 = vmatpush1.bf16.msra.mxu0 %v1156
  %1203 = vmatprep.subr.bf16.mxu0 0
  %1204 = vmatpush1.bf16.msra.mxu0 %v1157
  %1205 = vmatprep.subr.bf16.mxu0 0
  %1206 = vmatpush1.bf16.msra.mxu0 %v1158
  %1207 = vmatprep.mubr.bf16.mxu0 %v1044
  %1208 = vmatmul.mubr.bf16.gmra.mrb[0].mxu0 %v1043
  %v1209 = vpop.f32.mrb[0].mxu0
  %v1210 = vadd.f32 0.0, %v1209
  %v1211 = vpop.f32.mrb[0].mxu0
  %v1212 = vpop.f32.mrb[0].mxu0
  %v1213 = vadd.f32 0.0, %v1212
  %v1214 = vpop.f32.mrb[0].mxu0
  %1215 = vmatprep.mubr.bf16.mxu0 %v1046
  %1216 = vmatmul.mubr.bf16.gmra.mrb[0].mxu0 %v1045
  %v1217 = vpop.f32.mrb[0].mxu0
  %v1218 = vadd.f32 0.0, %v1217
  %v1219 = vpop.f32.mrb[0].mxu0
  %v1220 = vpop.f32.mrb[0].mxu0
  %v1221 = vadd.f32 0.0, %v1220
  %v1222 = vpop.f32.mrb[0].mxu0
  %1223 = vdwg.mxu0
  %v1224 = vadd.f32 %v1039, %v1210
  %v1225 = vadd.f32 %v1040, %v1213
  %v1226 = vadd.f32 %v1041, %v1218
  %v1227 = vadd.f32 %v1042, %v1221
  %v1228 = vld [vmem:[%s4] sm:$0x1]
  %v1230 = vlaneseq
  %v1231 = vshrl.u32 %v1230, 7
  %v1232 = vsub.s32 0, %v1231
  %v1233 = vrot.slane %v1228, %v1232
  %v1235 = vadd.f32 %v1224, %v1233
  %v1236 = vadd.f32 %v1225, %v1233
  %v1237 = vadd.f32 %v1226, %v1233
  %v1238 = vadd.f32 %v1227, %v1233
  %v1239 = vmax.f32 %v1235, 0.0
  %v1240 = vmax.f32 %v1236, 0.0
  %v1241 = vmax.f32 %v1237, 0.0
  %v1242 = vmax.f32 %v1238, 0.0
  %v1243 = vpack.c.bf16 %v1239, %v1239
  %v1244 = vld [vmem:[%s5] sm:$0xf]
  %v1245 = vld [vmem:[%s5 + $0x4] sm:$0xf]
  %v1246 = vld [vmem:[%s5 + $0x8] sm:$0xf]
  %v1247 = vld [vmem:[%s5 + $0xc] sm:$0xf]
  %v1248 = vld [vmem:[%s5 + $0x10] sm:$0xf]
  %v1249 = vld [vmem:[%s5 + $0x14] sm:$0xf]
  %v1250 = vld [vmem:[%s5 + $0x18] sm:$0xf]
  %v1251 = vld [vmem:[%s5 + $0x1c] sm:$0xf]
  %v1252 = vld [vmem:[%s5 + $0x20] sm:$0xf]
  %v1253 = vld [vmem:[%s5 + $0x24] sm:$0xf]
  %v1254 = vld [vmem:[%s5 + $0x28] sm:$0xf]
  %v1255 = vld [vmem:[%s5 + $0x2c] sm:$0xf]
  %v1256 = vld [vmem:[%s5 + $0x30] sm:$0xf]
  %v1257 = vld [vmem:[%s5 + $0x34] sm:$0xf]
  %v1258 = vld [vmem:[%s5 + $0x38] sm:$0xf]
  %v1259 = vld [vmem:[%s5 + $0x3c] sm:$0xf]
  %v1260 = vpack.c.bf16 %v1240, %v1240
  %v1261 = vld [vmem:[%s5 + $0x40] sm:$0xf]
  %v1262 = vld [vmem:[%s5 + $0x44] sm:$0xf]
  %v1263 = vld [vmem:[%s5 + $0x48] sm:$0xf]
  %v1264 = vld [vmem:[%s5 + $0x4c] sm:$0xf]
  %v1265 = vld [vmem:[%s5 + $0x50] sm:$0xf]
  %v1266 = vld [vmem:[%s5 + $0x54] sm:$0xf]
  %v1267 = vld [vmem:[%s5 + $0x58] sm:$0xf]
  %v1268 = vld [vmem:[%s5 + $0x5c] sm:$0xf]
  %v1269 = vld [vmem:[%s5 + $0x60] sm:$0xf]
  %v1270 = vld [vmem:[%s5 + $0x64] sm:$0xf]
  %v1271 = vld [vmem:[%s5 + $0x68] sm:$0xf]
  %v1272 = vld [vmem:[%s5 + $0x6c] sm:$0xf]
  %v1273 = vld [vmem:[%s5 + $0x70] sm:$0xf]
  %v1274 = vld [vmem:[%s5 + $0x74] sm:$0xf]
  %v1275 = vld [vmem:[%s5 + $0x78] sm:$0xf]
  %v1276 = vld [vmem:[%s5 + $0x7c] sm:$0xf]
  %v1293 = vunpack.c.l.b16 %v1261
  %v1294 = vunpack.c.l.b16 %v1262
  %v1295 = vunpack.c.l.b16 %v1263
  %v1296 = vunpack.c.l.b16 %v1264
  %v1297 = vunpack.c.l.b16 %v1265
  %v1298 = vunpack.c.l.b16 %v1266
  %v1299 = vunpack.c.l.b16 %v1267
  %v1300 = vunpack.c.l.b16 %v1268
  %v1301 = vunpack.c.l.b16 %v1269
  %v1302 = vunpack.c.l.b16 %v1270
  %v1303 = vunpack.c.l.b16 %v1271
  %v1304 = vunpack.c.l.b16 %v1272
  %v1305 = vunpack.c.l.b16 %v1273
  %v1306 = vunpack.c.l.b16 %v1274
  %v1307 = vunpack.c.l.b16 %v1275
  %v1308 = vunpack.c.l.b16 %v1276
  %v1309 = vpack.c.b16 %v1294, %v1293
  %v1310 = vpack.c.b16 %v1296, %v1295
  %v1311 = vpack.c.b16 %v1298, %v1297
  %v1312 = vpack.c.b16 %v1300, %v1299
  %v1313 = vpack.c.b16 %v1302, %v1301
  %v1314 = vpack.c.b16 %v1304, %v1303
  %v1315 = vpack.c.b16 %v1306, %v1305
  %v1316 = vpack.c.b16 %v1308, %v1307
  %1325 = vmatprep.subr.bf16.mxu0 0
  %1326 = vmatpush1.bf16.msra.mxu0 %v1309
  %1327 = vmatprep.subr.bf16.mxu0 0
  %1328 = vmatpush1.bf16.msra.mxu0 %v1310
  %1329 = vmatprep.subr.bf16.mxu0 0
  %1330 = vmatpush1.bf16.msra.mxu0 %v1311
  %1331 = vmatprep.subr.bf16.mxu0 0
  %1332 = vmatpush1.bf16.msra.mxu0 %v1312
  %1333 = vmatprep.subr.bf16.mxu0 0
  %1334 = vmatpush1.bf16.msra.mxu0 %v1313
  %1335 = vmatprep.subr.bf16.mxu0 0
  %1336 = vmatpush1.bf16.msra.mxu0 %v1314
  %1337 = vmatprep.subr.bf16.mxu0 0
  %1338 = vmatpush1.bf16.msra.mxu0 %v1315
  %1339 = vmatprep.subr.bf16.mxu0 0
  %1340 = vmatpush1.bf16.msra.mxu0 %v1316
  %1341 = vmatprep.subr.bf16.mxu0 0
  %1342 = vmatpush1.bf16.msra.mxu0 0
  %1343 = vmatprep.subr.bf16.mxu0 0
  %1344 = vmatpush1.bf16.msra.mxu0 0
  %1345 = vmatprep.subr.bf16.mxu0 0
  %1346 = vmatpush1.bf16.msra.mxu0 0
  %1347 = vmatprep.subr.bf16.mxu0 0
  %1348 = vmatpush1.bf16.msra.mxu0 0
  %1349 = vmatprep.subr.bf16.mxu0 0
  %1350 = vmatpush1.bf16.msra.mxu0 0
  %1351 = vmatprep.subr.bf16.mxu0 0
  %1352 = vmatpush1.bf16.msra.mxu0 0
  %1353 = vmatprep.subr.bf16.mxu0 0
  %1354 = vmatpush1.bf16.msra.mxu0 0
  %1355 = vmatprep.subr.bf16.mxu0 0
  %1356 = vmatpush1.bf16.msra.mxu0 0
  %1357 = vmatprep.mubr.bf16.mxu0 0
  %1358 = vmatmul.mubr.bf16.gmra.mrb[0].mxu0 %v1260
  %v1359 = vpop.f32.mrb[0].mxu0
  %v1360 = vadd.f32 0.0, %v1359
  %v1361 = vpop.f32.mrb[0].mxu0
  %v1362 = vpop.f32.mrb[0].mxu0
  %v1363 = vpop.f32.mrb[0].mxu0
  %1364 = vdwg.mxu0
  %v1381 = vunpack.c.l.b16 %v1244
  %v1382 = vunpack.c.l.b16 %v1245
  %v1383 = vunpack.c.l.b16 %v1246
  %v1384 = vunpack.c.l.b16 %v1247
  %v1385 = vunpack.c.l.b16 %v1248
  %v1386 = vunpack.c.l.b16 %v1249
  %v1387 = vunpack.c.l.b16 %v1250
  %v1388 = vunpack.c.l.b16 %v1251
  %v1389 = vunpack.c.l.b16 %v1252
  %v1390 = vunpack.c.l.b16 %v1253
  %v1391 = vunpack.c.l.b16 %v1254
  %v1392 = vunpack.c.l.b16 %v1255
  %v1393 = vunpack.c.l.b16 %v1256
  %v1394 = vunpack.c.l.b16 %v1257
  %v1395 = vunpack.c.l.b16 %v1258
  %v1396 = vunpack.c.l.b16 %v1259
  %v1397 = vpack.c.b16 %v1382, %v1381
  %v1398 = vpack.c.b16 %v1384, %v1383
  %v1399 = vpack.c.b16 %v1386, %v1385
  %v1400 = vpack.c.b16 %v1388, %v1387
  %v1401 = vpack.c.b16 %v1390, %v1389
  %v1402 = vpack.c.b16 %v1392, %v1391
  %v1403 = vpack.c.b16 %v1394, %v1393
  %v1404 = vpack.c.b16 %v1396, %v1395
  %1413 = vmatprep.subr.bf16.mxu0 0
  %1414 = vmatpush1.bf16.msra.mxu0 %v1397
  %1415 = vmatprep.subr.bf16.mxu0 0
  %1416 = vmatpush1.bf16.msra.mxu0 %v1398
  %1417 = vmatprep.subr.bf16.mxu0 0
  %1418 = vmatpush1.bf16.msra.mxu0 %v1399
  %1419 = vmatprep.subr.bf16.mxu0 0
  %1420 = vmatpush1.bf16.msra.mxu0 %v1400
  %1421 = vmatprep.subr.bf16.mxu0 0
  %1422 = vmatpush1.bf16.msra.mxu0 %v1401
  %1423 = vmatprep.subr.bf16.mxu0 0
  %1424 = vmatpush1.bf16.msra.mxu0 %v1402
  %1425 = vmatprep.subr.bf16.mxu0 0
  %1426 = vmatpush1.bf16.msra.mxu0 %v1403
  %1427 = vmatprep.subr.bf16.mxu0 0
  %1428 = vmatpush1.bf16.msra.mxu0 %v1404
  %1429 = vmatprep.subr.bf16.mxu0 0
  %1430 = vmatpush1.bf16.msra.mxu0 0
  %1431 = vmatprep.subr.bf16.mxu0 0
  %1432 = vmatpush1.bf16.msra.mxu0 0
  %1433 = vmatprep.subr.bf16.mxu0 0
  %1434 = vmatpush1.bf16.msra.mxu0 0
  %1435 = vmatprep.subr.bf16.mxu0 0
  %1436 = vmatpush1.bf16.msra.mxu0 0
  %1437 = vmatprep.subr.bf16.mxu0 0
  %1438 = vmatpush1.bf16.msra.mxu0 0
  %1439 = vmatprep.subr.bf16.mxu0 0
  %1440 = vmatpush1.bf16.msra.mxu0 0
  %1441 = vmatprep.subr.bf16.mxu0 0
  %1442 = vmatpush1.bf16.msra.mxu0 0
  %1443 = vmatprep.subr.bf16.mxu0 0
  %1444 = vmatpush1.bf16.msra.mxu0 0
  %1445 = vmatprep.mubr.bf16.mxu0 0
  %1446 = vmatmul.mubr.bf16.gmra.mrb[0].mxu0 %v1243
  %v1447 = vpop.f32.mrb[0].mxu0
  %v1448 = vadd.f32 %v1360, %v1447
  %v1449 = vpop.f32.mrb[0].mxu0
  %v1450 = vpop.f32.mrb[0].mxu0
  %v1451 = vpop.f32.mrb[0].mxu0
  %1452 = vdwg.mxu0
  %v1453 = vpack.c.bf16 %v1241, %v1241
  %v1454 = vld [vmem:[%s5 + $0x80] sm:$0xf]
  %v1455 = vld [vmem:[%s5 + $0x84] sm:$0xf]
  %v1456 = vld [vmem:[%s5 + $0x88] sm:$0xf]
  %v1457 = vld [vmem:[%s5 + $0x8c] sm:$0xf]
  %v1458 = vld [vmem:[%s5 + $0x90] sm:$0xf]
  %v1459 = vld [vmem:[%s5 + $0x94] sm:$0xf]
  %v1460 = vld [vmem:[%s5 + $0x98] sm:$0xf]
  %v1461 = vld [vmem:[%s5 + $0x9c] sm:$0xf]
  %v1462 = vld [vmem:[%s5 + $0xa0] sm:$0xf]
  %v1463 = vld [vmem:[%s5 + $0xa4] sm:$0xf]
  %v1464 = vld [vmem:[%s5 + $0xa8] sm:$0xf]
  %v1465 = vld [vmem:[%s5 + $0xac] sm:$0xf]
  %v1466 = vld [vmem:[%s5 + $0xb0] sm:$0xf]
  %v1467 = vld [vmem:[%s5 + $0xb4] sm:$0xf]
  %v1468 = vld [vmem:[%s5 + $0xb8] sm:$0xf]
  %v1469 = vld [vmem:[%s5 + $0xbc] sm:$0xf]
  %v1486 = vunpack.c.l.b16 %v1454
  %v1487 = vunpack.c.l.b16 %v1455
  %v1488 = vunpack.c.l.b16 %v1456
  %v1489 = vunpack.c.l.b16 %v1457
  %v1490 = vunpack.c.l.b16 %v1458
  %v1491 = vunpack.c.l.b16 %v1459
  %v1492 = vunpack.c.l.b16 %v1460
  %v1493 = vunpack.c.l.b16 %v1461
  %v1494 = vunpack.c.l.b16 %v1462
  %v1495 = vunpack.c.l.b16 %v1463
  %v1496 = vunpack.c.l.b16 %v1464
  %v1497 = vunpack.c.l.b16 %v1465
  %v1498 = vunpack.c.l.b16 %v1466
  %v1499 = vunpack.c.l.b16 %v1467
  %v1500 = vunpack.c.l.b16 %v1468
  %v1501 = vunpack.c.l.b16 %v1469
  %v1502 = vpack.c.b16 %v1487, %v1486
  %v1503 = vpack.c.b16 %v1489, %v1488
  %v1504 = vpack.c.b16 %v1491, %v1490
  %v1505 = vpack.c.b16 %v1493, %v1492
  %v1506 = vpack.c.b16 %v1495, %v1494
  %v1507 = vpack.c.b16 %v1497, %v1496
  %v1508 = vpack.c.b16 %v1499, %v1498
  %v1509 = vpack.c.b16 %v1501, %v1500
  %1518 = vmatprep.subr.bf16.mxu0 0
  %1519 = vmatpush1.bf16.msra.mxu0 %v1502
  %1520 = vmatprep.subr.bf16.mxu0 0
  %1521 = vmatpush1.bf16.msra.mxu0 %v1503
  %1522 = vmatprep.subr.bf16.mxu0 0
  %1523 = vmatpush1.bf16.msra.mxu0 %v1504
  %1524 = vmatprep.subr.bf16.mxu0 0
  %1525 = vmatpush1.bf16.msra.mxu0 %v1505
  %1526 = vmatprep.subr.bf16.mxu0 0
  %1527 = vmatpush1.bf16.msra.mxu0 %v1506
  %1528 = vmatprep.subr.bf16.mxu0 0
  %1529 = vmatpush1.bf16.msra.mxu0 %v1507
  %1530 = vmatprep.subr.bf16.mxu0 0
  %1531 = vmatpush1.bf16.msra.mxu0 %v1508
  %1532 = vmatprep.subr.bf16.mxu0 0
  %1533 = vmatpush1.bf16.msra.mxu0 %v1509
  %1534 = vmatprep.subr.bf16.mxu0 0
  %1535 = vmatpush1.bf16.msra.mxu0 0
  %1536 = vmatprep.subr.bf16.mxu0 0
  %1537 = vmatpush1.bf16.msra.mxu0 0
  %1538 = vmatprep.subr.bf16.mxu0 0
  %1539 = vmatpush1.bf16.msra.mxu0 0
  %1540 = vmatprep.subr.bf16.mxu0 0
  %1541 = vmatpush1.bf16.msra.mxu0 0
  %1542 = vmatprep.subr.bf16.mxu0 0
  %1543 = vmatpush1.bf16.msra.mxu0 0
  %1544 = vmatprep.subr.bf16.mxu0 0
  %1545 = vmatpush1.bf16.msra.mxu0 0
  %1546 = vmatprep.subr.bf16.mxu0 0
  %1547 = vmatpush1.bf16.msra.mxu0 0
  %1548 = vmatprep.subr.bf16.mxu0 0
  %1549 = vmatpush1.bf16.msra.mxu0 0
  %1550 = vmatprep.mubr.bf16.mxu0 0
  %1551 = vmatmul.mubr.bf16.gmra.mrb[0].mxu0 %v1453
  %v1552 = vpop.f32.mrb[0].mxu0
  %v1553 = vadd.f32 0.0, %v1552
  %v1554 = vpop.f32.mrb[0].mxu0
  %v1555 = vpop.f32.mrb[0].mxu0
  %v1556 = vpop.f32.mrb[0].mxu0
  %1557 = vdwg.mxu0
  %v1558 = vadd.f32 %v1448, %v1553
  %v1559 = vpack.c.bf16 %v1242, %v1242
  %v1560 = vld [vmem:[%s5 + $0xc0] sm:$0xf]
  %v1561 = vld [vmem:[%s5 + $0xc4] sm:$0xf]
  %v1562 = vld [vmem:[%s5 + $0xc8] sm:$0xf]
  %v1563 = vld [vmem:[%s5 + $0xcc] sm:$0xf]
  %v1564 = vld [vmem:[%s5 + $0xd0] sm:$0xf]
  %v1565 = vld [vmem:[%s5 + $0xd4] sm:$0xf]
  %v1566 = vld [vmem:[%s5 + $0xd8] sm:$0xf]
  %v1567 = vld [vmem:[%s5 + $0xdc] sm:$0xf]
  %v1568 = vld [vmem:[%s5 + $0xe0] sm:$0xf]
  %v1569 = vld [vmem:[%s5 + $0xe4] sm:$0xf]
  %v1570 = vld [vmem:[%s5 + $0xe8] sm:$0xf]
  %v1571 = vld [vmem:[%s5 + $0xec] sm:$0xf]
  %v1572 = vld [vmem:[%s5 + $0xf0] sm:$0xf]
  %v1573 = vld [vmem:[%s5 + $0xf4] sm:$0xf]
  %v1574 = vld [vmem:[%s5 + $0xf8] sm:$0xf]
  %v1575 = vld [vmem:[%s5 + $0xfc] sm:$0xf]
  %v1592 = vunpack.c.l.b16 %v1560
  %v1593 = vunpack.c.l.b16 %v1561
  %v1594 = vunpack.c.l.b16 %v1562
  %v1595 = vunpack.c.l.b16 %v1563
  %v1596 = vunpack.c.l.b16 %v1564
  %v1597 = vunpack.c.l.b16 %v1565
  %v1598 = vunpack.c.l.b16 %v1566
  %v1599 = vunpack.c.l.b16 %v1567
  %v1600 = vunpack.c.l.b16 %v1568
  %v1601 = vunpack.c.l.b16 %v1569
  %v1602 = vunpack.c.l.b16 %v1570
  %v1603 = vunpack.c.l.b16 %v1571
  %v1604 = vunpack.c.l.b16 %v1572
  %v1605 = vunpack.c.l.b16 %v1573
  %v1606 = vunpack.c.l.b16 %v1574
  %v1607 = vunpack.c.l.b16 %v1575
  %v1608 = vpack.c.b16 %v1593, %v1592
  %v1609 = vpack.c.b16 %v1595, %v1594
  %v1610 = vpack.c.b16 %v1597, %v1596
  %v1611 = vpack.c.b16 %v1599, %v1598
  %v1612 = vpack.c.b16 %v1601, %v1600
  %v1613 = vpack.c.b16 %v1603, %v1602
  %v1614 = vpack.c.b16 %v1605, %v1604
  %v1615 = vpack.c.b16 %v1607, %v1606
  %1624 = vmatprep.subr.bf16.mxu0 0
  %1625 = vmatpush1.bf16.msra.mxu0 %v1608
  %1626 = vmatprep.subr.bf16.mxu0 0
  %1627 = vmatpush1.bf16.msra.mxu0 %v1609
  %1628 = vmatprep.subr.bf16.mxu0 0
  %1629 = vmatpush1.bf16.msra.mxu0 %v1610
  %1630 = vmatprep.subr.bf16.mxu0 0
  %1631 = vmatpush1.bf16.msra.mxu0 %v1611
  %1632 = vmatprep.subr.bf16.mxu0 0
  %1633 = vmatpush1.bf16.msra.mxu0 %v1612
  %1634 = vmatprep.subr.bf16.mxu0 0
  %1635 = vmatpush1.bf16.msra.mxu0 %v1613
  %1636 = vmatprep.subr.bf16.mxu0 0
  %1637 = vmatpush1.bf16.msra.mxu0 %v1614
  %1638 = vmatprep.subr.bf16.mxu0 0
  %1639 = vmatpush1.bf16.msra.mxu0 %v1615
  %1640 = vmatprep.subr.bf16.mxu0 0
  %1641 = vmatpush1.bf16.msra.mxu0 0
  %1642 = vmatprep.subr.bf16.mxu0 0
  %1643 = vmatpush1.bf16.msra.mxu0 0
  %1644 = vmatprep.subr.bf16.mxu0 0
  %1645 = vmatpush1.bf16.msra.mxu0 0
  %1646 = vmatprep.subr.bf16.mxu0 0
  %1647 = vmatpush1.bf16.msra.mxu0 0
  %1648 = vmatprep.subr.bf16.mxu0 0
  %1649 = vmatpush1.bf16.msra.mxu0 0
  %1650 = vmatprep.subr.bf16.mxu0 0
  %1651 = vmatpush1.bf16.msra.mxu0 0
  %1652 = vmatprep.subr.bf16.mxu0 0
  %1653 = vmatpush1.bf16.msra.mxu0 0
  %1654 = vmatprep.subr.bf16.mxu0 0
  %1655 = vmatpush1.bf16.msra.mxu0 0
  %1656 = vmatprep.mubr.bf16.mxu0 0
  %1657 = vmatmul.mubr.bf16.gmra.mrb[0].mxu0 %v1559
  %v1658 = vpop.f32.mrb[0].mxu0
  %v1659 = vadd.f32 0.0, %v1658
  %v1660 = vpop.f32.mrb[0].mxu0
  %v1661 = vpop.f32.mrb[0].mxu0
  %v1662 = vpop.f32.mrb[0].mxu0
  %1663 = vdwg.mxu0
  %v1664 = vadd.f32 %v1558, %v1659
  %v1665 = vld [vmem:[%s6] sm:$0x1]
  %v1667 = vlaneseq
  %v1668 = vshrl.u32 %v1667, 7
  %v1669 = vsub.s32 0, %v1668
  %v1670 = vrot.slane %v1665, %v1669
  %v1672 = vadd.f32 %v1664, %v1670
  %v1673 = vmax.f32 %v1672, 0.0
  %v1674 = vpack.c.bf16 %v1673, %v1673
  %v1675 = vld [vmem:[%s7] sm:$0xff]
  %v1676 = vld [vmem:[%s7 + $0x8] sm:$0xff]
  %v1677 = vld [vmem:[%s7 + $0x10] sm:$0xff]
  %v1678 = vld [vmem:[%s7 + $0x18] sm:$0xff]
  %v1679 = vld [vmem:[%s7 + $0x20] sm:$0xff]
  %v1680 = vld [vmem:[%s7 + $0x28] sm:$0xff]
  %v1681 = vld [vmem:[%s7 + $0x30] sm:$0xff]
  %v1682 = vld [vmem:[%s7 + $0x38] sm:$0xff]
  %v1683 = vld [vmem:[%s7 + $0x40] sm:$0xff]
  %v1684 = vld [vmem:[%s7 + $0x48] sm:$0xff]
  %v1685 = vld [vmem:[%s7 + $0x50] sm:$0xff]
  %v1686 = vld [vmem:[%s7 + $0x58] sm:$0xff]
  %v1687 = vld [vmem:[%s7 + $0x60] sm:$0xff]
  %v1688 = vld [vmem:[%s7 + $0x68] sm:$0xff]
  %v1689 = vld [vmem:[%s7 + $0x70] sm:$0xff]
  %v1690 = vld [vmem:[%s7 + $0x78] sm:$0xff]
  %v1691 = vld [vmem:[%s7 + $0x80] sm:$0xff]
  %v1692 = vld [vmem:[%s7 + $0x88] sm:$0xff]
  %v1693 = vld [vmem:[%s7 + $0x90] sm:$0xff]
  %v1694 = vld [vmem:[%s7 + $0x98] sm:$0xff]
  %v1695 = vld [vmem:[%s7 + $0xa0] sm:$0xff]
  %v1696 = vld [vmem:[%s7 + $0xa8] sm:$0xff]
  %v1697 = vld [vmem:[%s7 + $0xb0] sm:$0xff]
  %v1698 = vld [vmem:[%s7 + $0xb8] sm:$0xff]
  %v1699 = vld [vmem:[%s7 + $0xc0] sm:$0xff]
  %v1700 = vld [vmem:[%s7 + $0xc8] sm:$0xff]
  %v1701 = vld [vmem:[%s7 + $0xd0] sm:$0xff]
  %v1702 = vld [vmem:[%s7 + $0xd8] sm:$0xff]
  %v1703 = vld [vmem:[%s7 + $0xe0] sm:$0xff]
  %v1704 = vld [vmem:[%s7 + $0xe8] sm:$0xff]
  %v1705 = vld [vmem:[%s7 + $0xf0] sm:$0xff]
  %v1706 = vld [vmem:[%s7 + $0xf8] sm:$0xff]
  %v1707 = vld [vmem:[%s8] sm:$0xff]
  %v1709 = vlaneseq
  %v1710 = vshrl.u32 %v1709, 7
  %v1711 = vsub.s32 0, %v1710
  %v1712 = vrot.slane %v1707, %v1711
  %v1713 = vlaneseq
  %v1714 = vshrl.u32 %v1713, 7
  %v1715 = vsub.s32 1, %v1714
  %v1716 = vrot.slane %v1707, %v1715
  %v1717 = vlaneseq
  %v1718 = vshrl.u32 %v1717, 7
  %v1719 = vsub.s32 2, %v1718
  %v1720 = vrot.slane %v1707, %v1719
  %v1721 = vlaneseq
  %v1722 = vshrl.u32 %v1721, 7
  %v1723 = vsub.s32 3, %v1722
  %v1724 = vrot.slane %v1707, %v1723
  %v1725 = vlaneseq
  %v1726 = vshrl.u32 %v1725, 7
  %v1727 = vsub.s32 4, %v1726
  %v1728 = vrot.slane %v1707, %v1727
  %v1729 = vlaneseq
  %v1730 = vshrl.u32 %v1729, 7
  %v1731 = vsub.s32 5, %v1730
  %v1732 = vrot.slane %v1707, %v1731
  %v1733 = vlaneseq
  %v1734 = vshrl.u32 %v1733, 7
  %v1735 = vsub.s32 6, %v1734
  %v1736 = vrot.slane %v1707, %v1735
  %v1737 = vlaneseq
  %v1738 = vshrl.u32 %v1737, 7
  %v1739 = vsub.s32 7, %v1738
  %v1740 = vrot.slane %v1707, %v1739
  %v1781 = vunpack.c.l.b16 %v1675
  %v1782 = vunpack.c.h.b16 %v1675
  %v1783 = vunpack.c.l.b16 %v1676
  %v1784 = vunpack.c.h.b16 %v1676
  %v1785 = vunpack.c.l.b16 %v1677
  %v1786 = vunpack.c.h.b16 %v1677
  %v1787 = vunpack.c.l.b16 %v1678
  %v1788 = vunpack.c.h.b16 %v1678
  %v1789 = vunpack.c.l.b16 %v1679
  %v1790 = vunpack.c.h.b16 %v1679
  %v1791 = vunpack.c.l.b16 %v1680
  %v1792 = vunpack.c.h.b16 %v1680
  %v1793 = vunpack.c.l.b16 %v1681
  %v1794 = vunpack.c.h.b16 %v1681
  %v1795 = vunpack.c.l.b16 %v1682
  %v1796 = vunpack.c.h.b16 %v1682
  %v1797 = vunpack.c.l.b16 %v1683
  %v1798 = vunpack.c.h.b16 %v1683
  %v1799 = vunpack.c.l.b16 %v1684
  %v1800 = vunpack.c.h.b16 %v1684
  %v1801 = vunpack.c.l.b16 %v1685
  %v1802 = vunpack.c.h.b16 %v1685
  %v1803 = vunpack.c.l.b16 %v1686
  %v1804 = vunpack.c.h.b16 %v1686
  %v1805 = vunpack.c.l.b16 %v1687
  %v1806 = vunpack.c.h.b16 %v1687
  %v1807 = vunpack.c.l.b16 %v1688
  %v1808 = vunpack.c.h.b16 %v1688
  %v1809 = vunpack.c.l.b16 %v1689
  %v1810 = vunpack.c.h.b16 %v1689
  %v1811 = vunpack.c.l.b16 %v1690
  %v1812 = vunpack.c.h.b16 %v1690
  %v1813 = vunpack.c.l.b16 %v1691
  %v1814 = vunpack.c.h.b16 %v1691
  %v1815 = vunpack.c.l.b16 %v1692
  %v1816 = vunpack.c.h.b16 %v1692
  %v1817 = vunpack.c.l.b16 %v1693
  %v1818 = vunpack.c.h.b16 %v1693
  %v1819 = vunpack.c.l.b16 %v1694
  %v1820 = vunpack.c.h.b16 %v1694
  %v1821 = vunpack.c.l.b16 %v1695
  %v1822 = vunpack.c.h.b16 %v1695
  %v1823 = vunpack.c.l.b16 %v1696
  %v1824 = vunpack.c.h.b16 %v1696
  %v1825 = vunpack.c.l.b16 %v1697
  %v1826 = vunpack.c.h.b16 %v1697
  %v1827 = vunpack.c.l.b16 %v1698
  %v1828 = vunpack.c.h.b16 %v1698
  %v1829 = vunpack.c.l.b16 %v1699
  %v1830 = vunpack.c.h.b16 %v1699
  %v1831 = vunpack.c.l.b16 %v1700
  %v1832 = vunpack.c.h.b16 %v1700
  %v1833 = vunpack.c.l.b16 %v1701
  %v1834 = vunpack.c.h.b16 %v1701
  %v1835 = vunpack.c.l.b16 %v1702
  %v1836 = vunpack.c.h.b16 %v1702
  %v1837 = vunpack.c.l.b16 %v1703
  %v1838 = vunpack.c.h.b16 %v1703
  %v1839 = vunpack.c.l.b16 %v1704
  %v1840 = vunpack.c.h.b16 %v1704
  %v1841 = vunpack.c.l.b16 %v1705
  %v1842 = vunpack.c.h.b16 %v1705
  %v1843 = vunpack.c.l.b16 %v1706
  %v1844 = vunpack.c.h.b16 %v1706
  %v1845 = vpack.c.b16 %v1789, %v1781
  %v1846 = vpack.c.b16 %v1790, %v1782
  %v1847 = vpack.c.b16 %v1791, %v1783
  %v1848 = vpack.c.b16 %v1792, %v1784
  %v1849 = vpack.c.b16 %v1793, %v1785
  %v1850 = vpack.c.b16 %v1794, %v1786
  %v1851 = vpack.c.b16 %v1795, %v1787
  %v1852 = vpack.c.b16 %v1796, %v1788
  %v1853 = vpack.c.b16 %v1805, %v1797
  %v1854 = vpack.c.b16 %v1806, %v1798
  %v1855 = vpack.c.b16 %v1807, %v1799
  %v1856 = vpack.c.b16 %v1808, %v1800
  %v1857 = vpack.c.b16 %v1809, %v1801
  %v1858 = vpack.c.b16 %v1810, %v1802
  %v1859 = vpack.c.b16 %v1811, %v1803
  %v1860 = vpack.c.b16 %v1812, %v1804
  %v1861 = vpack.c.b16 %v1821, %v1813
  %v1862 = vpack.c.b16 %v1822, %v1814
  %v1863 = vpack.c.b16 %v1823, %v1815
  %v1864 = vpack.c.b16 %v1824, %v1816
  %v1865 = vpack.c.b16 %v1825, %v1817
  %v1866 = vpack.c.b16 %v1826, %v1818
  %v1867 = vpack.c.b16 %v1827, %v1819
  %v1868 = vpack.c.b16 %v1828, %v1820
  %v1869 = vpack.c.b16 %v1837, %v1829
  %v1870 = vpack.c.b16 %v1838, %v1830
  %v1871 = vpack.c.b16 %v1839, %v1831
  %v1872 = vpack.c.b16 %v1840, %v1832
  %v1873 = vpack.c.b16 %v1841, %v1833
  %v1874 = vpack.c.b16 %v1842, %v1834
  %v1875 = vpack.c.b16 %v1843, %v1835
  %v1876 = vpack.c.b16 %v1844, %v1836
  %vm1909 = vcmask 523264
  %v1911 = vsel %vm1909, %v1674, 0
  %1913 = vmatprep.subr.bf16.mxu0 %v1846
  %1914 = vmatpush1.bf16.msra.mxu0 %v1845
  %1915 = vmatprep.subr.bf16.mxu0 %v1854
  %1916 = vmatpush1.bf16.msra.mxu0 %v1853
  %1917 = vmatprep.subr.bf16.mxu0 %v1862
  %1918 = vmatpush1.bf16.msra.mxu0 %v1861
  %1919 = vmatprep.subr.bf16.mxu0 %v1870
  %1920 = vmatpush1.bf16.msra.mxu0 %v1869
  %1921 = vmatprep.subr.bf16.mxu0 0
  %1922 = vmatpush1.bf16.msra.mxu0 0
  %1923 = vmatprep.subr.bf16.mxu0 0
  %1924 = vmatpush1.bf16.msra.mxu0 0
  %1925 = vmatprep.subr.bf16.mxu0 0
  %1926 = vmatpush1.bf16.msra.mxu0 0
  %1927 = vmatprep.subr.bf16.mxu0 0
  %1928 = vmatpush1.bf16.msra.mxu0 0
  %1929 = vmatprep.subr.bf16.mxu0 0
  %1930 = vmatpush1.bf16.msra.mxu0 0
  %1931 = vmatprep.subr.bf16.mxu0 0
  %1932 = vmatpush1.bf16.msra.mxu0 0
  %1933 = vmatprep.subr.bf16.mxu0 0
  %1934 = vmatpush1.bf16.msra.mxu0 0
  %1935 = vmatprep.subr.bf16.mxu0 0
  %1936 = vmatpush1.bf16.msra.mxu0 0
  %1937 = vmatprep.subr.bf16.mxu0 0
  %1938 = vmatpush1.bf16.msra.mxu0 0
  %1939 = vmatprep.subr.bf16.mxu0 0
  %1940 = vmatpush1.bf16.msra.mxu0 0
  %1941 = vmatprep.subr.bf16.mxu0 0
  %1942 = vmatpush1.bf16.msra.mxu0 0
  %1943 = vmatprep.subr.bf16.mxu0 0
  %1944 = vmatpush1.bf16.msra.mxu0 0
  %1945 = vmatprep.mubr.bf16.mxu0 0
  %1946 = vmatmul.mubr.bf16.gmra.mrb[0].mxu0 %v1911
  %v1947 = vpop.f32.mrb[0].mxu0
  %v1948 = vadd.f32 %v1712, %v1947
  %v1949 = vpop.f32.mrb[0].mxu0
  %v1950 = vadd.f32 %v1716, %v1949
  %v1951 = vpop.f32.mrb[0].mxu0
  %v1952 = vpop.f32.mrb[0].mxu0
  %1953 = vdwg.mxu0
  %1954 = vmatprep.subr.bf16.mxu0 %v1848
  %1955 = vmatpush1.bf16.msra.mxu0 %v1847
  %1956 = vmatprep.subr.bf16.mxu0 %v1856
  %1957 = vmatpush1.bf16.msra.mxu0 %v1855
  %1958 = vmatprep.subr.bf16.mxu0 %v1864
  %1959 = vmatpush1.bf16.msra.mxu0 %v1863
  %1960 = vmatprep.subr.bf16.mxu0 %v1872
  %1961 = vmatpush1.bf16.msra.mxu0 %v1871
  %1962 = vmatprep.subr.bf16.mxu0 0
  %1963 = vmatpush1.bf16.msra.mxu0 0
  %1964 = vmatprep.subr.bf16.mxu0 0
  %1965 = vmatpush1.bf16.msra.mxu0 0
  %1966 = vmatprep.subr.bf16.mxu0 0
  %1967 = vmatpush1.bf16.msra.mxu0 0
  %1968 = vmatprep.subr.bf16.mxu0 0
  %1969 = vmatpush1.bf16.msra.mxu0 0
  %1970 = vmatprep.subr.bf16.mxu0 0
  %1971 = vmatpush1.bf16.msra.mxu0 0
  %1972 = vmatprep.subr.bf16.mxu0 0
  %1973 = vmatpush1.bf16.msra.mxu0 0
  %1974 = vmatprep.subr.bf16.mxu0 0
  %1975 = vmatpush1.bf16.msra.mxu0 0
  %1976 = vmatprep.subr.bf16.mxu0 0
  %1977 = vmatpush1.bf16.msra.mxu0 0
  %1978 = vmatprep.subr.bf16.mxu0 0
  %1979 = vmatpush1.bf16.msra.mxu0 0
  %1980 = vmatprep.subr.bf16.mxu0 0
  %1981 = vmatpush1.bf16.msra.mxu0 0
  %1982 = vmatprep.subr.bf16.mxu0 0
  %1983 = vmatpush1.bf16.msra.mxu0 0
  %1984 = vmatprep.subr.bf16.mxu0 0
  %1985 = vmatpush1.bf16.msra.mxu0 0
  %1986 = vmatprep.mubr.bf16.mxu0 0
  %1987 = vmatmul.mubr.bf16.gmra.mrb[0].mxu0 %v1911
  %v1988 = vpop.f32.mrb[0].mxu0
  %v1989 = vadd.f32 %v1720, %v1988
  %v1990 = vpop.f32.mrb[0].mxu0
  %v1991 = vadd.f32 %v1724, %v1990
  %v1992 = vpop.f32.mrb[0].mxu0
  %v1993 = vpop.f32.mrb[0].mxu0
  %1994 = vdwg.mxu0
  %1995 = vmatprep.subr.bf16.mxu0 %v1850
  %1996 = vmatpush1.bf16.msra.mxu0 %v1849
  %1997 = vmatprep.subr.bf16.mxu0 %v1858
  %1998 = vmatpush1.bf16.msra.mxu0 %v1857
  %1999 = vmatprep.subr.bf16.mxu0 %v1866
  %2000 = vmatpush1.bf16.msra.mxu0 %v1865
  %2001 = vmatprep.subr.bf16.mxu0 %v1874
  %2002 = vmatpush1.bf16.msra.mxu0 %v1873
  %2003 = vmatprep.subr.bf16.mxu0 0
  %2004 = vmatpush1.bf16.msra.mxu0 0
  %2005 = vmatprep.subr.bf16.mxu0 0
  %2006 = vmatpush1.bf16.msra.mxu0 0
  %2007 = vmatprep.subr.bf16.mxu0 0
  %2008 = vmatpush1.bf16.msra.mxu0 0
  %2009 = vmatprep.subr.bf16.mxu0 0
  %2010 = vmatpush1.bf16.msra.mxu0 0
  %2011 = vmatprep.subr.bf16.mxu0 0
  %2012 = vmatpush1.bf16.msra.mxu0 0
  %2013 = vmatprep.subr.bf16.mxu0 0
  %2014 = vmatpush1.bf16.msra.mxu0 0
  %2015 = vmatprep.subr.bf16.mxu0 0
  %2016 = vmatpush1.bf16.msra.mxu0 0
  %2017 = vmatprep.subr.bf16.mxu0 0
  %2018 = vmatpush1.bf16.msra.mxu0 0
  %2019 = vmatprep.subr.bf16.mxu0 0
  %2020 = vmatpush1.bf16.msra.mxu0 0
  %2021 = vmatprep.subr.bf16.mxu0 0
  %2022 = vmatpush1.bf16.msra.mxu0 0
  %2023 = vmatprep.subr.bf16.mxu0 0
  %2024 = vmatpush1.bf16.msra.mxu0 0
  %2025 = vmatprep.subr.bf16.mxu0 0
  %2026 = vmatpush1.bf16.msra.mxu0 0
  %2027 = vmatprep.mubr.bf16.mxu0 0
  %2028 = vmatmul.mubr.bf16.gmra.mrb[0].mxu0 %v1911
  %v2029 = vpop.f32.mrb[0].mxu0
  %v2030 = vadd.f32 %v1728, %v2029
  %v2031 = vpop.f32.mrb[0].mxu0
  %v2032 = vadd.f32 %v1732, %v2031
  %v2033 = vpop.f32.mrb[0].mxu0
  %v2034 = vpop.f32.mrb[0].mxu0
  %2035 = vdwg.mxu0
  %2036 = vmatprep.subr.bf16.mxu0 %v1852
  %2037 = vmatpush1.bf16.msra.mxu0 %v1851
  %2038 = vmatprep.subr.bf16.mxu0 %v1860
  %2039 = vmatpush1.bf16.msra.mxu0 %v1859
  %2040 = vmatprep.subr.bf16.mxu0 %v1868
  %2041 = vmatpush1.bf16.msra.mxu0 %v1867
  %2042 = vmatprep.subr.bf16.mxu0 %v1876
  %2043 = vmatpush1.bf16.msra.mxu0 %v1875
  %2044 = vmatprep.subr.bf16.mxu0 0
  %2045 = vmatpush1.bf16.msra.mxu0 0
  %2046 = vmatprep.subr.bf16.mxu0 0
  %2047 = vmatpush1.bf16.msra.mxu0 0
  %2048 = vmatprep.subr.bf16.mxu0 0
  %2049 = vmatpush1.bf16.msra.mxu0 0
  %2050 = vmatprep.subr.bf16.mxu0 0
  %2051 = vmatpush1.bf16.msra.mxu0 0
  %2052 = vmatprep.subr.bf16.mxu0 0
  %2053 = vmatpush1.bf16.msra.mxu0 0
  %2054 = vmatprep.subr.bf16.mxu0 0
  %2055 = vmatpush1.bf16.msra.mxu0 0
  %2056 = vmatprep.subr.bf16.mxu0 0
  %2057 = vmatpush1.bf16.msra.mxu0 0
  %2058 = vmatprep.subr.bf16.mxu0 0
  %2059 = vmatpush1.bf16.msra.mxu0 0
  %2060 = vmatprep.subr.bf16.mxu0 0
  %2061 = vmatpush1.bf16.msra.mxu0 0
  %2062 = vmatprep.subr.bf16.mxu0 0
  %2063 = vmatpush1.bf16.msra.mxu0 0
  %2064 = vmatprep.subr.bf16.mxu0 0
  %2065 = vmatpush1.bf16.msra.mxu0 0
  %2066 = vmatprep.subr.bf16.mxu0 0
  %2067 = vmatpush1.bf16.msra.mxu0 0
  %2068 = vmatprep.mubr.bf16.mxu0 0
  %2069 = vmatmul.mubr.bf16.gmra.mrb[0].mxu0 %v1911
  %v2070 = vpop.f32.mrb[0].mxu0
  %v2071 = vadd.f32 %v1736, %v2070
  %v2072 = vpop.f32.mrb[0].mxu0
  %v2073 = vadd.f32 %v1740, %v2072
  %v2074 = vpop.f32.mrb[0].mxu0
  %v2075 = vpop.f32.mrb[0].mxu0
  %2076 = vdwg.mxu0
  %v2077 = vmax.f32 %v1948, 0.0
  %v2078 = vmax.f32 %v1950, 0.0
  %v2079 = vmax.f32 %v1989, 0.0
  %v2080 = vmax.f32 %v1991, 0.0
  %v2081 = vmax.f32 %v2030, 0.0
  %v2082 = vmax.f32 %v2032, 0.0
  %v2083 = vmax.f32 %v2071, 0.0
  %v2084 = vmax.f32 %v2073, 0.0
  %v2085 = vpack.c.bf16 %v2077, %v2077
  %v2086 = vpack.c.bf16 %v2078, %v2078
  %v2087 = vpack.c.bf16 %v2079, %v2079
  %v2088 = vpack.c.bf16 %v2080, %v2080
  %v2089 = vpack.c.bf16 %v2081, %v2081
  %v2090 = vpack.c.bf16 %v2082, %v2082
  %v2091 = vpack.c.bf16 %v2083, %v2083
  %v2092 = vpack.c.bf16 %v2084, %v2084
  %v2093 = vld [vmem:[%s9] sm:$0xff]
  %v2094 = vld [vmem:[%s9 + $0x8] sm:$0xff]
  %v2095 = vld [vmem:[%s9 + $0x10] sm:$0xff]
  %v2096 = vld [vmem:[%s9 + $0x18] sm:$0xff]
  %v2097 = vld [vmem:[%s9 + $0x20] sm:$0xff]
  %v2098 = vld [vmem:[%s9 + $0x28] sm:$0xff]
  %v2099 = vld [vmem:[%s9 + $0x30] sm:$0xff]
  %v2100 = vld [vmem:[%s9 + $0x38] sm:$0xff]
  %v2101 = vld [vmem:[%s9 + $0x40] sm:$0xff]
  %v2102 = vld [vmem:[%s9 + $0x48] sm:$0xff]
  %v2103 = vld [vmem:[%s9 + $0x50] sm:$0xff]
  %v2104 = vld [vmem:[%s9 + $0x58] sm:$0xff]
  %v2105 = vld [vmem:[%s9 + $0x60] sm:$0xff]
  %v2106 = vld [vmem:[%s9 + $0x68] sm:$0xff]
  %v2107 = vld [vmem:[%s9 + $0x70] sm:$0xff]
  %v2108 = vld [vmem:[%s9 + $0x78] sm:$0xff]
  %v2109 = vld [vmem:[%s9 + $0x80] sm:$0xff]
  %v2110 = vld [vmem:[%s9 + $0x88] sm:$0xff]
  %v2111 = vld [vmem:[%s9 + $0x90] sm:$0xff]
  %v2112 = vld [vmem:[%s9 + $0x98] sm:$0xff]
  %v2113 = vld [vmem:[%s9 + $0xa0] sm:$0xff]
  %v2114 = vld [vmem:[%s9 + $0xa8] sm:$0xff]
  %v2115 = vld [vmem:[%s9 + $0xb0] sm:$0xff]
  %v2116 = vld [vmem:[%s9 + $0xb8] sm:$0xff]
  %v2117 = vld [vmem:[%s9 + $0xc0] sm:$0xff]
  %v2118 = vld [vmem:[%s9 + $0xc8] sm:$0xff]
  %v2119 = vld [vmem:[%s9 + $0xd0] sm:$0xff]
  %v2120 = vld [vmem:[%s9 + $0xd8] sm:$0xff]
  %v2121 = vld [vmem:[%s9 + $0xe0] sm:$0xff]
  %v2122 = vld [vmem:[%s9 + $0xe8] sm:$0xff]
  %v2123 = vld [vmem:[%s9 + $0xf0] sm:$0xff]
  %v2124 = vld [vmem:[%s9 + $0xf8] sm:$0xff]
  %v2125 = vld [vmem:[%s9 + $0x100] sm:$0xff]
  %v2126 = vld [vmem:[%s9 + $0x108] sm:$0xff]
  %v2127 = vld [vmem:[%s9 + $0x110] sm:$0xff]
  %v2128 = vld [vmem:[%s9 + $0x118] sm:$0xff]
  %v2129 = vld [vmem:[%s9 + $0x120] sm:$0xff]
  %v2130 = vld [vmem:[%s9 + $0x128] sm:$0xff]
  %v2131 = vld [vmem:[%s9 + $0x130] sm:$0xff]
  %v2132 = vld [vmem:[%s9 + $0x138] sm:$0xff]
  %v2133 = vld [vmem:[%s9 + $0x140] sm:$0xff]
  %v2134 = vld [vmem:[%s9 + $0x148] sm:$0xff]
  %v2135 = vld [vmem:[%s9 + $0x150] sm:$0xff]
  %v2136 = vld [vmem:[%s9 + $0x158] sm:$0xff]
  %v2137 = vld [vmem:[%s9 + $0x160] sm:$0xff]
  %v2138 = vld [vmem:[%s9 + $0x168] sm:$0xff]
  %v2139 = vld [vmem:[%s9 + $0x170] sm:$0xff]
  %v2140 = vld [vmem:[%s9 + $0x178] sm:$0xff]
  %v2141 = vld [vmem:[%s9 + $0x180] sm:$0xff]
  %v2142 = vld [vmem:[%s9 + $0x188] sm:$0xff]
  %v2143 = vld [vmem:[%s9 + $0x190] sm:$0xff]
  %v2144 = vld [vmem:[%s9 + $0x198] sm:$0xff]
  %v2145 = vld [vmem:[%s9 + $0x1a0] sm:$0xff]
  %v2146 = vld [vmem:[%s9 + $0x1a8] sm:$0xff]
  %v2147 = vld [vmem:[%s9 + $0x1b0] sm:$0xff]
  %v2148 = vld [vmem:[%s9 + $0x1b8] sm:$0xff]
  %v2149 = vld [vmem:[%s9 + $0x1c0] sm:$0xff]
  %v2150 = vld [vmem:[%s9 + $0x1c8] sm:$0xff]
  %v2151 = vld [vmem:[%s9 + $0x1d0] sm:$0xff]
  %v2152 = vld [vmem:[%s9 + $0x1d8] sm:$0xff]
  %v2153 = vld [vmem:[%s9 + $0x1e0] sm:$0xff]
  %v2154 = vld [vmem:[%s9 + $0x1e8] sm:$0xff]
  %v2155 = vld [vmem:[%s9 + $0x1f0] sm:$0xff]
  %v2156 = vld [vmem:[%s9 + $0x1f8] sm:$0xff]
  %v2157 = vld [vmem:[%s9 + $0x200] sm:$0xff]
  %v2158 = vld [vmem:[%s9 + $0x208] sm:$0xff]
  %v2159 = vld [vmem:[%s9 + $0x210] sm:$0xff]
  %v2160 = vld [vmem:[%s9 + $0x218] sm:$0xff]
  %v2161 = vld [vmem:[%s9 + $0x220] sm:$0xff]
  %v2162 = vld [vmem:[%s9 + $0x228] sm:$0xff]
  %v2163 = vld [vmem:[%s9 + $0x230] sm:$0xff]
  %v2164 = vld [vmem:[%s9 + $0x238] sm:$0xff]
  %v2165 = vld [vmem:[%s9 + $0x240] sm:$0xff]
  %v2166 = vld [vmem:[%s9 + $0x248] sm:$0xff]
  %v2167 = vld [vmem:[%s9 + $0x250] sm:$0xff]
  %v2168 = vld [vmem:[%s9 + $0x258] sm:$0xff]
  %v2169 = vld [vmem:[%s9 + $0x260] sm:$0xff]
  %v2170 = vld [vmem:[%s9 + $0x268] sm:$0xff]
  %v2171 = vld [vmem:[%s9 + $0x270] sm:$0xff]
  %v2172 = vld [vmem:[%s9 + $0x278] sm:$0xff]
  %v2173 = vld [vmem:[%s9 + $0x280] sm:$0xff]
  %v2174 = vld [vmem:[%s9 + $0x288] sm:$0xff]
  %v2175 = vld [vmem:[%s9 + $0x290] sm:$0xff]
  %v2176 = vld [vmem:[%s9 + $0x298] sm:$0xff]
  %v2177 = vld [vmem:[%s9 + $0x2a0] sm:$0xff]
  %v2178 = vld [vmem:[%s9 + $0x2a8] sm:$0xff]
  %v2179 = vld [vmem:[%s9 + $0x2b0] sm:$0xff]
  %v2180 = vld [vmem:[%s9 + $0x2b8] sm:$0xff]
  %v2181 = vld [vmem:[%s9 + $0x2c0] sm:$0xff]
  %v2182 = vld [vmem:[%s9 + $0x2c8] sm:$0xff]
  %v2183 = vld [vmem:[%s9 + $0x2d0] sm:$0xff]
  %v2184 = vld [vmem:[%s9 + $0x2d8] sm:$0xff]
  %v2185 = vld [vmem:[%s9 + $0x2e0] sm:$0xff]
  %v2186 = vld [vmem:[%s9 + $0x2e8] sm:$0xff]
  %v2187 = vld [vmem:[%s9 + $0x2f0] sm:$0xff]
  %v2188 = vld [vmem:[%s9 + $0x2f8] sm:$0xff]
  %v2189 = vld [vmem:[%s9 + $0x300] sm:$0xff]
  %v2190 = vld [vmem:[%s9 + $0x308] sm:$0xff]
  %v2191 = vld [vmem:[%s9 + $0x310] sm:$0xff]
  %v2192 = vld [vmem:[%s9 + $0x318] sm:$0xff]
  %v2193 = vld [vmem:[%s9 + $0x320] sm:$0xff]
  %v2194 = vld [vmem:[%s9 + $0x328] sm:$0xff]
  %v2195 = vld [vmem:[%s9 + $0x330] sm:$0xff]
  %v2196 = vld [vmem:[%s9 + $0x338] sm:$0xff]
  %v2197 = vld [vmem:[%s9 + $0x340] sm:$0xff]
  %v2198 = vld [vmem:[%s9 + $0x348] sm:$0xff]
  %v2199 = vld [vmem:[%s9 + $0x350] sm:$0xff]
  %v2200 = vld [vmem:[%s9 + $0x358] sm:$0xff]
  %v2201 = vld [vmem:[%s9 + $0x360] sm:$0xff]
  %v2202 = vld [vmem:[%s9 + $0x368] sm:$0xff]
  %v2203 = vld [vmem:[%s9 + $0x370] sm:$0xff]
  %v2204 = vld [vmem:[%s9 + $0x378] sm:$0xff]
  %v2205 = vld [vmem:[%s9 + $0x380] sm:$0xff]
  %v2206 = vld [vmem:[%s9 + $0x388] sm:$0xff]
  %v2207 = vld [vmem:[%s9 + $0x390] sm:$0xff]
  %v2208 = vld [vmem:[%s9 + $0x398] sm:$0xff]
  %v2209 = vld [vmem:[%s9 + $0x3a0] sm:$0xff]
  %v2210 = vld [vmem:[%s9 + $0x3a8] sm:$0xff]
  %v2211 = vld [vmem:[%s9 + $0x3b0] sm:$0xff]
  %v2212 = vld [vmem:[%s9 + $0x3b8] sm:$0xff]
  %v2213 = vld [vmem:[%s9 + $0x3c0] sm:$0xff]
  %v2214 = vld [vmem:[%s9 + $0x3c8] sm:$0xff]
  %v2215 = vld [vmem:[%s9 + $0x3d0] sm:$0xff]
  %v2216 = vld [vmem:[%s9 + $0x3d8] sm:$0xff]
  %v2217 = vld [vmem:[%s9 + $0x3e0] sm:$0xff]
  %v2218 = vld [vmem:[%s9 + $0x3e8] sm:$0xff]
  %v2219 = vld [vmem:[%s9 + $0x3f0] sm:$0xff]
  %v2220 = vld [vmem:[%s9 + $0x3f8] sm:$0xff]
  %v2221 = vld [vmem:[%s9 + $0x400] sm:$0xff]
  %v2222 = vld [vmem:[%s9 + $0x408] sm:$0xff]
  %v2223 = vld [vmem:[%s9 + $0x410] sm:$0xff]
  %v2224 = vld [vmem:[%s9 + $0x418] sm:$0xff]
  %v2225 = vld [vmem:[%s9 + $0x420] sm:$0xff]
  %v2226 = vld [vmem:[%s9 + $0x428] sm:$0xff]
  %v2227 = vld [vmem:[%s9 + $0x430] sm:$0xff]
  %v2228 = vld [vmem:[%s9 + $0x438] sm:$0xff]
  %v2229 = vld [vmem:[%s9 + $0x440] sm:$0xff]
  %v2230 = vld [vmem:[%s9 + $0x448] sm:$0xff]
  %v2231 = vld [vmem:[%s9 + $0x450] sm:$0xff]
  %v2232 = vld [vmem:[%s9 + $0x458] sm:$0xff]
  %v2233 = vld [vmem:[%s9 + $0x460] sm:$0xff]
  %v2234 = vld [vmem:[%s9 + $0x468] sm:$0xff]
  %v2235 = vld [vmem:[%s9 + $0x470] sm:$0xff]
  %v2236 = vld [vmem:[%s9 + $0x478] sm:$0xff]
  %v2237 = vld [vmem:[%s9 + $0x480] sm:$0xff]
  %v2238 = vld [vmem:[%s9 + $0x488] sm:$0xff]
  %v2239 = vld [vmem:[%s9 + $0x490] sm:$0xff]
  %v2240 = vld [vmem:[%s9 + $0x498] sm:$0xff]
  %v2241 = vld [vmem:[%s9 + $0x4a0] sm:$0xff]
  %v2242 = vld [vmem:[%s9 + $0x4a8] sm:$0xff]
  %v2243 = vld [vmem:[%s9 + $0x4b0] sm:$0xff]
  %v2244 = vld [vmem:[%s9 + $0x4b8] sm:$0xff]
  %v2245 = vld [vmem:[%s9 + $0x4c0] sm:$0xff]
  %v2246 = vld [vmem:[%s9 + $0x4c8] sm:$0xff]
  %v2247 = vld [vmem:[%s9 + $0x4d0] sm:$0xff]
  %v2248 = vld [vmem:[%s9 + $0x4d8] sm:$0xff]
  %v2249 = vld [vmem:[%s9 + $0x4e0] sm:$0xff]
  %v2250 = vld [vmem:[%s9 + $0x4e8] sm:$0xff]
  %v2251 = vld [vmem:[%s9 + $0x4f0] sm:$0xff]
  %v2252 = vld [vmem:[%s9 + $0x4f8] sm:$0xff]
  %v2253 = vld [vmem:[%s9 + $0x500] sm:$0xff]
  %v2254 = vld [vmem:[%s9 + $0x508] sm:$0xff]
  %v2255 = vld [vmem:[%s9 + $0x510] sm:$0xff]
  %v2256 = vld [vmem:[%s9 + $0x518] sm:$0xff]
  %v2257 = vld [vmem:[%s9 + $0x520] sm:$0xff]
  %v2258 = vld [vmem:[%s9 + $0x528] sm:$0xff]
  %v2259 = vld [vmem:[%s9 + $0x530] sm:$0xff]
  %v2260 = vld [vmem:[%s9 + $0x538] sm:$0xff]
  %v2261 = vld [vmem:[%s9 + $0x540] sm:$0xff]
  %v2262 = vld [vmem:[%s9 + $0x548] sm:$0xff]
  %v2263 = vld [vmem:[%s9 + $0x550] sm:$0xff]
  %v2264 = vld [vmem:[%s9 + $0x558] sm:$0xff]
  %v2265 = vld [vmem:[%s9 + $0x560] sm:$0xff]
  %v2266 = vld [vmem:[%s9 + $0x568] sm:$0xff]
  %v2267 = vld [vmem:[%s9 + $0x570] sm:$0xff]
  %v2268 = vld [vmem:[%s9 + $0x578] sm:$0xff]
  %v2269 = vld [vmem:[%s9 + $0x580] sm:$0xff]
  %v2270 = vld [vmem:[%s9 + $0x588] sm:$0xff]
  %v2271 = vld [vmem:[%s9 + $0x590] sm:$0xff]
  %v2272 = vld [vmem:[%s9 + $0x598] sm:$0xff]
  %v2273 = vld [vmem:[%s9 + $0x5a0] sm:$0xff]
  %v2274 = vld [vmem:[%s9 + $0x5a8] sm:$0xff]
  %v2275 = vld [vmem:[%s9 + $0x5b0] sm:$0xff]
  %v2276 = vld [vmem:[%s9 + $0x5b8] sm:$0xff]
  %v2277 = vld [vmem:[%s9 + $0x5c0] sm:$0xff]
  %v2278 = vld [vmem:[%s9 + $0x5c8] sm:$0xff]
  %v2279 = vld [vmem:[%s9 + $0x5d0] sm:$0xff]
  %v2280 = vld [vmem:[%s9 + $0x5d8] sm:$0xff]
  %v2281 = vld [vmem:[%s9 + $0x5e0] sm:$0xff]
  %v2282 = vld [vmem:[%s9 + $0x5e8] sm:$0xff]
  %v2283 = vld [vmem:[%s9 + $0x5f0] sm:$0xff]
  %v2284 = vld [vmem:[%s9 + $0x5f8] sm:$0xff]
  %v2285 = vld [vmem:[%s9 + $0x600] sm:$0xff]
  %v2286 = vld [vmem:[%s9 + $0x608] sm:$0xff]
  %v2287 = vld [vmem:[%s9 + $0x610] sm:$0xff]
  %v2288 = vld [vmem:[%s9 + $0x618] sm:$0xff]
  %v2289 = vld [vmem:[%s9 + $0x620] sm:$0xff]
  %v2290 = vld [vmem:[%s9 + $0x628] sm:$0xff]
  %v2291 = vld [vmem:[%s9 + $0x630] sm:$0xff]
  %v2292 = vld [vmem:[%s9 + $0x638] sm:$0xff]
  %v2293 = vld [vmem:[%s9 + $0x640] sm:$0xff]
  %v2294 = vld [vmem:[%s9 + $0x648] sm:$0xff]
  %v2295 = vld [vmem:[%s9 + $0x650] sm:$0xff]
  %v2296 = vld [vmem:[%s9 + $0x658] sm:$0xff]
  %v2297 = vld [vmem:[%s9 + $0x660] sm:$0xff]
  %v2298 = vld [vmem:[%s9 + $0x668] sm:$0xff]
  %v2299 = vld [vmem:[%s9 + $0x670] sm:$0xff]
  %v2300 = vld [vmem:[%s9 + $0x678] sm:$0xff]
  %v2301 = vld [vmem:[%s9 + $0x680] sm:$0xff]
  %v2302 = vld [vmem:[%s9 + $0x688] sm:$0xff]
  %v2303 = vld [vmem:[%s9 + $0x690] sm:$0xff]
  %v2304 = vld [vmem:[%s9 + $0x698] sm:$0xff]
  %v2305 = vld [vmem:[%s9 + $0x6a0] sm:$0xff]
  %v2306 = vld [vmem:[%s9 + $0x6a8] sm:$0xff]
  %v2307 = vld [vmem:[%s9 + $0x6b0] sm:$0xff]
  %v2308 = vld [vmem:[%s9 + $0x6b8] sm:$0xff]
  %v2309 = vld [vmem:[%s9 + $0x6c0] sm:$0xff]
  %v2310 = vld [vmem:[%s9 + $0x6c8] sm:$0xff]
  %v2311 = vld [vmem:[%s9 + $0x6d0] sm:$0xff]
  %v2312 = vld [vmem:[%s9 + $0x6d8] sm:$0xff]
  %v2313 = vld [vmem:[%s9 + $0x6e0] sm:$0xff]
  %v2314 = vld [vmem:[%s9 + $0x6e8] sm:$0xff]
  %v2315 = vld [vmem:[%s9 + $0x6f0] sm:$0xff]
  %v2316 = vld [vmem:[%s9 + $0x6f8] sm:$0xff]
  %v2317 = vld [vmem:[%s9 + $0x700] sm:$0xff]
  %v2318 = vld [vmem:[%s9 + $0x708] sm:$0xff]
  %v2319 = vld [vmem:[%s9 + $0x710] sm:$0xff]
  %v2320 = vld [vmem:[%s9 + $0x718] sm:$0xff]
  %v2321 = vld [vmem:[%s9 + $0x720] sm:$0xff]
  %v2322 = vld [vmem:[%s9 + $0x728] sm:$0xff]
  %v2323 = vld [vmem:[%s9 + $0x730] sm:$0xff]
  %v2324 = vld [vmem:[%s9 + $0x738] sm:$0xff]
  %v2325 = vld [vmem:[%s9 + $0x740] sm:$0xff]
  %v2326 = vld [vmem:[%s9 + $0x748] sm:$0xff]
  %v2327 = vld [vmem:[%s9 + $0x750] sm:$0xff]
  %v2328 = vld [vmem:[%s9 + $0x758] sm:$0xff]
  %v2329 = vld [vmem:[%s9 + $0x760] sm:$0xff]
  %v2330 = vld [vmem:[%s9 + $0x768] sm:$0xff]
  %v2331 = vld [vmem:[%s9 + $0x770] sm:$0xff]
  %v2332 = vld [vmem:[%s9 + $0x778] sm:$0xff]
  %v2333 = vld [vmem:[%s9 + $0x780] sm:$0xff]
  %v2334 = vld [vmem:[%s9 + $0x788] sm:$0xff]
  %v2335 = vld [vmem:[%s9 + $0x790] sm:$0xff]
  %v2336 = vld [vmem:[%s9 + $0x798] sm:$0xff]
  %v2337 = vld [vmem:[%s9 + $0x7a0] sm:$0xff]
  %v2338 = vld [vmem:[%s9 + $0x7a8] sm:$0xff]
  %v2339 = vld [vmem:[%s9 + $0x7b0] sm:$0xff]
  %v2340 = vld [vmem:[%s9 + $0x7b8] sm:$0xff]
  %v2341 = vld [vmem:[%s9 + $0x7c0] sm:$0xff]
  %v2342 = vld [vmem:[%s9 + $0x7c8] sm:$0xff]
  %v2343 = vld [vmem:[%s9 + $0x7d0] sm:$0xff]
  %v2344 = vld [vmem:[%s9 + $0x7d8] sm:$0xff]
  %v2345 = vld [vmem:[%s9 + $0x7e0] sm:$0xff]
  %v2346 = vld [vmem:[%s9 + $0x7e8] sm:$0xff]
  %v2347 = vld [vmem:[%s9 + $0x7f0] sm:$0xff]
  %v2348 = vld [vmem:[%s9 + $0x7f8] sm:$0xff]
  %v2349 = vld [vmem:[%s10] sm:$0xf]
  %v2351 = vlaneseq
  %v2352 = vshrl.u32 %v2351, 7
  %v2353 = vsub.s32 0, %v2352
  %v2354 = vrot.slane %v2349, %v2353
  %v2355 = vlaneseq
  %v2356 = vshrl.u32 %v2355, 7
  %v2357 = vsub.s32 1, %v2356
  %v2358 = vrot.slane %v2349, %v2357
  %v2359 = vlaneseq
  %v2360 = vshrl.u32 %v2359, 7
  %v2361 = vsub.s32 2, %v2360
  %v2362 = vrot.slane %v2349, %v2361
  %v2363 = vlaneseq
  %v2364 = vshrl.u32 %v2363, 7
  %v2365 = vsub.s32 3, %v2364
  %v2366 = vrot.slane %v2349, %v2365
  %v2627 = vunpack.c.l.b16 %v2093
  %v2628 = vunpack.c.h.b16 %v2093
  %v2629 = vunpack.c.l.b16 %v2094
  %v2630 = vunpack.c.h.b16 %v2094
  %v2631 = vunpack.c.l.b16 %v2095
  %v2632 = vunpack.c.h.b16 %v2095
  %v2633 = vunpack.c.l.b16 %v2096
  %v2634 = vunpack.c.h.b16 %v2096
  %v2635 = vunpack.c.l.b16 %v2097
  %v2636 = vunpack.c.h.b16 %v2097
  %v2637 = vunpack.c.l.b16 %v2098
  %v2638 = vunpack.c.h.b16 %v2098
  %v2639 = vunpack.c.l.b16 %v2099
  %v2640 = vunpack.c.h.b16 %v2099
  %v2641 = vunpack.c.l.b16 %v2100
  %v2642 = vunpack.c.h.b16 %v2100
  %v2643 = vunpack.c.l.b16 %v2101
  %v2644 = vunpack.c.h.b16 %v2101
  %v2645 = vunpack.c.l.b16 %v2102
  %v2646 = vunpack.c.h.b16 %v2102
  %v2647 = vunpack.c.l.b16 %v2103
  %v2648 = vunpack.c.h.b16 %v2103
  %v2649 = vunpack.c.l.b16 %v2104
  %v2650 = vunpack.c.h.b16 %v2104
  %v2651 = vunpack.c.l.b16 %v2105
  %v2652 = vunpack.c.h.b16 %v2105
  %v2653 = vunpack.c.l.b16 %v2106
  %v2654 = vunpack.c.h.b16 %v2106
  %v2655 = vunpack.c.l.b16 %v2107
  %v2656 = vunpack.c.h.b16 %v2107
  %v2657 = vunpack.c.l.b16 %v2108
  %v2658 = vunpack.c.h.b16 %v2108
  %v2659 = vunpack.c.l.b16 %v2109
  %v2660 = vunpack.c.h.b16 %v2109
  %v2661 = vunpack.c.l.b16 %v2110
  %v2662 = vunpack.c.h.b16 %v2110
  %v2663 = vunpack.c.l.b16 %v2111
  %v2664 = vunpack.c.h.b16 %v2111
  %v2665 = vunpack.c.l.b16 %v2112
  %v2666 = vunpack.c.h.b16 %v2112
  %v2667 = vunpack.c.l.b16 %v2113
  %v2668 = vunpack.c.h.b16 %v2113
  %v2669 = vunpack.c.l.b16 %v2114
  %v2670 = vunpack.c.h.b16 %v2114
  %v2671 = vunpack.c.l.b16 %v2115
  %v2672 = vunpack.c.h.b16 %v2115
  %v2673 = vunpack.c.l.b16 %v2116
  %v2674 = vunpack.c.h.b16 %v2116
  %v2675 = vunpack.c.l.b16 %v2117
  %v2676 = vunpack.c.h.b16 %v2117
  %v2677 = vunpack.c.l.b16 %v2118
  %v2678 = vunpack.c.h.b16 %v2118
  %v2679 = vunpack.c.l.b16 %v2119
  %v2680 = vunpack.c.h.b16 %v2119
  %v2681 = vunpack.c.l.b16 %v2120
  %v2682 = vunpack.c.h.b16 %v2120
  %v2683 = vunpack.c.l.b16 %v2121
  %v2684 = vunpack.c.h.b16 %v2121
  %v2685 = vunpack.c.l.b16 %v2122
  %v2686 = vunpack.c.h.b16 %v2122
  %v2687 = vunpack.c.l.b16 %v2123
  %v2688 = vunpack.c.h.b16 %v2123
  %v2689 = vunpack.c.l.b16 %v2124
  %v2690 = vunpack.c.h.b16 %v2124
  %v2691 = vunpack.c.l.b16 %v2125
  %v2692 = vunpack.c.h.b16 %v2125
  %v2693 = vunpack.c.l.b16 %v2126
  %v2694 = vunpack.c.h.b16 %v2126
  %v2695 = vunpack.c.l.b16 %v2127
  %v2696 = vunpack.c.h.b16 %v2127
  %v2697 = vunpack.c.l.b16 %v2128
  %v2698 = vunpack.c.h.b16 %v2128
  %v2699 = vunpack.c.l.b16 %v2129
  %v2700 = vunpack.c.h.b16 %v2129
  %v2701 = vunpack.c.l.b16 %v2130
  %v2702 = vunpack.c.h.b16 %v2130
  %v2703 = vunpack.c.l.b16 %v2131
  %v2704 = vunpack.c.h.b16 %v2131
  %v2705 = vunpack.c.l.b16 %v2132
  %v2706 = vunpack.c.h.b16 %v2132
  %v2707 = vunpack.c.l.b16 %v2133
  %v2708 = vunpack.c.h.b16 %v2133
  %v2709 = vunpack.c.l.b16 %v2134
  %v2710 = vunpack.c.h.b16 %v2134
  %v2711 = vunpack.c.l.b16 %v2135
  %v2712 = vunpack.c.h.b16 %v2135
  %v2713 = vunpack.c.l.b16 %v2136
  %v2714 = vunpack.c.h.b16 %v2136
  %v2715 = vunpack.c.l.b16 %v2137
  %v2716 = vunpack.c.h.b16 %v2137
  %v2717 = vunpack.c.l.b16 %v2138
  %v2718 = vunpack.c.h.b16 %v2138
  %v2719 = vunpack.c.l.b16 %v2139
  %v2720 = vunpack.c.h.b16 %v2139
  %v2721 = vunpack.c.l.b16 %v2140
  %v2722 = vunpack.c.h.b16 %v2140
  %v2723 = vunpack.c.l.b16 %v2141
  %v2724 = vunpack.c.h.b16 %v2141
  %v2725 = vunpack.c.l.b16 %v2142
  %v2726 = vunpack.c.h.b16 %v2142
  %v2727 = vunpack.c.l.b16 %v2143
  %v2728 = vunpack.c.h.b16 %v2143
  %v2729 = vunpack.c.l.b16 %v2144
  %v2730 = vunpack.c.h.b16 %v2144
  %v2731 = vunpack.c.l.b16 %v2145
  %v2732 = vunpack.c.h.b16 %v2145
  %v2733 = vunpack.c.l.b16 %v2146
  %v2734 = vunpack.c.h.b16 %v2146
  %v2735 = vunpack.c.l.b16 %v2147
  %v2736 = vunpack.c.h.b16 %v2147
  %v2737 = vunpack.c.l.b16 %v2148
  %v2738 = vunpack.c.h.b16 %v2148
  %v2739 = vunpack.c.l.b16 %v2149
  %v2740 = vunpack.c.h.b16 %v2149
  %v2741 = vunpack.c.l.b16 %v2150
  %v2742 = vunpack.c.h.b16 %v2150
  %v2743 = vunpack.c.l.b16 %v2151
  %v2744 = vunpack.c.h.b16 %v2151
  %v2745 = vunpack.c.l.b16 %v2152
  %v2746 = vunpack.c.h.b16 %v2152
  %v2747 = vunpack.c.l.b16 %v2153
  %v2748 = vunpack.c.h.b16 %v2153
  %v2749 = vunpack.c.l.b16 %v2154
  %v2750 = vunpack.c.h.b16 %v2154
  %v2751 = vunpack.c.l.b16 %v2155
  %v2752 = vunpack.c.h.b16 %v2155
  %v2753 = vunpack.c.l.b16 %v2156
  %v2754 = vunpack.c.h.b16 %v2156
  %v2755 = vunpack.c.l.b16 %v2157
  %v2756 = vunpack.c.h.b16 %v2157
  %v2757 = vunpack.c.l.b16 %v2158
  %v2758 = vunpack.c.h.b16 %v2158
  %v2759 = vunpack.c.l.b16 %v2159
  %v2760 = vunpack.c.h.b16 %v2159
  %v2761 = vunpack.c.l.b16 %v2160
  %v2762 = vunpack.c.h.b16 %v2160
  %v2763 = vunpack.c.l.b16 %v2161
  %v2764 = vunpack.c.h.b16 %v2161
  %v2765 = vunpack.c.l.b16 %v2162
  %v2766 = vunpack.c.h.b16 %v2162
  %v2767 = vunpack.c.l.b16 %v2163
  %v2768 = vunpack.c.h.b16 %v2163
  %v2769 = vunpack.c.l.b16 %v2164
  %v2770 = vunpack.c.h.b16 %v2164
  %v2771 = vunpack.c.l.b16 %v2165
  %v2772 = vunpack.c.h.b16 %v2165
  %v2773 = vunpack.c.l.b16 %v2166
  %v2774 = vunpack.c.h.b16 %v2166
  %v2775 = vunpack.c.l.b16 %v2167
  %v2776 = vunpack.c.h.b16 %v2167
  %v2777 = vunpack.c.l.b16 %v2168
  %v2778 = vunpack.c.h.b16 %v2168
  %v2779 = vunpack.c.l.b16 %v2169
  %v2780 = vunpack.c.h.b16 %v2169
  %v2781 = vunpack.c.l.b16 %v2170
  %v2782 = vunpack.c.h.b16 %v2170
  %v2783 = vunpack.c.l.b16 %v2171
  %v2784 = vunpack.c.h.b16 %v2171
  %v2785 = vunpack.c.l.b16 %v2172
  %v2786 = vunpack.c.h.b16 %v2172
  %v2787 = vunpack.c.l.b16 %v2173
  %v2788 = vunpack.c.h.b16 %v2173
  %v2789 = vunpack.c.l.b16 %v2174
  %v2790 = vunpack.c.h.b16 %v2174
  %v2791 = vunpack.c.l.b16 %v2175
  %v2792 = vunpack.c.h.b16 %v2175
  %v2793 = vunpack.c.l.b16 %v2176
  %v2794 = vunpack.c.h.b16 %v2176
  %v2795 = vunpack.c.l.b16 %v2177
  %v2796 = vunpack.c.h.b16 %v2177
  %v2797 = vunpack.c.l.b16 %v2178
  %v2798 = vunpack.c.h.b16 %v2178
  %v2799 = vunpack.c.l.b16 %v2179
  %v2800 = vunpack.c.h.b16 %v2179
  %v2801 = vunpack.c.l.b16 %v2180
  %v2802 = vunpack.c.h.b16 %v2180
  %v2803 = vunpack.c.l.b16 %v2181
  %v2804 = vunpack.c.h.b16 %v2181
  %v2805 = vunpack.c.l.b16 %v2182
  %v2806 = vunpack.c.h.b16 %v2182
  %v2807 = vunpack.c.l.b16 %v2183
  %v2808 = vunpack.c.h.b16 %v2183
  %v2809 = vunpack.c.l.b16 %v2184
  %v2810 = vunpack.c.h.b16 %v2184
  %v2811 = vunpack.c.l.b16 %v2185
  %v2812 = vunpack.c.h.b16 %v2185
  %v2813 = vunpack.c.l.b16 %v2186
  %v2814 = vunpack.c.h.b16 %v2186
  %v2815 = vunpack.c.l.b16 %v2187
  %v2816 = vunpack.c.h.b16 %v2187
  %v2817 = vunpack.c.l.b16 %v2188
  %v2818 = vunpack.c.h.b16 %v2188
  %v2819 = vunpack.c.l.b16 %v2189
  %v2820 = vunpack.c.h.b16 %v2189
  %v2821 = vunpack.c.l.b16 %v2190
  %v2822 = vunpack.c.h.b16 %v2190
  %v2823 = vunpack.c.l.b16 %v2191
  %v2824 = vunpack.c.h.b16 %v2191
  %v2825 = vunpack.c.l.b16 %v2192
  %v2826 = vunpack.c.h.b16 %v2192
  %v2827 = vunpack.c.l.b16 %v2193
  %v2828 = vunpack.c.h.b16 %v2193
  %v2829 = vunpack.c.l.b16 %v2194
  %v2830 = vunpack.c.h.b16 %v2194
  %v2831 = vunpack.c.l.b16 %v2195
  %v2832 = vunpack.c.h.b16 %v2195
  %v2833 = vunpack.c.l.b16 %v2196
  %v2834 = vunpack.c.h.b16 %v2196
  %v2835 = vunpack.c.l.b16 %v2197
  %v2836 = vunpack.c.h.b16 %v2197
  %v2837 = vunpack.c.l.b16 %v2198
  %v2838 = vunpack.c.h.b16 %v2198
  %v2839 = vunpack.c.l.b16 %v2199
  %v2840 = vunpack.c.h.b16 %v2199
  %v2841 = vunpack.c.l.b16 %v2200
  %v2842 = vunpack.c.h.b16 %v2200
  %v2843 = vunpack.c.l.b16 %v2201
  %v2844 = vunpack.c.h.b16 %v2201
  %v2845 = vunpack.c.l.b16 %v2202
  %v2846 = vunpack.c.h.b16 %v2202
  %v2847 = vunpack.c.l.b16 %v2203
  %v2848 = vunpack.c.h.b16 %v2203
  %v2849 = vunpack.c.l.b16 %v2204
  %v2850 = vunpack.c.h.b16 %v2204
  %v2851 = vunpack.c.l.b16 %v2205
  %v2852 = vunpack.c.h.b16 %v2205
  %v2853 = vunpack.c.l.b16 %v2206
  %v2854 = vunpack.c.h.b16 %v2206
  %v2855 = vunpack.c.l.b16 %v2207
  %v2856 = vunpack.c.h.b16 %v2207
  %v2857 = vunpack.c.l.b16 %v2208
  %v2858 = vunpack.c.h.b16 %v2208
  %v2859 = vunpack.c.l.b16 %v2209
  %v2860 = vunpack.c.h.b16 %v2209
  %v2861 = vunpack.c.l.b16 %v2210
  %v2862 = vunpack.c.h.b16 %v2210
  %v2863 = vunpack.c.l.b16 %v2211
  %v2864 = vunpack.c.h.b16 %v2211
  %v2865 = vunpack.c.l.b16 %v2212
  %v2866 = vunpack.c.h.b16 %v2212
  %v2867 = vunpack.c.l.b16 %v2213
  %v2868 = vunpack.c.h.b16 %v2213
  %v2869 = vunpack.c.l.b16 %v2214
  %v2870 = vunpack.c.h.b16 %v2214
  %v2871 = vunpack.c.l.b16 %v2215
  %v2872 = vunpack.c.h.b16 %v2215
  %v2873 = vunpack.c.l.b16 %v2216
  %v2874 = vunpack.c.h.b16 %v2216
  %v2875 = vunpack.c.l.b16 %v2217
  %v2876 = vunpack.c.h.b16 %v2217
  %v2877 = vunpack.c.l.b16 %v2218
  %v2878 = vunpack.c.h.b16 %v2218
  %v2879 = vunpack.c.l.b16 %v2219
  %v2880 = vunpack.c.h.b16 %v2219
  %v2881 = vunpack.c.l.b16 %v2220
  %v2882 = vunpack.c.h.b16 %v2220
  %v2883 = vunpack.c.l.b16 %v2221
  %v2884 = vunpack.c.h.b16 %v2221
  %v2885 = vunpack.c.l.b16 %v2222
  %v2886 = vunpack.c.h.b16 %v2222
  %v2887 = vunpack.c.l.b16 %v2223
  %v2888 = vunpack.c.h.b16 %v2223
  %v2889 = vunpack.c.l.b16 %v2224
  %v2890 = vunpack.c.h.b16 %v2224
  %v2891 = vunpack.c.l.b16 %v2225
  %v2892 = vunpack.c.h.b16 %v2225
  %v2893 = vunpack.c.l.b16 %v2226
  %v2894 = vunpack.c.h.b16 %v2226
  %v2895 = vunpack.c.l.b16 %v2227
  %v2896 = vunpack.c.h.b16 %v2227
  %v2897 = vunpack.c.l.b16 %v2228
  %v2898 = vunpack.c.h.b16 %v2228
  %v2899 = vunpack.c.l.b16 %v2229
  %v2900 = vunpack.c.h.b16 %v2229
  %v2901 = vunpack.c.l.b16 %v2230
  %v2902 = vunpack.c.h.b16 %v2230
  %v2903 = vunpack.c.l.b16 %v2231
  %v2904 = vunpack.c.h.b16 %v2231
  %v2905 = vunpack.c.l.b16 %v2232
  %v2906 = vunpack.c.h.b16 %v2232
  %v2907 = vunpack.c.l.b16 %v2233
  %v2908 = vunpack.c.h.b16 %v2233
  %v2909 = vunpack.c.l.b16 %v2234
  %v2910 = vunpack.c.h.b16 %v2234
  %v2911 = vunpack.c.l.b16 %v2235
  %v2912 = vunpack.c.h.b16 %v2235
  %v2913 = vunpack.c.l.b16 %v2236
  %v2914 = vunpack.c.h.b16 %v2236
  %v2915 = vunpack.c.l.b16 %v2237
  %v2916 = vunpack.c.h.b16 %v2237
  %v2917 = vunpack.c.l.b16 %v2238
  %v2918 = vunpack.c.h.b16 %v2238
  %v2919 = vunpack.c.l.b16 %v2239
  %v2920 = vunpack.c.h.b16 %v2239
  %v2921 = vunpack.c.l.b16 %v2240
  %v2922 = vunpack.c.h.b16 %v2240
  %v2923 = vunpack.c.l.b16 %v2241
  %v2924 = vunpack.c.h.b16 %v2241
  %v2925 = vunpack.c.l.b16 %v2242
  %v2926 = vunpack.c.h.b16 %v2242
  %v2927 = vunpack.c.l.b16 %v2243
  %v2928 = vunpack.c.h.b16 %v2243
  %v2929 = vunpack.c.l.b16 %v2244
  %v2930 = vunpack.c.h.b16 %v2244
  %v2931 = vunpack.c.l.b16 %v2245
  %v2932 = vunpack.c.h.b16 %v2245
  %v2933 = vunpack.c.l.b16 %v2246
  %v2934 = vunpack.c.h.b16 %v2246
  %v2935 = vunpack.c.l.b16 %v2247
  %v2936 = vunpack.c.h.b16 %v2247
  %v2937 = vunpack.c.l.b16 %v2248
  %v2938 = vunpack.c.h.b16 %v2248
  %v2939 = vunpack.c.l.b16 %v2249
  %v2940 = vunpack.c.h.b16 %v2249
  %v2941 = vunpack.c.l.b16 %v2250
  %v2942 = vunpack.c.h.b16 %v2250
  %v2943 = vunpack.c.l.b16 %v2251
  %v2944 = vunpack.c.h.b16 %v2251
  %v2945 = vunpack.c.l.b16 %v2252
  %v2946 = vunpack.c.h.b16 %v2252
  %v2947 = vunpack.c.l.b16 %v2253
  %v2948 = vunpack.c.h.b16 %v2253
  %v2949 = vunpack.c.l.b16 %v2254
  %v2950 = vunpack.c.h.b16 %v2254
  %v2951 = vunpack.c.l.b16 %v2255
  %v2952 = vunpack.c.h.b16 %v2255
  %v2953 = vunpack.c.l.b16 %v2256
  %v2954 = vunpack.c.h.b16 %v2256
  %v2955 = vunpack.c.l.b16 %v2257
  %v2956 = vunpack.c.h.b16 %v2257
  %v2957 = vunpack.c.l.b16 %v2258
  %v2958 = vunpack.c.h.b16 %v2258
  %v2959 = vunpack.c.l.b16 %v2259
  %v2960 = vunpack.c.h.b16 %v2259
  %v2961 = vunpack.c.l.b16 %v2260
  %v2962 = vunpack.c.h.b16 %v2260
  %v2963 = vunpack.c.l.b16 %v2261
  %v2964 = vunpack.c.h.b16 %v2261
  %v2965 = vunpack.c.l.b16 %v2262
  %v2966 = vunpack.c.h.b16 %v2262
  %v2967 = vunpack.c.l.b16 %v2263
  %v2968 = vunpack.c.h.b16 %v2263
  %v2969 = vunpack.c.l.b16 %v2264
  %v2970 = vunpack.c.h.b16 %v2264
  %v2971 = vunpack.c.l.b16 %v2265
  %v2972 = vunpack.c.h.b16 %v2265
  %v2973 = vunpack.c.l.b16 %v2266
  %v2974 = vunpack.c.h.b16 %v2266
  %v2975 = vunpack.c.l.b16 %v2267
  %v2976 = vunpack.c.h.b16 %v2267
  %v2977 = vunpack.c.l.b16 %v2268
  %v2978 = vunpack.c.h.b16 %v2268
  %v2979 = vunpack.c.l.b16 %v2269
  %v2980 = vunpack.c.h.b16 %v2269
  %v2981 = vunpack.c.l.b16 %v2270
  %v2982 = vunpack.c.h.b16 %v2270
  %v2983 = vunpack.c.l.b16 %v2271
  %v2984 = vunpack.c.h.b16 %v2271
  %v2985 = vunpack.c.l.b16 %v2272
  %v2986 = vunpack.c.h.b16 %v2272
  %v2987 = vunpack.c.l.b16 %v2273
  %v2988 = vunpack.c.h.b16 %v2273
  %v2989 = vunpack.c.l.b16 %v2274
  %v2990 = vunpack.c.h.b16 %v2274
  %v2991 = vunpack.c.l.b16 %v2275
  %v2992 = vunpack.c.h.b16 %v2275
  %v2993 = vunpack.c.l.b16 %v2276
  %v2994 = vunpack.c.h.b16 %v2276
  %v2995 = vunpack.c.l.b16 %v2277
  %v2996 = vunpack.c.h.b16 %v2277
  %v2997 = vunpack.c.l.b16 %v2278
  %v2998 = vunpack.c.h.b16 %v2278
  %v2999 = vunpack.c.l.b16 %v2279
  %v3000 = vunpack.c.h.b16 %v2279
  %v3001 = vunpack.c.l.b16 %v2280
  %v3002 = vunpack.c.h.b16 %v2280
  %v3003 = vunpack.c.l.b16 %v2281
  %v3004 = vunpack.c.h.b16 %v2281
  %v3005 = vunpack.c.l.b16 %v2282
  %v3006 = vunpack.c.h.b16 %v2282
  %v3007 = vunpack.c.l.b16 %v2283
  %v3008 = vunpack.c.h.b16 %v2283
  %v3009 = vunpack.c.l.b16 %v2284
  %v3010 = vunpack.c.h.b16 %v2284
  %v3011 = vunpack.c.l.b16 %v2285
  %v3012 = vunpack.c.h.b16 %v2285
  %v3013 = vunpack.c.l.b16 %v2286
  %v3014 = vunpack.c.h.b16 %v2286
  %v3015 = vunpack.c.l.b16 %v2287
  %v3016 = vunpack.c.h.b16 %v2287
  %v3017 = vunpack.c.l.b16 %v2288
  %v3018 = vunpack.c.h.b16 %v2288
  %v3019 = vunpack.c.l.b16 %v2289
  %v3020 = vunpack.c.h.b16 %v2289
  %v3021 = vunpack.c.l.b16 %v2290
  %v3022 = vunpack.c.h.b16 %v2290
  %v3023 = vunpack.c.l.b16 %v2291
  %v3024 = vunpack.c.h.b16 %v2291
  %v3025 = vunpack.c.l.b16 %v2292
  %v3026 = vunpack.c.h.b16 %v2292
  %v3027 = vunpack.c.l.b16 %v2293
  %v3028 = vunpack.c.h.b16 %v2293
  %v3029 = vunpack.c.l.b16 %v2294
  %v3030 = vunpack.c.h.b16 %v2294
  %v3031 = vunpack.c.l.b16 %v2295
  %v3032 = vunpack.c.h.b16 %v2295
  %v3033 = vunpack.c.l.b16 %v2296
  %v3034 = vunpack.c.h.b16 %v2296
  %v3035 = vunpack.c.l.b16 %v2297
  %v3036 = vunpack.c.h.b16 %v2297
  %v3037 = vunpack.c.l.b16 %v2298
  %v3038 = vunpack.c.h.b16 %v2298
  %v3039 = vunpack.c.l.b16 %v2299
  %v3040 = vunpack.c.h.b16 %v2299
  %v3041 = vunpack.c.l.b16 %v2300
  %v3042 = vunpack.c.h.b16 %v2300
  %v3043 = vunpack.c.l.b16 %v2301
  %v3044 = vunpack.c.h.b16 %v2301
  %v3045 = vunpack.c.l.b16 %v2302
  %v3046 = vunpack.c.h.b16 %v2302
  %v3047 = vunpack.c.l.b16 %v2303
  %v3048 = vunpack.c.h.b16 %v2303
  %v3049 = vunpack.c.l.b16 %v2304
  %v3050 = vunpack.c.h.b16 %v2304
  %v3051 = vunpack.c.l.b16 %v2305
  %v3052 = vunpack.c.h.b16 %v2305
  %v3053 = vunpack.c.l.b16 %v2306
  %v3054 = vunpack.c.h.b16 %v2306
  %v3055 = vunpack.c.l.b16 %v2307
  %v3056 = vunpack.c.h.b16 %v2307
  %v3057 = vunpack.c.l.b16 %v2308
  %v3058 = vunpack.c.h.b16 %v2308
  %v3059 = vunpack.c.l.b16 %v2309
  %v3060 = vunpack.c.h.b16 %v2309
  %v3061 = vunpack.c.l.b16 %v2310
  %v3062 = vunpack.c.h.b16 %v2310
  %v3063 = vunpack.c.l.b16 %v2311
  %v3064 = vunpack.c.h.b16 %v2311
  %v3065 = vunpack.c.l.b16 %v2312
  %v3066 = vunpack.c.h.b16 %v2312
  %v3067 = vunpack.c.l.b16 %v2313
  %v3068 = vunpack.c.h.b16 %v2313
  %v3069 = vunpack.c.l.b16 %v2314
  %v3070 = vunpack.c.h.b16 %v2314
  %v3071 = vunpack.c.l.b16 %v2315
  %v3072 = vunpack.c.h.b16 %v2315
  %v3073 = vunpack.c.l.b16 %v2316
  %v3074 = vunpack.c.h.b16 %v2316
  %v3075 = vunpack.c.l.b16 %v2317
  %v3076 = vunpack.c.h.b16 %v2317
  %v3077 = vunpack.c.l.b16 %v2318
  %v3078 = vunpack.c.h.b16 %v2318
  %v3079 = vunpack.c.l.b16 %v2319
  %v3080 = vunpack.c.h.b16 %v2319
  %v3081 = vunpack.c.l.b16 %v2320
  %v3082 = vunpack.c.h.b16 %v2320
  %v3083 = vunpack.c.l.b16 %v2321
  %v3084 = vunpack.c.h.b16 %v2321
  %v3085 = vunpack.c.l.b16 %v2322
  %v3086 = vunpack.c.h.b16 %v2322
  %v3087 = vunpack.c.l.b16 %v2323
  %v3088 = vunpack.c.h.b16 %v2323
  %v3089 = vunpack.c.l.b16 %v2324
  %v3090 = vunpack.c.h.b16 %v2324
  %v3091 = vunpack.c.l.b16 %v2325
  %v3092 = vunpack.c.h.b16 %v2325
  %v3093 = vunpack.c.l.b16 %v2326
  %v3094 = vunpack.c.h.b16 %v2326
  %v3095 = vunpack.c.l.b16 %v2327
  %v3096 = vunpack.c.h.b16 %v2327
  %v3097 = vunpack.c.l.b16 %v2328
  %v3098 = vunpack.c.h.b16 %v2328
  %v3099 = vunpack.c.l.b16 %v2329
  %v3100 = vunpack.c.h.b16 %v2329
  %v3101 = vunpack.c.l.b16 %v2330
  %v3102 = vunpack.c.h.b16 %v2330
  %v3103 = vunpack.c.l.b16 %v2331
  %v3104 = vunpack.c.h.b16 %v2331
  %v3105 = vunpack.c.l.b16 %v2332
  %v3106 = vunpack.c.h.b16 %v2332
  %v3107 = vunpack.c.l.b16 %v2333
  %v3108 = vunpack.c.h.b16 %v2333
  %v3109 = vunpack.c.l.b16 %v2334
  %v3110 = vunpack.c.h.b16 %v2334
  %v3111 = vunpack.c.l.b16 %v2335
  %v3112 = vunpack.c.h.b16 %v2335
  %v3113 = vunpack.c.l.b16 %v2336
  %v3114 = vunpack.c.h.b16 %v2336
  %v3115 = vunpack.c.l.b16 %v2337
  %v3116 = vunpack.c.h.b16 %v2337
  %v3117 = vunpack.c.l.b16 %v2338
  %v3118 = vunpack.c.h.b16 %v2338
  %v3119 = vunpack.c.l.b16 %v2339
  %v3120 = vunpack.c.h.b16 %v2339
  %v3121 = vunpack.c.l.b16 %v2340
  %v3122 = vunpack.c.h.b16 %v2340
  %v3123 = vunpack.c.l.b16 %v2341
  %v3124 = vunpack.c.h.b16 %v2341
  %v3125 = vunpack.c.l.b16 %v2342
  %v3126 = vunpack.c.h.b16 %v2342
  %v3127 = vunpack.c.l.b16 %v2343
  %v3128 = vunpack.c.h.b16 %v2343
  %v3129 = vunpack.c.l.b16 %v2344
  %v3130 = vunpack.c.h.b16 %v2344
  %v3131 = vunpack.c.l.b16 %v2345
  %v3132 = vunpack.c.h.b16 %v2345
  %v3133 = vunpack.c.l.b16 %v2346
  %v3134 = vunpack.c.h.b16 %v2346
  %v3135 = vunpack.c.l.b16 %v2347
  %v3136 = vunpack.c.h.b16 %v2347
  %v3137 = vunpack.c.l.b16 %v2348
  %v3138 = vunpack.c.h.b16 %v2348
  %v3139 = vpack.c.b16 %v2631, %v2627
  %v3140 = vpack.c.b16 %v2632, %v2628
  %v3141 = vpack.c.b16 %v2633, %v2629
  %v3142 = vpack.c.b16 %v2634, %v2630
  %v3143 = vpack.c.b16 %v2639, %v2635
  %v3144 = vpack.c.b16 %v2640, %v2636
  %v3145 = vpack.c.b16 %v2641, %v2637
  %v3146 = vpack.c.b16 %v2642, %v2638
  %v3147 = vpack.c.b16 %v2647, %v2643
  %v3148 = vpack.c.b16 %v2648, %v2644
  %v3149 = vpack.c.b16 %v2649, %v2645
  %v3150 = vpack.c.b16 %v2650, %v2646
  %v3151 = vpack.c.b16 %v2655, %v2651
  %v3152 = vpack.c.b16 %v2656, %v2652
  %v3153 = vpack.c.b16 %v2657, %v2653
  %v3154 = vpack.c.b16 %v2658, %v2654
  %v3155 = vpack.c.b16 %v2663, %v2659
  %v3156 = vpack.c.b16 %v2664, %v2660
  %v3157 = vpack.c.b16 %v2665, %v2661
  %v3158 = vpack.c.b16 %v2666, %v2662
  %v3159 = vpack.c.b16 %v2671, %v2667
  %v3160 = vpack.c.b16 %v2672, %v2668
  %v3161 = vpack.c.b16 %v2673, %v2669
  %v3162 = vpack.c.b16 %v2674, %v2670
  %v3163 = vpack.c.b16 %v2679, %v2675
  %v3164 = vpack.c.b16 %v2680, %v2676
  %v3165 = vpack.c.b16 %v2681, %v2677
  %v3166 = vpack.c.b16 %v2682, %v2678
  %v3167 = vpack.c.b16 %v2687, %v2683
  %v3168 = vpack.c.b16 %v2688, %v2684
  %v3169 = vpack.c.b16 %v2689, %v2685
  %v3170 = vpack.c.b16 %v2690, %v2686
  %v3171 = vpack.c.b16 %v2695, %v2691
  %v3172 = vpack.c.b16 %v2696, %v2692
  %v3173 = vpack.c.b16 %v2697, %v2693
  %v3174 = vpack.c.b16 %v2698, %v2694
  %v3175 = vpack.c.b16 %v2703, %v2699
  %v3176 = vpack.c.b16 %v2704, %v2700
  %v3177 = vpack.c.b16 %v2705, %v2701
  %v3178 = vpack.c.b16 %v2706, %v2702
  %v3179 = vpack.c.b16 %v2711, %v2707
  %v3180 = vpack.c.b16 %v2712, %v2708
  %v3181 = vpack.c.b16 %v2713, %v2709
  %v3182 = vpack.c.b16 %v2714, %v2710
  %v3183 = vpack.c.b16 %v2719, %v2715
  %v3184 = vpack.c.b16 %v2720, %v2716
  %v3185 = vpack.c.b16 %v2721, %v2717
  %v3186 = vpack.c.b16 %v2722, %v2718
  %v3187 = vpack.c.b16 %v2727, %v2723
  %v3188 = vpack.c.b16 %v2728, %v2724
  %v3189 = vpack.c.b16 %v2729, %v2725
  %v3190 = vpack.c.b16 %v2730, %v2726
  %v3191 = vpack.c.b16 %v2735, %v2731
  %v3192 = vpack.c.b16 %v2736, %v2732
  %v3193 = vpack.c.b16 %v2737, %v2733
  %v3194 = vpack.c.b16 %v2738, %v2734
  %v3195 = vpack.c.b16 %v2743, %v2739
  %v3196 = vpack.c.b16 %v2744, %v2740
  %v3197 = vpack.c.b16 %v2745, %v2741
  %v3198 = vpack.c.b16 %v2746, %v2742
  %v3199 = vpack.c.b16 %v2751, %v2747
  %v3200 = vpack.c.b16 %v2752, %v2748
  %v3201 = vpack.c.b16 %v2753, %v2749
  %v3202 = vpack.c.b16 %v2754, %v2750
  %v3203 = vpack.c.b16 %v2759, %v2755
  %v3204 = vpack.c.b16 %v2760, %v2756
  %v3205 = vpack.c.b16 %v2761, %v2757
  %v3206 = vpack.c.b16 %v2762, %v2758
  %v3207 = vpack.c.b16 %v2767, %v2763
  %v3208 = vpack.c.b16 %v2768, %v2764
  %v3209 = vpack.c.b16 %v2769, %v2765
  %v3210 = vpack.c.b16 %v2770, %v2766
  %v3211 = vpack.c.b16 %v2775, %v2771
  %v3212 = vpack.c.b16 %v2776, %v2772
  %v3213 = vpack.c.b16 %v2777, %v2773
  %v3214 = vpack.c.b16 %v2778, %v2774
  %v3215 = vpack.c.b16 %v2783, %v2779
  %v3216 = vpack.c.b16 %v2784, %v2780
  %v3217 = vpack.c.b16 %v2785, %v2781
  %v3218 = vpack.c.b16 %v2786, %v2782
  %v3219 = vpack.c.b16 %v2791, %v2787
  %v3220 = vpack.c.b16 %v2792, %v2788
  %v3221 = vpack.c.b16 %v2793, %v2789
  %v3222 = vpack.c.b16 %v2794, %v2790
  %v3223 = vpack.c.b16 %v2799, %v2795
  %v3224 = vpack.c.b16 %v2800, %v2796
  %v3225 = vpack.c.b16 %v2801, %v2797
  %v3226 = vpack.c.b16 %v2802, %v2798
  %v3227 = vpack.c.b16 %v2807, %v2803
  %v3228 = vpack.c.b16 %v2808, %v2804
  %v3229 = vpack.c.b16 %v2809, %v2805
  %v3230 = vpack.c.b16 %v2810, %v2806
  %v3231 = vpack.c.b16 %v2815, %v2811
  %v3232 = vpack.c.b16 %v2816, %v2812
  %v3233 = vpack.c.b16 %v2817, %v2813
  %v3234 = vpack.c.b16 %v2818, %v2814
  %v3235 = vpack.c.b16 %v2823, %v2819
  %v3236 = vpack.c.b16 %v2824, %v2820
  %v3237 = vpack.c.b16 %v2825, %v2821
  %v3238 = vpack.c.b16 %v2826, %v2822
  %v3239 = vpack.c.b16 %v2831, %v2827
  %v3240 = vpack.c.b16 %v2832, %v2828
  %v3241 = vpack.c.b16 %v2833, %v2829
  %v3242 = vpack.c.b16 %v2834, %v2830
  %v3243 = vpack.c.b16 %v2839, %v2835
  %v3244 = vpack.c.b16 %v2840, %v2836
  %v3245 = vpack.c.b16 %v2841, %v2837
  %v3246 = vpack.c.b16 %v2842, %v2838
  %v3247 = vpack.c.b16 %v2847, %v2843
  %v3248 = vpack.c.b16 %v2848, %v2844
  %v3249 = vpack.c.b16 %v2849, %v2845
  %v3250 = vpack.c.b16 %v2850, %v2846
  %v3251 = vpack.c.b16 %v2855, %v2851
  %v3252 = vpack.c.b16 %v2856, %v2852
  %v3253 = vpack.c.b16 %v2857, %v2853
  %v3254 = vpack.c.b16 %v2858, %v2854
  %v3255 = vpack.c.b16 %v2863, %v2859
  %v3256 = vpack.c.b16 %v2864, %v2860
  %v3257 = vpack.c.b16 %v2865, %v2861
  %v3258 = vpack.c.b16 %v2866, %v2862
  %v3259 = vpack.c.b16 %v2871, %v2867
  %v3260 = vpack.c.b16 %v2872, %v2868
  %v3261 = vpack.c.b16 %v2873, %v2869
  %v3262 = vpack.c.b16 %v2874, %v2870
  %v3263 = vpack.c.b16 %v2879, %v2875
  %v3264 = vpack.c.b16 %v2880, %v2876
  %v3265 = vpack.c.b16 %v2881, %v2877
  %v3266 = vpack.c.b16 %v2882, %v2878
  %v3267 = vpack.c.b16 %v2887, %v2883
  %v3268 = vpack.c.b16 %v2888, %v2884
  %v3269 = vpack.c.b16 %v2889, %v2885
  %v3270 = vpack.c.b16 %v2890, %v2886
  %v3271 = vpack.c.b16 %v2895, %v2891
  %v3272 = vpack.c.b16 %v2896, %v2892
  %v3273 = vpack.c.b16 %v2897, %v2893
  %v3274 = vpack.c.b16 %v2898, %v2894
  %v3275 = vpack.c.b16 %v2903, %v2899
  %v3276 = vpack.c.b16 %v2904, %v2900
  %v3277 = vpack.c.b16 %v2905, %v2901
  %v3278 = vpack.c.b16 %v2906, %v2902
  %v3279 = vpack.c.b16 %v2911, %v2907
  %v3280 = vpack.c.b16 %v2912, %v2908
  %v3281 = vpack.c.b16 %v2913, %v2909
  %v3282 = vpack.c.b16 %v2914, %v2910
  %v3283 = vpack.c.b16 %v2919, %v2915
  %v3284 = vpack.c.b16 %v2920, %v2916
  %v3285 = vpack.c.b16 %v2921, %v2917
  %v3286 = vpack.c.b16 %v2922, %v2918
  %v3287 = vpack.c.b16 %v2927, %v2923
  %v3288 = vpack.c.b16 %v2928, %v2924
  %v3289 = vpack.c.b16 %v2929, %v2925
  %v3290 = vpack.c.b16 %v2930, %v2926
  %v3291 = vpack.c.b16 %v2935, %v2931
  %v3292 = vpack.c.b16 %v2936, %v2932
  %v3293 = vpack.c.b16 %v2937, %v2933
  %v3294 = vpack.c.b16 %v2938, %v2934
  %v3295 = vpack.c.b16 %v2943, %v2939
  %v3296 = vpack.c.b16 %v2944, %v2940
  %v3297 = vpack.c.b16 %v2945, %v2941
  %v3298 = vpack.c.b16 %v2946, %v2942
  %v3299 = vpack.c.b16 %v2951, %v2947
  %v3300 = vpack.c.b16 %v2952, %v2948
  %v3301 = vpack.c.b16 %v2953, %v2949
  %v3302 = vpack.c.b16 %v2954, %v2950
  %v3303 = vpack.c.b16 %v2959, %v2955
  %v3304 = vpack.c.b16 %v2960, %v2956
  %v3305 = vpack.c.b16 %v2961, %v2957
  %v3306 = vpack.c.b16 %v2962, %v2958
  %v3307 = vpack.c.b16 %v2967, %v2963
  %v3308 = vpack.c.b16 %v2968, %v2964
  %v3309 = vpack.c.b16 %v2969, %v2965
  %v3310 = vpack.c.b16 %v2970, %v2966
  %v3311 = vpack.c.b16 %v2975, %v2971
  %v3312 = vpack.c.b16 %v2976, %v2972
  %v3313 = vpack.c.b16 %v2977, %v2973
  %v3314 = vpack.c.b16 %v2978, %v2974
  %v3315 = vpack.c.b16 %v2983, %v2979
  %v3316 = vpack.c.b16 %v2984, %v2980
  %v3317 = vpack.c.b16 %v2985, %v2981
  %v3318 = vpack.c.b16 %v2986, %v2982
  %v3319 = vpack.c.b16 %v2991, %v2987
  %v3320 = vpack.c.b16 %v2992, %v2988
  %v3321 = vpack.c.b16 %v2993, %v2989
  %v3322 = vpack.c.b16 %v2994, %v2990
  %v3323 = vpack.c.b16 %v2999, %v2995
  %v3324 = vpack.c.b16 %v3000, %v2996
  %v3325 = vpack.c.b16 %v3001, %v2997
  %v3326 = vpack.c.b16 %v3002, %v2998
  %v3327 = vpack.c.b16 %v3007, %v3003
  %v3328 = vpack.c.b16 %v3008, %v3004
  %v3329 = vpack.c.b16 %v3009, %v3005
  %v3330 = vpack.c.b16 %v3010, %v3006
  %v3331 = vpack.c.b16 %v3015, %v3011
  %v3332 = vpack.c.b16 %v3016, %v3012
  %v3333 = vpack.c.b16 %v3017, %v3013
  %v3334 = vpack.c.b16 %v3018, %v3014
  %v3335 = vpack.c.b16 %v3023, %v3019
  %v3336 = vpack.c.b16 %v3024, %v3020
  %v3337 = vpack.c.b16 %v3025, %v3021
  %v3338 = vpack.c.b16 %v3026, %v3022
  %v3339 = vpack.c.b16 %v3031, %v3027
  %v3340 = vpack.c.b16 %v3032, %v3028
  %v3341 = vpack.c.b16 %v3033, %v3029
  %v3342 = vpack.c.b16 %v3034, %v3030
  %v3343 = vpack.c.b16 %v3039, %v3035
  %v3344 = vpack.c.b16 %v3040, %v3036
  %v3345 = vpack.c.b16 %v3041, %v3037
  %v3346 = vpack.c.b16 %v3042, %v3038
  %v3347 = vpack.c.b16 %v3047, %v3043
  %v3348 = vpack.c.b16 %v3048, %v3044
  %v3349 = vpack.c.b16 %v3049, %v3045
  %v3350 = vpack.c.b16 %v3050, %v3046
  %v3351 = vpack.c.b16 %v3055, %v3051
  %v3352 = vpack.c.b16 %v3056, %v3052
  %v3353 = vpack.c.b16 %v3057, %v3053
  %v3354 = vpack.c.b16 %v3058, %v3054
  %v3355 = vpack.c.b16 %v3063, %v3059
  %v3356 = vpack.c.b16 %v3064, %v3060
  %v3357 = vpack.c.b16 %v3065, %v3061
  %v3358 = vpack.c.b16 %v3066, %v3062
  %v3359 = vpack.c.b16 %v3071, %v3067
  %v3360 = vpack.c.b16 %v3072, %v3068
  %v3361 = vpack.c.b16 %v3073, %v3069
  %v3362 = vpack.c.b16 %v3074, %v3070
  %v3363 = vpack.c.b16 %v3079, %v3075
  %v3364 = vpack.c.b16 %v3080, %v3076
  %v3365 = vpack.c.b16 %v3081, %v3077
  %v3366 = vpack.c.b16 %v3082, %v3078
  %v3367 = vpack.c.b16 %v3087, %v3083
  %v3368 = vpack.c.b16 %v3088, %v3084
  %v3369 = vpack.c.b16 %v3089, %v3085
  %v3370 = vpack.c.b16 %v3090, %v3086
  %v3371 = vpack.c.b16 %v3095, %v3091
  %v3372 = vpack.c.b16 %v3096, %v3092
  %v3373 = vpack.c.b16 %v3097, %v3093
  %v3374 = vpack.c.b16 %v3098, %v3094
  %v3375 = vpack.c.b16 %v3103, %v3099
  %v3376 = vpack.c.b16 %v3104, %v3100
  %v3377 = vpack.c.b16 %v3105, %v3101
  %v3378 = vpack.c.b16 %v3106, %v3102
  %v3379 = vpack.c.b16 %v3111, %v3107
  %v3380 = vpack.c.b16 %v3112, %v3108
  %v3381 = vpack.c.b16 %v3113, %v3109
  %v3382 = vpack.c.b16 %v3114, %v3110
  %v3383 = vpack.c.b16 %v3119, %v3115
  %v3384 = vpack.c.b16 %v3120, %v3116
  %v3385 = vpack.c.b16 %v3121, %v3117
  %v3386 = vpack.c.b16 %v3122, %v3118
  %v3387 = vpack.c.b16 %v3127, %v3123
  %v3388 = vpack.c.b16 %v3128, %v3124
  %v3389 = vpack.c.b16 %v3129, %v3125
  %v3390 = vpack.c.b16 %v3130, %v3126
  %v3391 = vpack.c.b16 %v3135, %v3131
  %v3392 = vpack.c.b16 %v3136, %v3132
  %v3393 = vpack.c.b16 %v3137, %v3133
  %v3394 = vpack.c.b16 %v3138, %v3134
  %3651 = vmatprep.subr.bf16.mxu0 %v3140
  %3652 = vmatpush1.bf16.msra.mxu0 %v3139
  %3653 = vmatprep.subr.bf16.mxu0 %v3144
  %3654 = vmatpush1.bf16.msra.mxu0 %v3143
  %3655 = vmatprep.subr.bf16.mxu0 %v3148
  %3656 = vmatpush1.bf16.msra.mxu0 %v3147
  %3657 = vmatprep.subr.bf16.mxu0 %v3152
  %3658 = vmatpush1.bf16.msra.mxu0 %v3151
  %3659 = vmatprep.subr.bf16.mxu0 %v3156
  %3660 = vmatpush1.bf16.msra.mxu0 %v3155
  %3661 = vmatprep.subr.bf16.mxu0 %v3160
  %3662 = vmatpush1.bf16.msra.mxu0 %v3159
  %3663 = vmatprep.subr.bf16.mxu0 %v3164
  %3664 = vmatpush1.bf16.msra.mxu0 %v3163
  %3665 = vmatprep.subr.bf16.mxu0 %v3168
  %3666 = vmatpush1.bf16.msra.mxu0 %v3167
  %3667 = vmatprep.subr.bf16.mxu0 %v3172
  %3668 = vmatpush1.bf16.msra.mxu0 %v3171
  %3669 = vmatprep.subr.bf16.mxu0 %v3176
  %3670 = vmatpush1.bf16.msra.mxu0 %v3175
  %3671 = vmatprep.subr.bf16.mxu0 %v3180
  %3672 = vmatpush1.bf16.msra.mxu0 %v3179
  %3673 = vmatprep.subr.bf16.mxu0 %v3184
  %3674 = vmatpush1.bf16.msra.mxu0 %v3183
  %3675 = vmatprep.subr.bf16.mxu0 %v3188
  %3676 = vmatpush1.bf16.msra.mxu0 %v3187
  %3677 = vmatprep.subr.bf16.mxu0 %v3192
  %3678 = vmatpush1.bf16.msra.mxu0 %v3191
  %3679 = vmatprep.subr.bf16.mxu0 %v3196
  %3680 = vmatpush1.bf16.msra.mxu0 %v3195
  %3681 = vmatprep.subr.bf16.mxu0 %v3200
  %3682 = vmatpush1.bf16.msra.mxu0 %v3199
  %3683 = vmatprep.mubr.bf16.mxu0 %v2086
  %3684 = vmatmul.mubr.bf16.gmra.mrb[0].mxu0 %v2085
  %v3685 = vpop.f32.mrb[0].mxu0
  %v3686 = vadd.f32 %v2354, %v3685
  %v3687 = vpop.f32.mrb[0].mxu0
  %v3688 = vadd.f32 %v2358, %v3687
  %v3689 = vpop.f32.mrb[0].mxu0
  %v3690 = vpop.f32.mrb[0].mxu0
  %3691 = vdwg.mxu0
  %3692 = vmatprep.subr.bf16.mxu0 %v3204
  %3693 = vmatpush1.bf16.msra.mxu0 %v3203
  %3694 = vmatprep.subr.bf16.mxu0 %v3208
  %3695 = vmatpush1.bf16.msra.mxu0 %v3207
  %3696 = vmatprep.subr.bf16.mxu0 %v3212
  %3697 = vmatpush1.bf16.msra.mxu0 %v3211
  %3698 = vmatprep.subr.bf16.mxu0 %v3216
  %3699 = vmatpush1.bf16.msra.mxu0 %v3215
  %3700 = vmatprep.subr.bf16.mxu0 %v3220
  %3701 = vmatpush1.bf16.msra.mxu0 %v3219
  %3702 = vmatprep.subr.bf16.mxu0 %v3224
  %3703 = vmatpush1.bf16.msra.mxu0 %v3223
  %3704 = vmatprep.subr.bf16.mxu0 %v3228
  %3705 = vmatpush1.bf16.msra.mxu0 %v3227
  %3706 = vmatprep.subr.bf16.mxu0 %v3232
  %3707 = vmatpush1.bf16.msra.mxu0 %v3231
  %3708 = vmatprep.subr.bf16.mxu0 %v3236
  %3709 = vmatpush1.bf16.msra.mxu0 %v3235
  %3710 = vmatprep.subr.bf16.mxu0 %v3240
  %3711 = vmatpush1.bf16.msra.mxu0 %v3239
  %3712 = vmatprep.subr.bf16.mxu0 %v3244
  %3713 = vmatpush1.bf16.msra.mxu0 %v3243
  %3714 = vmatprep.subr.bf16.mxu0 %v3248
  %3715 = vmatpush1.bf16.msra.mxu0 %v3247
  %3716 = vmatprep.subr.bf16.mxu0 %v3252
  %3717 = vmatpush1.bf16.msra.mxu0 %v3251
  %3718 = vmatprep.subr.bf16.mxu0 %v3256
  %3719 = vmatpush1.bf16.msra.mxu0 %v3255
  %3720 = vmatprep.subr.bf16.mxu0 %v3260
  %3721 = vmatpush1.bf16.msra.mxu0 %v3259
  %3722 = vmatprep.subr.bf16.mxu0 %v3264
  %3723 = vmatpush1.bf16.msra.mxu0 %v3263
  %3724 = vmatprep.mubr.bf16.mxu0 %v2088
  %3725 = vmatmul.mubr.bf16.gmra.mrb[0].mxu0 %v2087
  %v3726 = vpop.f32.mrb[0].mxu0
  %v3727 = vadd.f32 %v3686, %v3726
  %v3728 = vpop.f32.mrb[0].mxu0
  %v3729 = vadd.f32 %v3688, %v3728
  %v3730 = vpop.f32.mrb[0].mxu0
  %v3731 = vpop.f32.mrb[0].mxu0
  %3732 = vdwg.mxu0
  %3733 = vmatprep.subr.bf16.mxu0 %v3268
  %3734 = vmatpush1.bf16.msra.mxu0 %v3267
  %3735 = vmatprep.subr.bf16.mxu0 %v3272
  %3736 = vmatpush1.bf16.msra.mxu0 %v3271
  %3737 = vmatprep.subr.bf16.mxu0 %v3276
  %3738 = vmatpush1.bf16.msra.mxu0 %v3275
  %3739 = vmatprep.subr.bf16.mxu0 %v3280
  %3740 = vmatpush1.bf16.msra.mxu0 %v3279
  %3741 = vmatprep.subr.bf16.mxu0 %v3284
  %3742 = vmatpush1.bf16.msra.mxu0 %v3283
  %3743 = vmatprep.subr.bf16.mxu0 %v3288
  %3744 = vmatpush1.bf16.msra.mxu0 %v3287
  %3745 = vmatprep.subr.bf16.mxu0 %v3292
  %3746 = vmatpush1.bf16.msra.mxu0 %v3291
  %3747 = vmatprep.subr.bf16.mxu0 %v3296
  %3748 = vmatpush1.bf16.msra.mxu0 %v3295
  %3749 = vmatprep.subr.bf16.mxu0 %v3300
  %3750 = vmatpush1.bf16.msra.mxu0 %v3299
  %3751 = vmatprep.subr.bf16.mxu0 %v3304
  %3752 = vmatpush1.bf16.msra.mxu0 %v3303
  %3753 = vmatprep.subr.bf16.mxu0 %v3308
  %3754 = vmatpush1.bf16.msra.mxu0 %v3307
  %3755 = vmatprep.subr.bf16.mxu0 %v3312
  %3756 = vmatpush1.bf16.msra.mxu0 %v3311
  %3757 = vmatprep.subr.bf16.mxu0 %v3316
  %3758 = vmatpush1.bf16.msra.mxu0 %v3315
  %3759 = vmatprep.subr.bf16.mxu0 %v3320
  %3760 = vmatpush1.bf16.msra.mxu0 %v3319
  %3761 = vmatprep.subr.bf16.mxu0 %v3324
  %3762 = vmatpush1.bf16.msra.mxu0 %v3323
  %3763 = vmatprep.subr.bf16.mxu0 %v3328
  %3764 = vmatpush1.bf16.msra.mxu0 %v3327
  %3765 = vmatprep.mubr.bf16.mxu0 %v2090
  %3766 = vmatmul.mubr.bf16.gmra.mrb[0].mxu0 %v2089
  %v3767 = vpop.f32.mrb[0].mxu0
  %v3768 = vadd.f32 %v3727, %v3767
  %v3769 = vpop.f32.mrb[0].mxu0
  %v3770 = vadd.f32 %v3729, %v3769
  %v3771 = vpop.f32.mrb[0].mxu0
  %v3772 = vpop.f32.mrb[0].mxu0
  %3773 = vdwg.mxu0
  %3774 = vmatprep.subr.bf16.mxu0 %v3332
  %3775 = vmatpush1.bf16.msra.mxu0 %v3331
  %3776 = vmatprep.subr.bf16.mxu0 %v3336
  %3777 = vmatpush1.bf16.msra.mxu0 %v3335
  %3778 = vmatprep.subr.bf16.mxu0 %v3340
  %3779 = vmatpush1.bf16.msra.mxu0 %v3339
  %3780 = vmatprep.subr.bf16.mxu0 %v3344
  %3781 = vmatpush1.bf16.msra.mxu0 %v3343
  %3782 = vmatprep.subr.bf16.mxu0 %v3348
  %3783 = vmatpush1.bf16.msra.mxu0 %v3347
  %3784 = vmatprep.subr.bf16.mxu0 %v3352
  %3785 = vmatpush1.bf16.msra.mxu0 %v3351
  %3786 = vmatprep.subr.bf16.mxu0 %v3356
  %3787 = vmatpush1.bf16.msra.mxu0 %v3355
  %3788 = vmatprep.subr.bf16.mxu0 %v3360
  %3789 = vmatpush1.bf16.msra.mxu0 %v3359
  %3790 = vmatprep.subr.bf16.mxu0 %v3364
  %3791 = vmatpush1.bf16.msra.mxu0 %v3363
  %3792 = vmatprep.subr.bf16.mxu0 %v3368
  %3793 = vmatpush1.bf16.msra.mxu0 %v3367
  %3794 = vmatprep.subr.bf16.mxu0 %v3372
  %3795 = vmatpush1.bf16.msra.mxu0 %v3371
  %3796 = vmatprep.subr.bf16.mxu0 %v3376
  %3797 = vmatpush1.bf16.msra.mxu0 %v3375
  %3798 = vmatprep.subr.bf16.mxu0 %v3380
  %3799 = vmatpush1.bf16.msra.mxu0 %v3379
  %3800 = vmatprep.subr.bf16.mxu0 %v3384
  %3801 = vmatpush1.bf16.msra.mxu0 %v3383
  %3802 = vmatprep.subr.bf16.mxu0 %v3388
  %3803 = vmatpush1.bf16.msra.mxu0 %v3387
  %3804 = vmatprep.subr.bf16.mxu0 %v3392
  %3805 = vmatpush1.bf16.msra.mxu0 %v3391
  %3806 = vmatprep.mubr.bf16.mxu0 %v2092
  %3807 = vmatmul.mubr.bf16.gmra.mrb[0].mxu0 %v2091
  %v3808 = vpop.f32.mrb[0].mxu0
  %v3809 = vadd.f32 %v3768, %v3808
  %v3810 = vpop.f32.mrb[0].mxu0
  %v3811 = vadd.f32 %v3770, %v3810
  %v3812 = vpop.f32.mrb[0].mxu0
  %v3813 = vpop.f32.mrb[0].mxu0
  %3814 = vdwg.mxu0
  %3815 = vmatprep.subr.bf16.mxu0 %v3142
  %3816 = vmatpush1.bf16.msra.mxu0 %v3141
  %3817 = vmatprep.subr.bf16.mxu0 %v3146
  %3818 = vmatpush1.bf16.msra.mxu0 %v3145
  %3819 = vmatprep.subr.bf16.mxu0 %v3150
  %3820 = vmatpush1.bf16.msra.mxu0 %v3149
  %3821 = vmatprep.subr.bf16.mxu0 %v3154
  %3822 = vmatpush1.bf16.msra.mxu0 %v3153
  %3823 = vmatprep.subr.bf16.mxu0 %v3158
  %3824 = vmatpush1.bf16.msra.mxu0 %v3157
  %3825 = vmatprep.subr.bf16.mxu0 %v3162
  %3826 = vmatpush1.bf16.msra.mxu0 %v3161
  %3827 = vmatprep.subr.bf16.mxu0 %v3166
  %3828 = vmatpush1.bf16.msra.mxu0 %v3165
  %3829 = vmatprep.subr.bf16.mxu0 %v3170
  %3830 = vmatpush1.bf16.msra.mxu0 %v3169
  %3831 = vmatprep.subr.bf16.mxu0 %v3174
  %3832 = vmatpush1.bf16.msra.mxu0 %v3173
  %3833 = vmatprep.subr.bf16.mxu0 %v3178
  %3834 = vmatpush1.bf16.msra.mxu0 %v3177
  %3835 = vmatprep.subr.bf16.mxu0 %v3182
  %3836 = vmatpush1.bf16.msra.mxu0 %v3181
  %3837 = vmatprep.subr.bf16.mxu0 %v3186
  %3838 = vmatpush1.bf16.msra.mxu0 %v3185
  %3839 = vmatprep.subr.bf16.mxu0 %v3190
  %3840 = vmatpush1.bf16.msra.mxu0 %v3189
  %3841 = vmatprep.subr.bf16.mxu0 %v3194
  %3842 = vmatpush1.bf16.msra.mxu0 %v3193
  %3843 = vmatprep.subr.bf16.mxu0 %v3198
  %3844 = vmatpush1.bf16.msra.mxu0 %v3197
  %3845 = vmatprep.subr.bf16.mxu0 %v3202
  %3846 = vmatpush1.bf16.msra.mxu0 %v3201
  %3847 = vmatprep.mubr.bf16.mxu0 %v2086
  %3848 = vmatmul.mubr.bf16.gmra.mrb[0].mxu0 %v2085
  %v3849 = vpop.f32.mrb[0].mxu0
  %v3850 = vadd.f32 %v2362, %v3849
  %v3851 = vpop.f32.mrb[0].mxu0
  %v3852 = vadd.f32 %v2366, %v3851
  %v3853 = vpop.f32.mrb[0].mxu0
  %v3854 = vpop.f32.mrb[0].mxu0
  %3855 = vdwg.mxu0
  %3856 = vmatprep.subr.bf16.mxu0 %v3206
  %3857 = vmatpush1.bf16.msra.mxu0 %v3205
  %3858 = vmatprep.subr.bf16.mxu0 %v3210
  %3859 = vmatpush1.bf16.msra.mxu0 %v3209
  %3860 = vmatprep.subr.bf16.mxu0 %v3214
  %3861 = vmatpush1.bf16.msra.mxu0 %v3213
  %3862 = vmatprep.subr.bf16.mxu0 %v3218
  %3863 = vmatpush1.bf16.msra.mxu0 %v3217
  %3864 = vmatprep.subr.bf16.mxu0 %v3222
  %3865 = vmatpush1.bf16.msra.mxu0 %v3221
  %3866 = vmatprep.subr.bf16.mxu0 %v3226
  %3867 = vmatpush1.bf16.msra.mxu0 %v3225
  %3868 = vmatprep.subr.bf16.mxu0 %v3230
  %3869 = vmatpush1.bf16.msra.mxu0 %v3229
  %3870 = vmatprep.subr.bf16.mxu0 %v3234
  %3871 = vmatpush1.bf16.msra.mxu0 %v3233
  %3872 = vmatprep.subr.bf16.mxu0 %v3238
  %3873 = vmatpush1.bf16.msra.mxu0 %v3237
  %3874 = vmatprep.subr.bf16.mxu0 %v3242
  %3875 = vmatpush1.bf16.msra.mxu0 %v3241
  %3876 = vmatprep.subr.bf16.mxu0 %v3246
  %3877 = vmatpush1.bf16.msra.mxu0 %v3245
  %3878 = vmatprep.subr.bf16.mxu0 %v3250
  %3879 = vmatpush1.bf16.msra.mxu0 %v3249
  %3880 = vmatprep.subr.bf16.mxu0 %v3254
  %3881 = vmatpush1.bf16.msra.mxu0 %v3253
  %3882 = vmatprep.subr.bf16.mxu0 %v3258
  %3883 = vmatpush1.bf16.msra.mxu0 %v3257
  %3884 = vmatprep.subr.bf16.mxu0 %v3262
  %3885 = vmatpush1.bf16.msra.mxu0 %v3261
  %3886 = vmatprep.subr.bf16.mxu0 %v3266
  %3887 = vmatpush1.bf16.msra.mxu0 %v3265
  %3888 = vmatprep.mubr.bf16.mxu0 %v2088
  %3889 = vmatmul.mubr.bf16.gmra.mrb[0].mxu0 %v2087
  %v3890 = vpop.f32.mrb[0].mxu0
  %v3891 = vadd.f32 %v3850, %v3890
  %v3892 = vpop.f32.mrb[0].mxu0
  %v3893 = vadd.f32 %v3852, %v3892
  %v3894 = vpop.f32.mrb[0].mxu0
  %v3895 = vpop.f32.mrb[0].mxu0
  %3896 = vdwg.mxu0
  %3897 = vmatprep.subr.bf16.mxu0 %v3270
  %3898 = vmatpush1.bf16.msra.mxu0 %v3269
  %3899 = vmatprep.subr.bf16.mxu0 %v3274
  %3900 = vmatpush1.bf16.msra.mxu0 %v3273
  %3901 = vmatprep.subr.bf16.mxu0 %v3278
  %3902 = vmatpush1.bf16.msra.mxu0 %v3277
  %3903 = vmatprep.subr.bf16.mxu0 %v3282
  %3904 = vmatpush1.bf16.msra.mxu0 %v3281
  %3905 = vmatprep.subr.bf16.mxu0 %v3286
  %3906 = vmatpush1.bf16.msra.mxu0 %v3285
  %3907 = vmatprep.subr.bf16.mxu0 %v3290
  %3908 = vmatpush1.bf16.msra.mxu0 %v3289
  %3909 = vmatprep.subr.bf16.mxu0 %v3294
  %3910 = vmatpush1.bf16.msra.mxu0 %v3293
  %3911 = vmatprep.subr.bf16.mxu0 %v3298
  %3912 = vmatpush1.bf16.msra.mxu0 %v3297
  %3913 = vmatprep.subr.bf16.mxu0 %v3302
  %3914 = vmatpush1.bf16.msra.mxu0 %v3301
  %3915 = vmatprep.subr.bf16.mxu0 %v3306
  %3916 = vmatpush1.bf16.msra.mxu0 %v3305
  %3917 = vmatprep.subr.bf16.mxu0 %v3310
  %3918 = vmatpush1.bf16.msra.mxu0 %v3309
  %3919 = vmatprep.subr.bf16.mxu0 %v3314
  %3920 = vmatpush1.bf16.msra.mxu0 %v3313
  %3921 = vmatprep.subr.bf16.mxu0 %v3318
  %3922 = vmatpush1.bf16.msra.mxu0 %v3317
  %3923 = vmatprep.subr.bf16.mxu0 %v3322
  %3924 = vmatpush1.bf16.msra.mxu0 %v3321
  %3925 = vmatprep.subr.bf16.mxu0 %v3326
  %3926 = vmatpush1.bf16.msra.mxu0 %v3325
  %3927 = vmatprep.subr.bf16.mxu0 %v3330
  %3928 = vmatpush1.bf16.msra.mxu0 %v3329
  %3929 = vmatprep.mubr.bf16.mxu0 %v2090
  %3930 = vmatmul.mubr.bf16.gmra.mrb[0].mxu0 %v2089
  %v3931 = vpop.f32.mrb[0].mxu0
  %v3932 = vadd.f32 %v3891, %v3931
  %v3933 = vpop.f32.mrb[0].mxu0
  %v3934 = vadd.f32 %v3893, %v3933
  %v3935 = vpop.f32.mrb[0].mxu0
  %v3936 = vpop.f32.mrb[0].mxu0
  %3937 = vdwg.mxu0
  %3938 = vmatprep.subr.bf16.mxu0 %v3334
  %3939 = vmatpush1.bf16.msra.mxu0 %v3333
  %3940 = vmatprep.subr.bf16.mxu0 %v3338
  %3941 = vmatpush1.bf16.msra.mxu0 %v3337
  %3942 = vmatprep.subr.bf16.mxu0 %v3342
  %3943 = vmatpush1.bf16.msra.mxu0 %v3341
  %3944 = vmatprep.subr.bf16.mxu0 %v3346
  %3945 = vmatpush1.bf16.msra.mxu0 %v3345
  %3946 = vmatprep.subr.bf16.mxu0 %v3350
  %3947 = vmatpush1.bf16.msra.mxu0 %v3349
  %3948 = vmatprep.subr.bf16.mxu0 %v3354
  %3949 = vmatpush1.bf16.msra.mxu0 %v3353
  %3950 = vmatprep.subr.bf16.mxu0 %v3358
  %3951 = vmatpush1.bf16.msra.mxu0 %v3357
  %3952 = vmatprep.subr.bf16.mxu0 %v3362
  %3953 = vmatpush1.bf16.msra.mxu0 %v3361
  %3954 = vmatprep.subr.bf16.mxu0 %v3366
  %3955 = vmatpush1.bf16.msra.mxu0 %v3365
  %3956 = vmatprep.subr.bf16.mxu0 %v3370
  %3957 = vmatpush1.bf16.msra.mxu0 %v3369
  %3958 = vmatprep.subr.bf16.mxu0 %v3374
  %3959 = vmatpush1.bf16.msra.mxu0 %v3373
  %3960 = vmatprep.subr.bf16.mxu0 %v3378
  %3961 = vmatpush1.bf16.msra.mxu0 %v3377
  %3962 = vmatprep.subr.bf16.mxu0 %v3382
  %3963 = vmatpush1.bf16.msra.mxu0 %v3381
  %3964 = vmatprep.subr.bf16.mxu0 %v3386
  %3965 = vmatpush1.bf16.msra.mxu0 %v3385
  %3966 = vmatprep.subr.bf16.mxu0 %v3390
  %3967 = vmatpush1.bf16.msra.mxu0 %v3389
  %3968 = vmatprep.subr.bf16.mxu0 %v3394
  %3969 = vmatpush1.bf16.msra.mxu0 %v3393
  %3970 = vmatprep.mubr.bf16.mxu0 %v2092
  %3971 = vmatmul.mubr.bf16.gmra.mrb[0].mxu0 %v2091
  %v3972 = vpop.f32.mrb[0].mxu0
  %v3973 = vadd.f32 %v3932, %v3972
  %v3974 = vpop.f32.mrb[0].mxu0
  %v3975 = vadd.f32 %v3934, %v3974
  %v3976 = vpop.f32.mrb[0].mxu0
  %v3977 = vpop.f32.mrb[0].mxu0
  %3978 = vdwg.mxu0
  %v3979 = vpack.c.bf16 %v3809, %v3809
  %v3980 = vpack.c.bf16 %v3811, %v3811
  %v3981 = vpack.c.bf16 %v3973, %v3973
  %v3982 = vpack.c.bf16 %v3975, %v3975
  %v3983 = vld [vmem:[%s11] sm:$0xf]
  %v3984 = vld [vmem:[%s11 + $0x4] sm:$0xf]
  %v3985 = vld [vmem:[%s11 + $0x8] sm:$0xf]
  %v3986 = vld [vmem:[%s11 + $0xc] sm:$0xf]
  %v3987 = vld [vmem:[%s11 + $0x10] sm:$0xf]
  %v3988 = vld [vmem:[%s11 + $0x14] sm:$0xf]
  %v3989 = vld [vmem:[%s11 + $0x18] sm:$0xf]
  %v3990 = vld [vmem:[%s11 + $0x1c] sm:$0xf]
  %v3991 = vld [vmem:[%s11 + $0x20] sm:$0xf]
  %v3992 = vld [vmem:[%s11 + $0x24] sm:$0xf]
  %v3993 = vld [vmem:[%s11 + $0x28] sm:$0xf]
  %v3994 = vld [vmem:[%s11 + $0x2c] sm:$0xf]
  %v3995 = vld [vmem:[%s11 + $0x30] sm:$0xf]
  %v3996 = vld [vmem:[%s11 + $0x34] sm:$0xf]
  %v3997 = vld [vmem:[%s11 + $0x38] sm:$0xf]
  %v3998 = vld [vmem:[%s11 + $0x3c] sm:$0xf]
  %v3999 = vld [vmem:[%s11 + $0x40] sm:$0xf]
  %v4000 = vld [vmem:[%s11 + $0x44] sm:$0xf]
  %v4001 = vld [vmem:[%s11 + $0x48] sm:$0xf]
  %v4002 = vld [vmem:[%s11 + $0x4c] sm:$0xf]
  %v4003 = vld [vmem:[%s11 + $0x50] sm:$0xf]
  %v4004 = vld [vmem:[%s11 + $0x54] sm:$0xf]
  %v4005 = vld [vmem:[%s11 + $0x58] sm:$0xf]
  %v4006 = vld [vmem:[%s11 + $0x5c] sm:$0xf]
  %v4007 = vld [vmem:[%s11 + $0x60] sm:$0xf]
  %v4008 = vld [vmem:[%s11 + $0x64] sm:$0xf]
  %v4009 = vld [vmem:[%s11 + $0x68] sm:$0xf]
  %v4010 = vld [vmem:[%s11 + $0x6c] sm:$0xf]
  %v4011 = vld [vmem:[%s11 + $0x70] sm:$0xf]
  %v4012 = vld [vmem:[%s11 + $0x74] sm:$0xf]
  %v4013 = vld [vmem:[%s11 + $0x78] sm:$0xf]
  %v4014 = vld [vmem:[%s11 + $0x7c] sm:$0xf]
  %v4015 = vld [vmem:[%s11 + $0x80] sm:$0xf]
  %v4016 = vld [vmem:[%s11 + $0x84] sm:$0xf]
  %v4017 = vld [vmem:[%s11 + $0x88] sm:$0xf]
  %v4018 = vld [vmem:[%s11 + $0x8c] sm:$0xf]
  %v4019 = vld [vmem:[%s11 + $0x90] sm:$0xf]
  %v4020 = vld [vmem:[%s11 + $0x94] sm:$0xf]
  %v4021 = vld [vmem:[%s11 + $0x98] sm:$0xf]
  %v4022 = vld [vmem:[%s11 + $0x9c] sm:$0xf]
  %v4023 = vld [vmem:[%s11 + $0xa0] sm:$0xf]
  %v4024 = vld [vmem:[%s11 + $0xa4] sm:$0xf]
  %v4025 = vld [vmem:[%s11 + $0xa8] sm:$0xf]
  %v4026 = vld [vmem:[%s11 + $0xac] sm:$0xf]
  %v4027 = vld [vmem:[%s11 + $0xb0] sm:$0xf]
  %v4028 = vld [vmem:[%s11 + $0xb4] sm:$0xf]
  %v4029 = vld [vmem:[%s11 + $0xb8] sm:$0xf]
  %v4030 = vld [vmem:[%s11 + $0xbc] sm:$0xf]
  %v4031 = vld [vmem:[%s11 + $0xc0] sm:$0xf]
  %v4032 = vld [vmem:[%s11 + $0xc4] sm:$0xf]
  %v4033 = vld [vmem:[%s11 + $0xc8] sm:$0xf]
  %v4034 = vld [vmem:[%s11 + $0xcc] sm:$0xf]
  %v4035 = vld [vmem:[%s11 + $0xd0] sm:$0xf]
  %v4036 = vld [vmem:[%s11 + $0xd4] sm:$0xf]
  %v4037 = vld [vmem:[%s11 + $0xd8] sm:$0xf]
  %v4038 = vld [vmem:[%s11 + $0xdc] sm:$0xf]
  %v4039 = vld [vmem:[%s11 + $0xe0] sm:$0xf]
  %v4040 = vld [vmem:[%s11 + $0xe4] sm:$0xf]
  %v4041 = vld [vmem:[%s11 + $0xe8] sm:$0xf]
  %v4042 = vld [vmem:[%s11 + $0xec] sm:$0xf]
  %v4043 = vld [vmem:[%s11 + $0xf0] sm:$0xf]
  %v4044 = vld [vmem:[%s11 + $0xf4] sm:$0xf]
  %v4045 = vld [vmem:[%s11 + $0xf8] sm:$0xf]
  %v4046 = vld [vmem:[%s11 + $0xfc] sm:$0xf]
  %v4047 = vld [vmem:[%s12] sm:$0x1]
  %v4049 = vlaneseq
  %v4050 = vshrl.u32 %v4049, 7
  %v4051 = vsub.s32 0, %v4050
  %v4052 = vrot.slane %v4047, %v4051
  %v4118 = vunpack.c.l.b16 %v3983
  %v4119 = vunpack.c.l.b16 %v3984
  %v4120 = vunpack.c.l.b16 %v3985
  %v4121 = vunpack.c.l.b16 %v3986
  %v4122 = vunpack.c.l.b16 %v3987
  %v4123 = vunpack.c.l.b16 %v3988
  %v4124 = vunpack.c.l.b16 %v3989
  %v4125 = vunpack.c.l.b16 %v3990
  %v4126 = vunpack.c.l.b16 %v3991
  %v4127 = vunpack.c.l.b16 %v3992
  %v4128 = vunpack.c.l.b16 %v3993
  %v4129 = vunpack.c.l.b16 %v3994
  %v4130 = vunpack.c.l.b16 %v3995
  %v4131 = vunpack.c.l.b16 %v3996
  %v4132 = vunpack.c.l.b16 %v3997
  %v4133 = vunpack.c.l.b16 %v3998
  %v4134 = vunpack.c.l.b16 %v3999
  %v4135 = vunpack.c.l.b16 %v4000
  %v4136 = vunpack.c.l.b16 %v4001
  %v4137 = vunpack.c.l.b16 %v4002
  %v4138 = vunpack.c.l.b16 %v4003
  %v4139 = vunpack.c.l.b16 %v4004
  %v4140 = vunpack.c.l.b16 %v4005
  %v4141 = vunpack.c.l.b16 %v4006
  %v4142 = vunpack.c.l.b16 %v4007
  %v4143 = vunpack.c.l.b16 %v4008
  %v4144 = vunpack.c.l.b16 %v4009
  %v4145 = vunpack.c.l.b16 %v4010
  %v4146 = vunpack.c.l.b16 %v4011
  %v4147 = vunpack.c.l.b16 %v4012
  %v4148 = vunpack.c.l.b16 %v4013
  %v4149 = vunpack.c.l.b16 %v4014
  %v4150 = vunpack.c.l.b16 %v4015
  %v4151 = vunpack.c.l.b16 %v4016
  %v4152 = vunpack.c.l.b16 %v4017
  %v4153 = vunpack.c.l.b16 %v4018
  %v4154 = vunpack.c.l.b16 %v4019
  %v4155 = vunpack.c.l.b16 %v4020
  %v4156 = vunpack.c.l.b16 %v4021
  %v4157 = vunpack.c.l.b16 %v4022
  %v4158 = vunpack.c.l.b16 %v4023
  %v4159 = vunpack.c.l.b16 %v4024
  %v4160 = vunpack.c.l.b16 %v4025
  %v4161 = vunpack.c.l.b16 %v4026
  %v4162 = vunpack.c.l.b16 %v4027
  %v4163 = vunpack.c.l.b16 %v4028
  %v4164 = vunpack.c.l.b16 %v4029
  %v4165 = vunpack.c.l.b16 %v4030
  %v4166 = vunpack.c.l.b16 %v4031
  %v4167 = vunpack.c.l.b16 %v4032
  %v4168 = vunpack.c.l.b16 %v4033
  %v4169 = vunpack.c.l.b16 %v4034
  %v4170 = vunpack.c.l.b16 %v4035
  %v4171 = vunpack.c.l.b16 %v4036
  %v4172 = vunpack.c.l.b16 %v4037
  %v4173 = vunpack.c.l.b16 %v4038
  %v4174 = vunpack.c.l.b16 %v4039
  %v4175 = vunpack.c.l.b16 %v4040
  %v4176 = vunpack.c.l.b16 %v4041
  %v4177 = vunpack.c.l.b16 %v4042
  %v4178 = vunpack.c.l.b16 %v4043
  %v4179 = vunpack.c.l.b16 %v4044
  %v4180 = vunpack.c.l.b16 %v4045
  %v4181 = vunpack.c.l.b16 %v4046
  %v4182 = vpack.c.b16 %v4119, %v4118
  %v4183 = vpack.c.b16 %v4121, %v4120
  %v4184 = vpack.c.b16 %v4123, %v4122
  %v4185 = vpack.c.b16 %v4125, %v4124
  %v4186 = vpack.c.b16 %v4127, %v4126
  %v4187 = vpack.c.b16 %v4129, %v4128
  %v4188 = vpack.c.b16 %v4131, %v4130
  %v4189 = vpack.c.b16 %v4133, %v4132
  %v4190 = vpack.c.b16 %v4135, %v4134
  %v4191 = vpack.c.b16 %v4137, %v4136
  %v4192 = vpack.c.b16 %v4139, %v4138
  %v4193 = vpack.c.b16 %v4141, %v4140
  %v4194 = vpack.c.b16 %v4143, %v4142
  %v4195 = vpack.c.b16 %v4145, %v4144
  %v4196 = vpack.c.b16 %v4147, %v4146
  %v4197 = vpack.c.b16 %v4149, %v4148
  %v4198 = vpack.c.b16 %v4151, %v4150
  %v4199 = vpack.c.b16 %v4153, %v4152
  %v4200 = vpack.c.b16 %v4155, %v4154
  %v4201 = vpack.c.b16 %v4157, %v4156
  %v4202 = vpack.c.b16 %v4159, %v4158
  %v4203 = vpack.c.b16 %v4161, %v4160
  %v4204 = vpack.c.b16 %v4163, %v4162
  %v4205 = vpack.c.b16 %v4165, %v4164
  %v4206 = vpack.c.b16 %v4167, %v4166
  %v4207 = vpack.c.b16 %v4169, %v4168
  %v4208 = vpack.c.b16 %v4171, %v4170
  %v4209 = vpack.c.b16 %v4173, %v4172
  %v4210 = vpack.c.b16 %v4175, %v4174
  %v4211 = vpack.c.b16 %v4177, %v4176
  %v4212 = vpack.c.b16 %v4179, %v4178
  %v4213 = vpack.c.b16 %v4181, %v4180
  %4246 = vmatprep.subr.bf16.mxu0 0
  %4247 = vmatpush1.bf16.msra.mxu0 %v4182
  %4248 = vmatprep.subr.bf16.mxu0 0
  %4249 = vmatpush1.bf16.msra.mxu0 %v4183
  %4250 = vmatprep.subr.bf16.mxu0 0
  %4251 = vmatpush1.bf16.msra.mxu0 %v4184
  %4252 = vmatprep.subr.bf16.mxu0 0
  %4253 = vmatpush1.bf16.msra.mxu0 %v4185
  %4254 = vmatprep.subr.bf16.mxu0 0
  %4255 = vmatpush1.bf16.msra.mxu0 %v4186
  %4256 = vmatprep.subr.bf16.mxu0 0
  %4257 = vmatpush1.bf16.msra.mxu0 %v4187
  %4258 = vmatprep.subr.bf16.mxu0 0
  %4259 = vmatpush1.bf16.msra.mxu0 %v4188
  %4260 = vmatprep.subr.bf16.mxu0 0
  %4261 = vmatpush1.bf16.msra.mxu0 %v4189
  %4262 = vmatprep.subr.bf16.mxu0 0
  %4263 = vmatpush1.bf16.msra.mxu0 %v4190
  %4264 = vmatprep.subr.bf16.mxu0 0
  %4265 = vmatpush1.bf16.msra.mxu0 %v4191
  %4266 = vmatprep.subr.bf16.mxu0 0
  %4267 = vmatpush1.bf16.msra.mxu0 %v4192
  %4268 = vmatprep.subr.bf16.mxu0 0
  %4269 = vmatpush1.bf16.msra.mxu0 %v4193
  %4270 = vmatprep.subr.bf16.mxu0 0
  %4271 = vmatpush1.bf16.msra.mxu0 %v4194
  %4272 = vmatprep.subr.bf16.mxu0 0
  %4273 = vmatpush1.bf16.msra.mxu0 %v4195
  %4274 = vmatprep.subr.bf16.mxu0 0
  %4275 = vmatpush1.bf16.msra.mxu0 %v4196
  %4276 = vmatprep.subr.bf16.mxu0 0
  %4277 = vmatpush1.bf16.msra.mxu0 %v4197
  %4278 = vmatprep.mubr.bf16.mxu0 %v3980
  %4279 = vmatmul.mubr.bf16.gmra.mrb[0].mxu0 %v3979
  %v4280 = vpop.f32.mrb[0].mxu0
  %v4281 = vadd.f32 %v4052, %v4280
  %v4282 = vpop.f32.mrb[0].mxu0
  %v4283 = vpop.f32.mrb[0].mxu0
  %v4284 = vpop.f32.mrb[0].mxu0
  %4285 = vdwg.mxu0
  %4286 = vmatprep.subr.bf16.mxu0 0
  %4287 = vmatpush1.bf16.msra.mxu0 %v4198
  %4288 = vmatprep.subr.bf16.mxu0 0
  %4289 = vmatpush1.bf16.msra.mxu0 %v4199
  %4290 = vmatprep.subr.bf16.mxu0 0
  %4291 = vmatpush1.bf16.msra.mxu0 %v4200
  %4292 = vmatprep.subr.bf16.mxu0 0
  %4293 = vmatpush1.bf16.msra.mxu0 %v4201
  %4294 = vmatprep.subr.bf16.mxu0 0
  %4295 = vmatpush1.bf16.msra.mxu0 %v4202
  %4296 = vmatprep.subr.bf16.mxu0 0
  %4297 = vmatpush1.bf16.msra.mxu0 %v4203
  %4298 = vmatprep.subr.bf16.mxu0 0
  %4299 = vmatpush1.bf16.msra.mxu0 %v4204
  %4300 = vmatprep.subr.bf16.mxu0 0
  %4301 = vmatpush1.bf16.msra.mxu0 %v4205
  %4302 = vmatprep.subr.bf16.mxu0 0
  %4303 = vmatpush1.bf16.msra.mxu0 %v4206
  %4304 = vmatprep.subr.bf16.mxu0 0
  %4305 = vmatpush1.bf16.msra.mxu0 %v4207
  %4306 = vmatprep.subr.bf16.mxu0 0
  %4307 = vmatpush1.bf16.msra.mxu0 %v4208
  %4308 = vmatprep.subr.bf16.mxu0 0
  %4309 = vmatpush1.bf16.msra.mxu0 %v4209
  %4310 = vmatprep.subr.bf16.mxu0 0
  %4311 = vmatpush1.bf16.msra.mxu0 %v4210
  %4312 = vmatprep.subr.bf16.mxu0 0
  %4313 = vmatpush1.bf16.msra.mxu0 %v4211
  %4314 = vmatprep.subr.bf16.mxu0 0
  %4315 = vmatpush1.bf16.msra.mxu0 %v4212
  %4316 = vmatprep.subr.bf16.mxu0 0
  %4317 = vmatpush1.bf16.msra.mxu0 %v4213
  %4318 = vmatprep.mubr.bf16.mxu0 %v3982
  %4319 = vmatmul.mubr.bf16.gmra.mrb[0].mxu0 %v3981
  %v4320 = vpop.f32.mrb[0].mxu0
  %v4321 = vadd.f32 %v4281, %v4320
  %v4322 = vpop.f32.mrb[0].mxu0
  %v4323 = vpop.f32.mrb[0].mxu0
  %v4324 = vpop.f32.mrb[0].mxu0
  %4325 = vdwg.mxu0
  %v4326 = vpack.c.bf16 %v4321, %v4321
  %v4327 = vld [vmem:[%s13] sm:$0xf]
  %v4328 = vld [vmem:[%s13 + $0x4] sm:$0xf]
  %v4329 = vld [vmem:[%s13 + $0x8] sm:$0xf]
  %v4330 = vld [vmem:[%s13 + $0xc] sm:$0xf]
  %v4331 = vld [vmem:[%s13 + $0x10] sm:$0xf]
  %v4332 = vld [vmem:[%s13 + $0x14] sm:$0xf]
  %v4333 = vld [vmem:[%s13 + $0x18] sm:$0xf]
  %v4334 = vld [vmem:[%s13 + $0x1c] sm:$0xf]
  %v4335 = vld [vmem:[%s14] sm:$0x1]
  %v4337 = vlaneseq
  %v4338 = vshrl.u32 %v4337, 7
  %v4339 = vsub.s32 0, %v4338
  %v4340 = vrot.slane %v4335, %v4339
  %v4350 = vunpack.c.l.b16 %v4327
  %v4351 = vunpack.c.l.b16 %v4328
  %v4352 = vunpack.c.l.b16 %v4329
  %v4353 = vunpack.c.l.b16 %v4330
  %v4354 = vunpack.c.l.b16 %v4331
  %v4355 = vunpack.c.l.b16 %v4332
  %v4356 = vunpack.c.l.b16 %v4333
  %v4357 = vunpack.c.l.b16 %v4334
  %v4358 = vpack.c.b16 %v4351, %v4350
  %v4359 = vpack.c.b16 %v4353, %v4352
  %v4360 = vpack.c.b16 %v4355, %v4354
  %v4361 = vpack.c.b16 %v4357, %v4356
  %v4367 = vsel %vm1909, %v4326, 0
  %4369 = vmatprep.subr.bf16.mxu0 0
  %4370 = vmatpush1.bf16.msra.mxu0 %v4358
  %4371 = vmatprep.subr.bf16.mxu0 0
  %4372 = vmatpush1.bf16.msra.mxu0 %v4359
  %4373 = vmatprep.subr.bf16.mxu0 0
  %4374 = vmatpush1.bf16.msra.mxu0 %v4360
  %4375 = vmatprep.subr.bf16.mxu0 0
  %4376 = vmatpush1.bf16.msra.mxu0 %v4361
  %4377 = vmatprep.subr.bf16.mxu0 0
  %4378 = vmatpush1.bf16.msra.mxu0 0
  %4379 = vmatprep.subr.bf16.mxu0 0
  %4380 = vmatpush1.bf16.msra.mxu0 0
  %4381 = vmatprep.subr.bf16.mxu0 0
  %4382 = vmatpush1.bf16.msra.mxu0 0
  %4383 = vmatprep.subr.bf16.mxu0 0
  %4384 = vmatpush1.bf16.msra.mxu0 0
  %4385 = vmatprep.subr.bf16.mxu0 0
  %4386 = vmatpush1.bf16.msra.mxu0 0
  %4387 = vmatprep.subr.bf16.mxu0 0
  %4388 = vmatpush1.bf16.msra.mxu0 0
  %4389 = vmatprep.subr.bf16.mxu0 0
  %4390 = vmatpush1.bf16.msra.mxu0 0
  %4391 = vmatprep.subr.bf16.mxu0 0
  %4392 = vmatpush1.bf16.msra.mxu0 0
  %4393 = vmatprep.subr.bf16.mxu0 0
  %4394 = vmatpush1.bf16.msra.mxu0 0
  %4395 = vmatprep.subr.bf16.mxu0 0
  %4396 = vmatpush1.bf16.msra.mxu0 0
  %4397 = vmatprep.subr.bf16.mxu0 0
  %4398 = vmatpush1.bf16.msra.mxu0 0
  %4399 = vmatprep.subr.bf16.mxu0 0
  %4400 = vmatpush1.bf16.msra.mxu0 0
  %4401 = vmatprep.mubr.bf16.mxu0 0
  %4402 = vmatmul.mubr.bf16.gmra.mrb[0].mxu0 %v4367
  %v4403 = vpop.f32.mrb[0].mxu0
  %v4404 = vadd.f32 %v4340, %v4403
  %v4405 = vpop.f32.mrb[0].mxu0
  %v4406 = vpop.f32.mrb[0].mxu0
  %v4407 = vpop.f32.mrb[0].mxu0
  %4408 = vdwg.mxu0
  %4409 = vst [vmem:[%s15] sm:$0xff] %v4404
  // Predicated region
  $region62: #{cnn_forward.1} parent=0 // pred_check
    _
  $region63: #{cnn_forward.1} parent=0 // pred_check_branch
    %4411 = sbr.rel (0) target = $region65
  $region64: #{cnn_forward.1} parent=0 // pred_region
    _
  $region65: #{cnn_forward.1} parent=0 // pred_fallthru
    _
  // Predicated region
  $region66: #{cnn_forward.1} parent=0 // pred_check
    _
  $region67: #{cnn_forward.1} parent=0 // pred_check_branch
    %4413 = sbr.rel (0) target = $region69
  $region68: #{cnn_forward.1} parent=0 // pred_region
    _
  $region69: #{cnn_forward.1} parent=0 // pred_fallthru
    _

</llo_original>
